<compile_context>
chip_gen: v6e
topology: v6e:2x2x1
jax: 0.10.0
libtpu: 0.0.40
codegen_flags: <defaults>
</compile_context>

<pallas_src>
import functools

import jax
import jax.numpy as jnp
from jax import lax
from jax.experimental import pallas as pl
from jax.experimental.pallas import tpu as pltpu

# ---------------- small ViT config (consistent with vit_b_16 structure) ----------
PATCH = 16
IMG = 32                       # -> 2x2 = 4 patches, seq = 5 with cls token
HIDDEN = 128                   # real ViT-B: 768
NUM_HEADS = 4                  # real ViT-B: 12
HEAD_DIM = HIDDEN // NUM_HEADS
MLP_DIM = 256                  # real ViT-B: 3072
NUM_LAYERS = 2                 # real ViT-B: 12
NUM_CLASSES = 15
NUM_CLASSES_PAD = 128          # lane-dense head output, sliced to 15 outside
SEQ = 1 + (IMG // PATCH) ** 2  # 5
SPAD = 8                       # per-batch row pad (next multiple of 8 >= SEQ)
LN_EPS = 1e-6                  # torchvision ViT uses LayerNorm(eps=1e-6)

# row indices inside the packed per-layer "misc" tensor (L, 8, 3*HIDDEN)
ROW_LN1_G, ROW_LN1_B, ROW_LN2_G, ROW_LN2_B = 0, 1, 2, 3
ROW_OUT_B, ROW_MLP_B2, ROW_QKV_B, ROW_MLP_B1 = 4, 5, 6, 7


# ---------------- in-kernel math helpers ----------------------------------------
def _erf_f32(x):
    # XLA's f32 rational erf approximation (exact nn.GELU semantics, no erf
    # primitive needed inside Mosaic).  Division replaced with an EUP recip.
    k_alpha = (0.00022905065861350646, 0.0034082910107109506,
               0.050955695062380861, 0.18520832239976145, 1.128379143519084)
    k_beta = (-1.1791602954361697e-07, 2.3547966471313185e-05,
              0.0010179625278914885, 0.014070470171167667,
              0.11098505178285362, 0.49746925110067538, 1.0)
    x = jnp.clip(x, -3.832506856900711, 3.832506856900711)
    x2 = x * x
    p = jnp.full_like(x, k_alpha[0])
    for c in k_alpha[1:]:
        p = p * x2 + c
    q = jnp.full_like(x, k_beta[0])
    for c in k_beta[1:]:
        q = q * x2 + c
    return x * p * pl.reciprocal(q)


def _gelu_exact(x):
    # nn.GELU() default (approximate='none'):  0.5 * x * (1 + erf(x / sqrt(2)))
    return 0.5 * x * (1.0 + _erf_f32(x * 0.7071067811865476))


def _layernorm(x, g, b):
    mean = jnp.mean(x, axis=-1, keepdims=True)
    xc = x - mean
    var = jnp.mean(xc * xc, axis=-1, keepdims=True)
    return xc * lax.rsqrt(var + LN_EPS) * g + b


# ---------------- fused full-forward kernel --------------------------------------
def _fused_vit_kernel(
    # constant (layer-independent) inputs
    patches_ref, conv_w_ref, conv_b_ref, cls_ref, pos_ref,
    # per-layer stacked weights (leading L axis squeezed by BlockSpec)
    misc_ref, qkv_w_ref, out_w_ref, mlp_w1_ref, mlp_w2_ref,
    # final LN + classifier head (padded to 128 classes)
    lnf_g_ref, lnf_b_ref, head_w_ref, head_b_ref,
    # output
    logits_ref,
    # scratch: activations, resident in VMEM across the whole grid
    acc_ref,
    *, batch, n_patches):
    layer = pl.program_id(0)
    n_layers = pl.num_programs(0)
    rows = batch * SPAD
    bf16 = jnp.bfloat16

    # ---- patch embedding + cls token + pos (layer 0 only): one full store ----
    @pl.when(layer == 0)
    def _embed():
        tok = (jnp.dot(patches_ref[...].astype(bf16), conv_w_ref[...],
                       preferred_element_type=jnp.float32)
               + conv_b_ref[...])                              # (B*np, D)
        tok3 = tok.reshape(batch, n_patches, HIDDEN)
        cls3 = jnp.broadcast_to(cls_ref[...][None, :, :], (batch, 1, HIDDEN))
        seq_tok = (jnp.concatenate([cls3, tok3], axis=1)
                   + pos_ref[...][None, :, :])                 # (B, SEQ, D)
        emb = jnp.concatenate(
            [seq_tok, jnp.zeros((batch, SPAD - SEQ, HIDDEN), jnp.float32)],
            axis=1)                                            # (B, SPAD, D)
        acc_ref[...] = emb.reshape(rows, HIDDEN)

    # ---- unpack packed per-layer 1-row params (one DMA / layer) ----
    misc = misc_ref[...]                                       # (8, 3D) f32
    ln1_g = misc[ROW_LN1_G:ROW_LN1_G + 1, :HIDDEN]
    ln1_b = misc[ROW_LN1_B:ROW_LN1_B + 1, :HIDDEN]
    ln2_g = misc[ROW_LN2_G:ROW_LN2_G + 1, :HIDDEN]
    ln2_b = misc[ROW_LN2_B:ROW_LN2_B + 1, :HIDDEN]
    out_b = misc[ROW_OUT_B:ROW_OUT_B + 1, :HIDDEN]
    mlp_b2 = misc[ROW_MLP_B2:ROW_MLP_B2 + 1, :HIDDEN]
    qkv_b = misc[ROW_QKV_B:ROW_QKV_B + 1, :]
    mlp_b1 = misc[ROW_MLP_B1:ROW_MLP_B1 + 1, :MLP_DIM]

    # ---- self-attention block (pre-LN), batches batched in dot_general ----
    x = acc_ref[...]                                           # (rows, D) f32
    y = _layernorm(x, ln1_g, ln1_b)
    qkv = (jnp.dot(y.astype(bf16), qkv_w_ref[...],
                   preferred_element_type=jnp.float32) + qkv_b)  # (rows, 3D)
    q3 = qkv[:, :HIDDEN].reshape(batch, SPAD, HIDDEN)
    k3 = qkv[:, HIDDEN:2 * HIDDEN].reshape(batch, SPAD, HIDDEN)
    v3 = qkv[:, 2 * HIDDEN:].reshape(batch, SPAD, HIDDEN)

    # key-padding mask: columns >= SEQ inside each SPAD block are invalid keys
    col = lax.broadcasted_iota(jnp.int32, (1, SPAD, SPAD), 2)
    kmask = jnp.where(col < SEQ, 0.0, -1e30).astype(jnp.float32)

    out_w = out_w_ref[...]                                     # (D, D) bf16
    proj = jnp.zeros((rows, HIDDEN), jnp.float32)
    for h in range(NUM_HEADS):
        c0 = h * HEAD_DIM
        qh = q3[:, :, c0:c0 + HEAD_DIM]                        # (B, SPAD, Dh)
        kh = k3[:, :, c0:c0 + HEAD_DIM]
        vh = v3[:, :, c0:c0 + HEAD_DIM]
        # 1/sqrt(head_dim) is pre-folded into qkv_w / qkv_b at init time.
        s = lax.dot_general(qh, kh, (((2,), (2,)), ((0,), (0,))),
                            preferred_element_type=jnp.float32) + kmask
        s = s - jnp.max(s, axis=-1, keepdims=True)
        p = jnp.exp(s)
        p = p * pl.reciprocal(jnp.sum(p, axis=-1, keepdims=True), approx=True)
        oh = lax.dot_general(p, vh, (((2,), (1,)), ((0,), (0,))),
                             preferred_element_type=jnp.float32)  # (B,SPAD,Dh)
        # fold this head's slice of the output projection in directly so
        # everything stays lane-dense (rows, 128) — no head concat needed.
        proj = proj + jnp.dot(oh.reshape(rows, HEAD_DIM).astype(bf16),
                              out_w[c0:c0 + HEAD_DIM, :],
                              preferred_element_type=jnp.float32)
    x_attn = x + proj + out_b                                  # full-tile residual

    # ---- MLP block (pre-LN, exact GELU) ----
    y2 = _layernorm(x_attn, ln2_g, ln2_b)
    h1 = _gelu_exact(jnp.dot(y2.astype(bf16), mlp_w1_ref[...],
                             preferred_element_type=jnp.float32) + mlp_b1)
    h2 = (jnp.dot(h1.astype(bf16), mlp_w2_ref[...],
                  preferred_element_type=jnp.float32) + mlp_b2)

    # zero the padded rows (s >= SEQ inside each per-batch block) so they stay
    # bounded at any depth; one multiply on the full tile.
    row_s = lax.broadcasted_iota(jnp.int32, (rows, 1), 0) & (SPAD - 1)
    row_mask = (row_s < SEQ).astype(jnp.float32)
    x_out = (x_attn + h2) * row_mask
    acc_ref[...] = x_out                                       # single (rows,128) store

    # ---- final LayerNorm + classifier head (last layer only) ----
    @pl.when(layer == n_layers - 1)
    def _head():
        hfin = _layernorm(x_out, lnf_g_ref[...], lnf_b_ref[...])
        # one (rows,128)@(128,128) matmul + one dense store; cls rows (row 0 of
        # each per-batch block) are extracted in the wrapper.
        logits_ref[...] = (
            jnp.dot(hfin.astype(bf16), head_w_ref[...],
                    preferred_element_type=jnp.float32) + head_b_ref[...])


# ---------------- parameters ------------------------------------------------------
def init_params(key):
    ks = iter(jax.random.split(key, 16))

    def w(shape, std=0.02):
        return jax.random.normal(next(ks), shape, jnp.float32) * std

    zeros = lambda s: jnp.zeros(s, jnp.float32)
    ones = lambda s: jnp.ones(s, jnp.float32)
    bf16 = jnp.bfloat16

    head_w = w((HIDDEN, NUM_CLASSES))
    head_w_pad = jnp.zeros((HIDDEN, NUM_CLASSES_PAD), jnp.float32)
    head_w_pad = head_w_pad.at[:, :NUM_CLASSES].set(head_w)

    # Fold 1/sqrt(head_dim) into the q columns:  ((xWq+bq)*s)·kT == (x(Wq*s)+bq*s)·kT
    scale = 1.0 / float(HEAD_DIM) ** 0.5
    qkv_w = w((NUM_LAYERS, HIDDEN, 3 * HIDDEN))
    qkv_w = qkv_w.at[:, :, :HIDDEN].multiply(scale)
    qkv_b = zeros((NUM_LAYERS, 3 * HIDDEN))
    qkv_b = qkv_b.at[:, :HIDDEN].multiply(scale)

    ln1_g, ln1_b = ones((NUM_LAYERS, HIDDEN)), zeros((NUM_LAYERS, HIDDEN))
    ln2_g, ln2_b = ones((NUM_LAYERS, HIDDEN)), zeros((NUM_LAYERS, HIDDEN))
    out_b = zeros((NUM_LAYERS, HIDDEN))
    mlp_b1 = zeros((NUM_LAYERS, MLP_DIM))
    mlp_b2 = zeros((NUM_LAYERS, HIDDEN))

    # pack all per-layer 1-row params into one (L, 8, 3*HIDDEN) tensor.
    misc = jnp.zeros((NUM_LAYERS, 8, 3 * HIDDEN), jnp.float32)
    misc = misc.at[:, ROW_LN1_G, :HIDDEN].set(ln1_g)
    misc = misc.at[:, ROW_LN1_B, :HIDDEN].set(ln1_b)
    misc = misc.at[:, ROW_LN2_G, :HIDDEN].set(ln2_g)
    misc = misc.at[:, ROW_LN2_B, :HIDDEN].set(ln2_b)
    misc = misc.at[:, ROW_OUT_B, :HIDDEN].set(out_b)
    misc = misc.at[:, ROW_MLP_B2, :HIDDEN].set(mlp_b2)
    misc = misc.at[:, ROW_QKV_B, :].set(qkv_b)
    misc = misc.at[:, ROW_MLP_B1, :MLP_DIM].set(mlp_b1)

    return {
        # conv_proj flattened (c, kh, kw) -> out; must match the torchvision
        # (D,C,P,P) -> (C*P*P, D) reshape order when loading real weights.
        "conv_w": w((3 * PATCH * PATCH, HIDDEN)).astype(bf16),
        "conv_b": zeros((1, HIDDEN)),
        "cls_token": zeros((1, HIDDEN)),
        "pos_emb": w((SEQ, HIDDEN)),
        "ln_g": ones((1, HIDDEN)),
        "ln_b": zeros((1, HIDDEN)),
        "head_w": head_w_pad.astype(bf16),          # (D, 128) lane-dense padded
        "head_b": zeros((1, NUM_CLASSES_PAD)),
        "misc": misc,                               # packed per-layer 1-row params
        "qkv_w": qkv_w.astype(bf16),
        "out_w": w((NUM_LAYERS, HIDDEN, HIDDEN)).astype(bf16),
        "mlp_w1": w((NUM_LAYERS, HIDDEN, MLP_DIM)).astype(bf16),
        "mlp_w2": w((NUM_LAYERS, MLP_DIM, HIDDEN)).astype(bf16),
    }


# ---------------- forward: one fused pallas_call ----------------------------------
def _const_spec(shape):
    return pl.BlockSpec(shape, lambda l: (0,) * len(shape))


def _layer_spec(r, c):
    return pl.BlockSpec((None, r, c), lambda l: (l, 0, 0))


@jax.jit
def vit_forward(x, params):
    B, C, H, W = x.shape
    nh, nw = H // PATCH, W // PATCH
    n_patches = nh * nw
    rows = B * SPAD                                            # 16

    # Patchify: Conv2d(3, HIDDEN, kernel=PATCH, stride=PATCH) == matmul over
    # flattened (c, kh, kw) patches.  (reshape/transpose is glue; math is Pallas.)
    patches = (x.reshape(B, C, nh, PATCH, nw, PATCH)
                .transpose(0, 2, 4, 1, 3, 5)
                .reshape(B * n_patches, C * PATCH * PATCH))

    in_specs = [
        _const_spec(patches.shape),                            # patches
        _const_spec((C * PATCH * PATCH, HIDDEN)),              # conv_w
        _const_spec((1, HIDDEN)),                              # conv_b
        _const_spec((1, HIDDEN)),                              # cls_token
        _const_spec((SEQ, HIDDEN)),                            # pos_emb
        _layer_spec(8, 3 * HIDDEN),                            # misc (packed)
        _layer_spec(HIDDEN, 3 * HIDDEN),                       # qkv_w
        _layer_spec(HIDDEN, HIDDEN),                           # out_w
        _layer_spec(HIDDEN, MLP_DIM),                          # mlp_w1
        _layer_spec(MLP_DIM, HIDDEN),                          # mlp_w2
        _const_spec((1, HIDDEN)),                              # ln_g (final)
        _const_spec((1, HIDDEN)),                              # ln_b (final)
        _const_spec((HIDDEN, NUM_CLASSES_PAD)),                # head_w (padded)
        _const_spec((1, NUM_CLASSES_PAD)),                     # head_b (padded)
    ]

    fused = pl.pallas_call(
        functools.partial(_fused_vit_kernel, batch=B, n_patches=n_patches),
        out_shape=jax.ShapeDtypeStruct((rows, NUM_CLASSES_PAD), jnp.float32),
        grid_spec=pltpu.PrefetchScalarGridSpec(
            num_scalar_prefetch=0,
            grid=(NUM_LAYERS,),
            in_specs=in_specs,
            out_specs=pl.BlockSpec((rows, NUM_CLASSES_PAD), lambda l: (0, 0)),
            scratch_shapes=[pltpu.VMEM((rows, HIDDEN), jnp.float32)],
        ),
        compiler_params=pltpu.CompilerParams(
            dimension_semantics=("arbitrary",)),               # layer axis is sequential
    )

    logits_all = fused(
        patches, params["conv_w"], params["conv_b"], params["cls_token"],
        params["pos_emb"], params["misc"], params["qkv_w"], params["out_w"],
        params["mlp_w1"], params["mlp_w2"], params["ln_g"], params["ln_b"],
        params["head_w"], params["head_b"],
    )
    # cls token is row 0 of each per-batch SPAD-row block.
    return logits_all.reshape(B, SPAD, NUM_CLASSES_PAD)[:, 0, :NUM_CLASSES]


if __name__ == "__main__":
    key = jax.random.PRNGKey(0)
    pkey, xkey = jax.random.split(key)
    params = init_params(pkey)
    x = jax.random.normal(xkey, (2, 3, IMG, IMG), jnp.float32)

    logits = jax.block_until_ready(vit_forward(x, params))
    assert logits.shape == (2, NUM_CLASSES)
    assert bool(jnp.all(jnp.isfinite(logits)))
    print("KERNEL_OK")
</pallas_src>

<mosaic_0001>
module attributes {stable_mosaic.version = 11 : i64} {
  func.func @_fused_vit_kernel(%arg0: i32, %arg1: memref<8x768xf32, #tpu.memory_space<vmem>>, %arg2: memref<768x128xbf16, #tpu.memory_space<vmem>>, %arg3: memref<1x128xf32, #tpu.memory_space<vmem>>, %arg4: memref<1x128xf32, #tpu.memory_space<vmem>>, %arg5: memref<5x128xf32, #tpu.memory_space<vmem>>, %arg6: memref<1x8x384xf32, #tpu.memory_space<vmem>>, %arg7: memref<1x128x384xbf16, #tpu.memory_space<vmem>>, %arg8: memref<1x128x128xbf16, #tpu.memory_space<vmem>>, %arg9: memref<1x128x256xbf16, #tpu.memory_space<vmem>>, %arg10: memref<1x256x128xbf16, #tpu.memory_space<vmem>>, %arg11: memref<1x128xf32, #tpu.memory_space<vmem>>, %arg12: memref<1x128xf32, #tpu.memory_space<vmem>>, %arg13: memref<128x128xbf16, #tpu.memory_space<vmem>>, %arg14: memref<1x128xf32, #tpu.memory_space<vmem>>, %arg15: memref<16x128xf32, #tpu.memory_space<vmem>>, %arg16: memref<16x128xf32, #tpu.memory_space<vmem>>) attributes {dimension_semantics = [#tpu.dimension_semantics<arbitrary>], iteration_bounds = array<i64: 2>, scalar_prefetch = 0 : i64, scratch_operands = 1 : i64, tpu.core_type = #tpu.core_type<tc>, window_params = [{pipeline_mode = #tpu.pipeline_mode<synchronous>, transform_indices = @transform_0, window_bounds = array<i64: 8, 768>}, {pipeline_mode = #tpu.pipeline_mode<synchronous>, transform_indices = @transform_1, window_bounds = array<i64: 768, 128>}, {pipeline_mode = #tpu.pipeline_mode<synchronous>, transform_indices = @transform_2, window_bounds = array<i64: 1, 128>}, {pipeline_mode = #tpu.pipeline_mode<synchronous>, transform_indices = @transform_3, window_bounds = array<i64: 1, 128>}, {pipeline_mode = #tpu.pipeline_mode<synchronous>, transform_indices = @transform_4, window_bounds = array<i64: 5, 128>}, {transform_indices = @transform_5, window_bounds = array<i64: 1, 8, 384>}, {transform_indices = @transform_6, window_bounds = array<i64: 1, 128, 384>}, {transform_indices = @transform_7, window_bounds = array<i64: 1, 128, 128>}, {transform_indices = @transform_8, window_bounds = array<i64: 1, 128, 256>}, {transform_indices = @transform_9, window_bounds = array<i64: 1, 256, 128>}, {pipeline_mode = #tpu.pipeline_mode<synchronous>, transform_indices = @transform_10, window_bounds = array<i64: 1, 128>}, {pipeline_mode = #tpu.pipeline_mode<synchronous>, transform_indices = @transform_11, window_bounds = array<i64: 1, 128>}, {pipeline_mode = #tpu.pipeline_mode<synchronous>, transform_indices = @transform_12, window_bounds = array<i64: 128, 128>}, {pipeline_mode = #tpu.pipeline_mode<synchronous>, transform_indices = @transform_13, window_bounds = array<i64: 1, 128>}, {pipeline_mode = #tpu.pipeline_mode<synchronous>, transform_indices = @transform_14, window_bounds = array<i64: 16, 128>}]} {
    %c0_i32 = arith.constant 0 : i32
    %0 = arith.cmpi eq, %arg0, %c0_i32 : i32
    %1 = arith.extui %0 : i1 to i32
    %c0_i32_0 = arith.constant 0 : i32
    %2 = arith.cmpi ne, %1, %c0_i32_0 : i32
    scf.if %2 {
      %c0_73 = arith.constant 0 : index
      %c0_74 = arith.constant 0 : index
      %239 = vector.load %arg1[%c0_73, %c0_74] : memref<8x768xf32, #tpu.memory_space<vmem>>, vector<8x768xf32>
      %240 = arith.truncf %239 : vector<8x768xf32> to vector<8x768xbf16>
      %c0_75 = arith.constant 0 : index
      %c0_76 = arith.constant 0 : index
      %241 = vector.load %arg2[%c0_75, %c0_76] : memref<768x128xbf16, #tpu.memory_space<vmem>>, vector<768x128xbf16>
      %cst_77 = arith.constant dense<0.000000e+00> : vector<8x128xf32>
      %242 = tpu.matmul %240, %241, %cst_77 {dimension_numbers = #tpu.dot_dimension_numbers<[1], [0], [0], [1], [0, 0, 1, 1], [], []>} : vector<8x768xbf16>, vector<768x128xbf16>, vector<8x128xf32> -> vector<8x128xf32>
      %c0_78 = arith.constant 0 : index
      %c0_79 = arith.constant 0 : index
      %243 = vector.load %arg3[%c0_78, %c0_79] : memref<1x128xf32, #tpu.memory_space<vmem>>, vector<1x128xf32>
      %244 = vector.broadcast %243 : vector<1x128xf32> to vector<8x128xf32>
      %245 = arith.addf %242, %244 : vector<8x128xf32>
      %246 = vector.shape_cast %245 : vector<8x128xf32> to vector<2x4x128xf32>
      %c0_80 = arith.constant 0 : index
      %c0_81 = arith.constant 0 : index
      %247 = vector.load %arg4[%c0_80, %c0_81] : memref<1x128xf32, #tpu.memory_space<vmem>>, vector<1x128xf32>
      %248 = vector.shape_cast %247 : vector<1x128xf32> to vector<1x1x128xf32>
      %249 = vector.shape_cast %248 : vector<1x1x128xf32> to vector<1x1x128xf32>
      %250 = vector.broadcast %249 : vector<1x1x128xf32> to vector<2x1x128xf32>
      %251 = tpu.concatenate %250, %246 in 1 : vector<2x1x128xf32>, vector<2x4x128xf32> -> vector<2x5x128xf32>
      %c0_82 = arith.constant 0 : index
      %c0_83 = arith.constant 0 : index
      %252 = vector.load %arg5[%c0_82, %c0_83] : memref<5x128xf32, #tpu.memory_space<vmem>>, vector<5x128xf32>
      %253 = vector.shape_cast %252 : vector<5x128xf32> to vector<1x5x128xf32>
      %254 = vector.broadcast %253 : vector<1x5x128xf32> to vector<2x5x128xf32>
      %255 = arith.addf %251, %254 : vector<2x5x128xf32>
      %cst_84 = arith.constant 0.000000e+00 : f32
      %256 = vector.broadcast %cst_84 : f32 to vector<2x3x128xf32>
      %257 = tpu.concatenate %255, %256 in 1 : vector<2x5x128xf32>, vector<2x3x128xf32> -> vector<2x8x128xf32>
      %258 = vector.shape_cast %257 : vector<2x8x128xf32> to vector<16x128xf32>
      %c0_85 = arith.constant 0 : index
      %c0_86 = arith.constant 0 : index
      %259 = vector.load %arg16[%c0_85, %c0_86] : memref<16x128xf32, #tpu.memory_space<vmem>>, vector<16x128xf32>
      tpu.vector_store %arg16[%c0_85, %c0_86], %258 {strides = array<i32>} : memref<16x128xf32, #tpu.memory_space<vmem>>, vector<16x128xf32>,
    } else {
    }
    %c0 = arith.constant 0 : index
    %c0_1 = arith.constant 0 : index
    %c0_2 = arith.constant 0 : index
    %3 = vector.load %arg6[%c0, %c0_1, %c0_2] : memref<1x8x384xf32, #tpu.memory_space<vmem>>, vector<1x8x384xf32>
    %4 = vector.shape_cast %3 : vector<1x8x384xf32> to vector<8x384xf32>
    %5 = vector.extract_strided_slice %4 {offsets = [0, 0], sizes = [1, 128], strides = [1, 1]} : vector<8x384xf32> to vector<1x128xf32>
    %6 = vector.extract_strided_slice %4 {offsets = [1, 0], sizes = [1, 128], strides = [1, 1]} : vector<8x384xf32> to vector<1x128xf32>
    %7 = vector.extract_strided_slice %4 {offsets = [2, 0], sizes = [1, 128], strides = [1, 1]} : vector<8x384xf32> to vector<1x128xf32>
    %8 = vector.extract_strided_slice %4 {offsets = [3, 0], sizes = [1, 128], strides = [1, 1]} : vector<8x384xf32> to vector<1x128xf32>
    %9 = vector.extract_strided_slice %4 {offsets = [4, 0], sizes = [1, 128], strides = [1, 1]} : vector<8x384xf32> to vector<1x128xf32>
    %10 = vector.extract_strided_slice %4 {offsets = [5, 0], sizes = [1, 128], strides = [1, 1]} : vector<8x384xf32> to vector<1x128xf32>
    %11 = vector.extract_strided_slice %4 {offsets = [6, 0], sizes = [1, 384], strides = [1, 1]} : vector<8x384xf32> to vector<1x384xf32>
    %12 = vector.extract_strided_slice %4 {offsets = [7, 0], sizes = [1, 256], strides = [1, 1]} : vector<8x384xf32> to vector<1x256xf32>
    %c0_3 = arith.constant 0 : index
    %c0_4 = arith.constant 0 : index
    %13 = vector.load %arg16[%c0_3, %c0_4] : memref<16x128xf32, #tpu.memory_space<vmem>>, vector<16x128xf32>
    %cst = arith.constant dense<0.000000e+00> : vector<16xf32>
    %14 = vector.multi_reduction <add>, %13, %cst [1] : vector<16x128xf32> to vector<16xf32>
    %15 = vector.shape_cast %14 : vector<16xf32> to vector<16x1xf32>
    %cst_5 = arith.constant 1.280000e+02 : f32
    %16 = vector.broadcast %cst_5 : f32 to vector<16x1xf32>
    %17 = arith.divf %15, %16 : vector<16x1xf32>
    %18 = vector.broadcast %17 : vector<16x1xf32> to vector<16x128xf32>
    %19 = arith.subf %13, %18 : vector<16x128xf32>
    %20 = arith.mulf %19, %19 : vector<16x128xf32>
    %cst_6 = arith.constant dense<0.000000e+00> : vector<16xf32>
    %21 = vector.multi_reduction <add>, %20, %cst_6 [1] : vector<16x128xf32> to vector<16xf32>
    %22 = vector.shape_cast %21 : vector<16xf32> to vector<16x1xf32>
    %cst_7 = arith.constant 1.280000e+02 : f32
    %23 = vector.broadcast %cst_7 : f32 to vector<16x1xf32>
    %24 = arith.divf %22, %23 : vector<16x1xf32>
    %cst_8 = arith.constant 9.99999997E-7 : f32
    %25 = vector.broadcast %cst_8 : f32 to vector<16x1xf32>
    %26 = arith.addf %24, %25 : vector<16x1xf32>
    %27 = math.rsqrt %26 : vector<16x1xf32>
    %28 = vector.broadcast %27 : vector<16x1xf32> to vector<16x128xf32>
    %29 = arith.mulf %19, %28 : vector<16x128xf32>
    %30 = vector.broadcast %5 : vector<1x128xf32> to vector<16x128xf32>
    %31 = arith.mulf %29, %30 : vector<16x128xf32>
    %32 = vector.broadcast %6 : vector<1x128xf32> to vector<16x128xf32>
    %33 = arith.addf %31, %32 : vector<16x128xf32>
    %34 = arith.truncf %33 : vector<16x128xf32> to vector<16x128xbf16>
    %c0_9 = arith.constant 0 : index
    %c0_10 = arith.constant 0 : index
    %c0_11 = arith.constant 0 : index
    %35 = vector.load %arg7[%c0_9, %c0_10, %c0_11] : memref<1x128x384xbf16, #tpu.memory_space<vmem>>, vector<1x128x384xbf16>
    %36 = vector.shape_cast %35 : vector<1x128x384xbf16> to vector<128x384xbf16>
    %cst_12 = arith.constant dense<0.000000e+00> : vector<16x384xf32>
    %37 = tpu.matmul %34, %36, %cst_12 {dimension_numbers = #tpu.dot_dimension_numbers<[1], [0], [0], [1], [0, 0, 1, 1], [], []>} : vector<16x128xbf16>, vector<128x384xbf16>, vector<16x384xf32> -> vector<16x384xf32>
    %38 = vector.broadcast %11 : vector<1x384xf32> to vector<16x384xf32>
    %39 = arith.addf %37, %38 : vector<16x384xf32>
    %40 = vector.extract_strided_slice %39 {offsets = [0, 0], sizes = [16, 128], strides = [1, 1]} : vector<16x384xf32> to vector<16x128xf32>
    %41 = vector.shape_cast %40 : vector<16x128xf32> to vector<2x8x128xf32>
    %42 = vector.extract_strided_slice %39 {offsets = [0, 128], sizes = [16, 128], strides = [1, 1]} : vector<16x384xf32> to vector<16x128xf32>
    %43 = vector.shape_cast %42 : vector<16x128xf32> to vector<2x8x128xf32>
    %44 = vector.extract_strided_slice %39 {offsets = [0, 256], sizes = [16, 128], strides = [1, 1]} : vector<16x384xf32> to vector<16x128xf32>
    %45 = vector.shape_cast %44 : vector<16x128xf32> to vector<2x8x128xf32>
    %46 = tpu.iota {dimensions = array<i32: 2>} : vector<1x8x8xi32>
    %c5_i32 = arith.constant 5 : i32
    %47 = vector.broadcast %c5_i32 : i32 to vector<1x8x8xi32>
    %48 = arith.cmpi slt, %46, %47 : vector<1x8x8xi32>
    %cst_13 = arith.constant 0.000000e+00 : f32
    %cst_14 = arith.constant -1.000000e+30 : f32
    %49 = vector.broadcast %cst_13 : f32 to vector<1x8x8xf32>
    %50 = vector.broadcast %cst_14 : f32 to vector<1x8x8xf32>
    %51 = arith.select %48, %49, %50 : vector<1x8x8xi1>, vector<1x8x8xf32>
    %c0_15 = arith.constant 0 : index
    %c0_16 = arith.constant 0 : index
    %c0_17 = arith.constant 0 : index
    %52 = vector.load %arg8[%c0_15, %c0_16, %c0_17] : memref<1x128x128xbf16, #tpu.memory_space<vmem>>, vector<1x128x128xbf16>
    %53 = vector.shape_cast %52 : vector<1x128x128xbf16> to vector<128x128xbf16>
    %cst_18 = arith.constant 0.000000e+00 : f32
    %54 = vector.broadcast %cst_18 : f32 to vector<16x128xf32>
    %55 = vector.extract_strided_slice %41 {offsets = [0, 0, 0], sizes = [2, 8, 32], strides = [1, 1, 1]} : vector<2x8x128xf32> to vector<2x8x32xf32>
    %56 = vector.extract_strided_slice %43 {offsets = [0, 0, 0], sizes = [2, 8, 32], strides = [1, 1, 1]} : vector<2x8x128xf32> to vector<2x8x32xf32>
    %57 = vector.extract_strided_slice %45 {offsets = [0, 0, 0], sizes = [2, 8, 32], strides = [1, 1, 1]} : vector<2x8x128xf32> to vector<2x8x32xf32>
    %cst_19 = arith.constant dense<0.000000e+00> : vector<2x8x8xf32>
    %58 = tpu.matmul %55, %56, %cst_19 {dimension_numbers = #tpu.dot_dimension_numbers<[2], [2], [1], [1], [0, 0, 0, 1, 1, 1], [0], [0]>} : vector<2x8x32xf32>, vector<2x8x32xf32>, vector<2x8x8xf32> -> vector<2x8x8xf32>
    %59 = vector.broadcast %51 : vector<1x8x8xf32> to vector<2x8x8xf32>
    %60 = arith.addf %58, %59 : vector<2x8x8xf32>
    %cst_20 = arith.constant dense<0xFF800000> : vector<2x8xf32>
    %61 = vector.multi_reduction <maximumf>, %60, %cst_20 [2] : vector<2x8x8xf32> to vector<2x8xf32>
    %62 = vector.shape_cast %61 : vector<2x8xf32> to vector<2x8x1xf32>
    %63 = vector.broadcast %62 : vector<2x8x1xf32> to vector<2x8x8xf32>
    %64 = arith.subf %60, %63 : vector<2x8x8xf32>
    %65 = math.exp %64 : vector<2x8x8xf32>
    %cst_21 = arith.constant dense<0.000000e+00> : vector<2x8xf32>
    %66 = vector.multi_reduction <add>, %65, %cst_21 [2] : vector<2x8x8xf32> to vector<2x8xf32>
    %67 = vector.shape_cast %66 : vector<2x8xf32> to vector<2x8x1xf32>
    %68 = tpu.reciprocal %67 {approx = true} : vector<2x8x1xf32> -> vector<2x8x1xf32>
    %69 = vector.broadcast %68 : vector<2x8x1xf32> to vector<2x8x8xf32>
    %70 = arith.mulf %65, %69 : vector<2x8x8xf32>
    %cst_22 = arith.constant dense<0.000000e+00> : vector<2x8x32xf32>
    %71 = tpu.matmul %70, %57, %cst_22 {dimension_numbers = #tpu.dot_dimension_numbers<[2], [1], [1], [2], [0, 0, 0, 1, 1, 2], [0], [0]>} : vector<2x8x8xf32>, vector<2x8x32xf32>, vector<2x8x32xf32> -> vector<2x8x32xf32>
    %72 = vector.shape_cast %71 : vector<2x8x32xf32> to vector<16x32xf32>
    %73 = arith.truncf %72 : vector<16x32xf32> to vector<16x32xbf16>
    %74 = vector.extract_strided_slice %53 {offsets = [0, 0], sizes = [32, 128], strides = [1, 1]} : vector<128x128xbf16> to vector<32x128xbf16>
    %cst_23 = arith.constant dense<0.000000e+00> : vector<16x128xf32>
    %75 = tpu.matmul %73, %74, %cst_23 {dimension_numbers = #tpu.dot_dimension_numbers<[1], [0], [0], [1], [0, 0, 1, 1], [], []>} : vector<16x32xbf16>, vector<32x128xbf16>, vector<16x128xf32> -> vector<16x128xf32>
    %76 = arith.addf %54, %75 : vector<16x128xf32>
    %77 = vector.extract_strided_slice %41 {offsets = [0, 0, 32], sizes = [2, 8, 32], strides = [1, 1, 1]} : vector<2x8x128xf32> to vector<2x8x32xf32>
    %78 = vector.extract_strided_slice %43 {offsets = [0, 0, 32], sizes = [2, 8, 32], strides = [1, 1, 1]} : vector<2x8x128xf32> to vector<2x8x32xf32>
    %79 = vector.extract_strided_slice %45 {offsets = [0, 0, 32], sizes = [2, 8, 32], strides = [1, 1, 1]} : vector<2x8x128xf32> to vector<2x8x32xf32>
    %cst_24 = arith.constant dense<0.000000e+00> : vector<2x8x8xf32>
    %80 = tpu.matmul %77, %78, %cst_24 {dimension_numbers = #tpu.dot_dimension_numbers<[2], [2], [1], [1], [0, 0, 0, 1, 1, 1], [0], [0]>} : vector<2x8x32xf32>, vector<2x8x32xf32>, vector<2x8x8xf32> -> vector<2x8x8xf32>
    %81 = vector.broadcast %51 : vector<1x8x8xf32> to vector<2x8x8xf32>
    %82 = arith.addf %80, %81 : vector<2x8x8xf32>
    %cst_25 = arith.constant dense<0xFF800000> : vector<2x8xf32>
    %83 = vector.multi_reduction <maximumf>, %82, %cst_25 [2] : vector<2x8x8xf32> to vector<2x8xf32>
    %84 = vector.shape_cast %83 : vector<2x8xf32> to vector<2x8x1xf32>
    %85 = vector.broadcast %84 : vector<2x8x1xf32> to vector<2x8x8xf32>
    %86 = arith.subf %82, %85 : vector<2x8x8xf32>
    %87 = math.exp %86 : vector<2x8x8xf32>
    %cst_26 = arith.constant dense<0.000000e+00> : vector<2x8xf32>
    %88 = vector.multi_reduction <add>, %87, %cst_26 [2] : vector<2x8x8xf32> to vector<2x8xf32>
    %89 = vector.shape_cast %88 : vector<2x8xf32> to vector<2x8x1xf32>
    %90 = tpu.reciprocal %89 {approx = true} : vector<2x8x1xf32> -> vector<2x8x1xf32>
    %91 = vector.broadcast %90 : vector<2x8x1xf32> to vector<2x8x8xf32>
    %92 = arith.mulf %87, %91 : vector<2x8x8xf32>
    %cst_27 = arith.constant dense<0.000000e+00> : vector<2x8x32xf32>
    %93 = tpu.matmul %92, %79, %cst_27 {dimension_numbers = #tpu.dot_dimension_numbers<[2], [1], [1], [2], [0, 0, 0, 1, 1, 2], [0], [0]>} : vector<2x8x8xf32>, vector<2x8x32xf32>, vector<2x8x32xf32> -> vector<2x8x32xf32>
    %94 = vector.shape_cast %93 : vector<2x8x32xf32> to vector<16x32xf32>
    %95 = arith.truncf %94 : vector<16x32xf32> to vector<16x32xbf16>
    %96 = vector.extract_strided_slice %53 {offsets = [32, 0], sizes = [32, 128], strides = [1, 1]} : vector<128x128xbf16> to vector<32x128xbf16>
    %cst_28 = arith.constant dense<0.000000e+00> : vector<16x128xf32>
    %97 = tpu.matmul %95, %96, %cst_28 {dimension_numbers = #tpu.dot_dimension_numbers<[1], [0], [0], [1], [0, 0, 1, 1], [], []>} : vector<16x32xbf16>, vector<32x128xbf16>, vector<16x128xf32> -> vector<16x128xf32>
    %98 = arith.addf %76, %97 : vector<16x128xf32>
    %99 = vector.extract_strided_slice %41 {offsets = [0, 0, 64], sizes = [2, 8, 32], strides = [1, 1, 1]} : vector<2x8x128xf32> to vector<2x8x32xf32>
    %100 = vector.extract_strided_slice %43 {offsets = [0, 0, 64], sizes = [2, 8, 32], strides = [1, 1, 1]} : vector<2x8x128xf32> to vector<2x8x32xf32>
    %101 = vector.extract_strided_slice %45 {offsets = [0, 0, 64], sizes = [2, 8, 32], strides = [1, 1, 1]} : vector<2x8x128xf32> to vector<2x8x32xf32>
    %cst_29 = arith.constant dense<0.000000e+00> : vector<2x8x8xf32>
    %102 = tpu.matmul %99, %100, %cst_29 {dimension_numbers = #tpu.dot_dimension_numbers<[2], [2], [1], [1], [0, 0, 0, 1, 1, 1], [0], [0]>} : vector<2x8x32xf32>, vector<2x8x32xf32>, vector<2x8x8xf32> -> vector<2x8x8xf32>
    %103 = vector.broadcast %51 : vector<1x8x8xf32> to vector<2x8x8xf32>
    %104 = arith.addf %102, %103 : vector<2x8x8xf32>
    %cst_30 = arith.constant dense<0xFF800000> : vector<2x8xf32>
    %105 = vector.multi_reduction <maximumf>, %104, %cst_30 [2] : vector<2x8x8xf32> to vector<2x8xf32>
    %106 = vector.shape_cast %105 : vector<2x8xf32> to vector<2x8x1xf32>
    %107 = vector.broadcast %106 : vector<2x8x1xf32> to vector<2x8x8xf32>
    %108 = arith.subf %104, %107 : vector<2x8x8xf32>
    %109 = math.exp %108 : vector<2x8x8xf32>
    %cst_31 = arith.constant dense<0.000000e+00> : vector<2x8xf32>
    %110 = vector.multi_reduction <add>, %109, %cst_31 [2] : vector<2x8x8xf32> to vector<2x8xf32>
    %111 = vector.shape_cast %110 : vector<2x8xf32> to vector<2x8x1xf32>
    %112 = tpu.reciprocal %111 {approx = true} : vector<2x8x1xf32> -> vector<2x8x1xf32>
    %113 = vector.broadcast %112 : vector<2x8x1xf32> to vector<2x8x8xf32>
    %114 = arith.mulf %109, %113 : vector<2x8x8xf32>
    %cst_32 = arith.constant dense<0.000000e+00> : vector<2x8x32xf32>
    %115 = tpu.matmul %114, %101, %cst_32 {dimension_numbers = #tpu.dot_dimension_numbers<[2], [1], [1], [2], [0, 0, 0, 1, 1, 2], [0], [0]>} : vector<2x8x8xf32>, vector<2x8x32xf32>, vector<2x8x32xf32> -> vector<2x8x32xf32>
    %116 = vector.shape_cast %115 : vector<2x8x32xf32> to vector<16x32xf32>
    %117 = arith.truncf %116 : vector<16x32xf32> to vector<16x32xbf16>
    %118 = vector.extract_strided_slice %53 {offsets = [64, 0], sizes = [32, 128], strides = [1, 1]} : vector<128x128xbf16> to vector<32x128xbf16>
    %cst_33 = arith.constant dense<0.000000e+00> : vector<16x128xf32>
    %119 = tpu.matmul %117, %118, %cst_33 {dimension_numbers = #tpu.dot_dimension_numbers<[1], [0], [0], [1], [0, 0, 1, 1], [], []>} : vector<16x32xbf16>, vector<32x128xbf16>, vector<16x128xf32> -> vector<16x128xf32>
    %120 = arith.addf %98, %119 : vector<16x128xf32>
    %121 = vector.extract_strided_slice %41 {offsets = [0, 0, 96], sizes = [2, 8, 32], strides = [1, 1, 1]} : vector<2x8x128xf32> to vector<2x8x32xf32>
    %122 = vector.extract_strided_slice %43 {offsets = [0, 0, 96], sizes = [2, 8, 32], strides = [1, 1, 1]} : vector<2x8x128xf32> to vector<2x8x32xf32>
    %123 = vector.extract_strided_slice %45 {offsets = [0, 0, 96], sizes = [2, 8, 32], strides = [1, 1, 1]} : vector<2x8x128xf32> to vector<2x8x32xf32>
    %cst_34 = arith.constant dense<0.000000e+00> : vector<2x8x8xf32>
    %124 = tpu.matmul %121, %122, %cst_34 {dimension_numbers = #tpu.dot_dimension_numbers<[2], [2], [1], [1], [0, 0, 0, 1, 1, 1], [0], [0]>} : vector<2x8x32xf32>, vector<2x8x32xf32>, vector<2x8x8xf32> -> vector<2x8x8xf32>
    %125 = vector.broadcast %51 : vector<1x8x8xf32> to vector<2x8x8xf32>
    %126 = arith.addf %124, %125 : vector<2x8x8xf32>
    %cst_35 = arith.constant dense<0xFF800000> : vector<2x8xf32>
    %127 = vector.multi_reduction <maximumf>, %126, %cst_35 [2] : vector<2x8x8xf32> to vector<2x8xf32>
    %128 = vector.shape_cast %127 : vector<2x8xf32> to vector<2x8x1xf32>
    %129 = vector.broadcast %128 : vector<2x8x1xf32> to vector<2x8x8xf32>
    %130 = arith.subf %126, %129 : vector<2x8x8xf32>
    %131 = math.exp %130 : vector<2x8x8xf32>
    %cst_36 = arith.constant dense<0.000000e+00> : vector<2x8xf32>
    %132 = vector.multi_reduction <add>, %131, %cst_36 [2] : vector<2x8x8xf32> to vector<2x8xf32>
    %133 = vector.shape_cast %132 : vector<2x8xf32> to vector<2x8x1xf32>
    %134 = tpu.reciprocal %133 {approx = true} : vector<2x8x1xf32> -> vector<2x8x1xf32>
    %135 = vector.broadcast %134 : vector<2x8x1xf32> to vector<2x8x8xf32>
    %136 = arith.mulf %131, %135 : vector<2x8x8xf32>
    %cst_37 = arith.constant dense<0.000000e+00> : vector<2x8x32xf32>
    %137 = tpu.matmul %136, %123, %cst_37 {dimension_numbers = #tpu.dot_dimension_numbers<[2], [1], [1], [2], [0, 0, 0, 1, 1, 2], [0], [0]>} : vector<2x8x8xf32>, vector<2x8x32xf32>, vector<2x8x32xf32> -> vector<2x8x32xf32>
    %138 = vector.shape_cast %137 : vector<2x8x32xf32> to vector<16x32xf32>
    %139 = arith.truncf %138 : vector<16x32xf32> to vector<16x32xbf16>
    %140 = vector.extract_strided_slice %53 {offsets = [96, 0], sizes = [32, 128], strides = [1, 1]} : vector<128x128xbf16> to vector<32x128xbf16>
    %cst_38 = arith.constant dense<0.000000e+00> : vector<16x128xf32>
    %141 = tpu.matmul %139, %140, %cst_38 {dimension_numbers = #tpu.dot_dimension_numbers<[1], [0], [0], [1], [0, 0, 1, 1], [], []>} : vector<16x32xbf16>, vector<32x128xbf16>, vector<16x128xf32> -> vector<16x128xf32>
    %142 = arith.addf %120, %141 : vector<16x128xf32>
    %143 = arith.addf %13, %142 : vector<16x128xf32>
    %144 = vector.broadcast %9 : vector<1x128xf32> to vector<16x128xf32>
    %145 = arith.addf %143, %144 : vector<16x128xf32>
    %cst_39 = arith.constant dense<0.000000e+00> : vector<16xf32>
    %146 = vector.multi_reduction <add>, %145, %cst_39 [1] : vector<16x128xf32> to vector<16xf32>
    %147 = vector.shape_cast %146 : vector<16xf32> to vector<16x1xf32>
    %cst_40 = arith.constant 1.280000e+02 : f32
    %148 = vector.broadcast %cst_40 : f32 to vector<16x1xf32>
    %149 = arith.divf %147, %148 : vector<16x1xf32>
    %150 = vector.broadcast %149 : vector<16x1xf32> to vector<16x128xf32>
    %151 = arith.subf %145, %150 : vector<16x128xf32>
    %152 = arith.mulf %151, %151 : vector<16x128xf32>
    %cst_41 = arith.constant dense<0.000000e+00> : vector<16xf32>
    %153 = vector.multi_reduction <add>, %152, %cst_41 [1] : vector<16x128xf32> to vector<16xf32>
    %154 = vector.shape_cast %153 : vector<16xf32> to vector<16x1xf32>
    %cst_42 = arith.constant 1.280000e+02 : f32
    %155 = vector.broadcast %cst_42 : f32 to vector<16x1xf32>
    %156 = arith.divf %154, %155 : vector<16x1xf32>
    %cst_43 = arith.constant 9.99999997E-7 : f32
    %157 = vector.broadcast %cst_43 : f32 to vector<16x1xf32>
    %158 = arith.addf %156, %157 : vector<16x1xf32>
    %159 = math.rsqrt %158 : vector<16x1xf32>
    %160 = vector.broadcast %159 : vector<16x1xf32> to vector<16x128xf32>
    %161 = arith.mulf %151, %160 : vector<16x128xf32>
    %162 = vector.broadcast %7 : vector<1x128xf32> to vector<16x128xf32>
    %163 = arith.mulf %161, %162 : vector<16x128xf32>
    %164 = vector.broadcast %8 : vector<1x128xf32> to vector<16x128xf32>
    %165 = arith.addf %163, %164 : vector<16x128xf32>
    %166 = arith.truncf %165 : vector<16x128xf32> to vector<16x128xbf16>
    %c0_44 = arith.constant 0 : index
    %c0_45 = arith.constant 0 : index
    %c0_46 = arith.constant 0 : index
    %167 = vector.load %arg9[%c0_44, %c0_45, %c0_46] : memref<1x128x256xbf16, #tpu.memory_space<vmem>>, vector<1x128x256xbf16>
    %168 = vector.shape_cast %167 : vector<1x128x256xbf16> to vector<128x256xbf16>
    %cst_47 = arith.constant dense<0.000000e+00> : vector<16x256xf32>
    %169 = tpu.matmul %166, %168, %cst_47 {dimension_numbers = #tpu.dot_dimension_numbers<[1], [0], [0], [1], [0, 0, 1, 1], [], []>} : vector<16x128xbf16>, vector<128x256xbf16>, vector<16x256xf32> -> vector<16x256xf32>
    %170 = vector.broadcast %12 : vector<1x256xf32> to vector<16x256xf32>
    %171 = arith.addf %169, %170 : vector<16x256xf32>
    %cst_48 = arith.constant 5.000000e-01 : f32
    %172 = vector.broadcast %cst_48 : f32 to vector<16x256xf32>
    %173 = arith.mulf %172, %171 : vector<16x256xf32>
    %cst_49 = arith.constant 0.707106769 : f32
    %174 = vector.broadcast %cst_49 : f32 to vector<16x256xf32>
    %175 = arith.mulf %171, %174 : vector<16x256xf32>
    %cst_50 = arith.constant -3.8325069 : f32
    %cst_51 = arith.constant 3.8325069 : f32
    %176 = vector.broadcast %cst_50 : f32 to vector<16x256xf32>
    %177 = arith.maximumf %176, %175 : vector<16x256xf32>
    %178 = vector.broadcast %cst_51 : f32 to vector<16x256xf32>
    %179 = arith.minimumf %178, %177 : vector<16x256xf32>
    %180 = arith.mulf %179, %179 : vector<16x256xf32>
    %cst_52 = arith.constant 2.29050653E-4 : f32
    %181 = vector.broadcast %cst_52 : f32 to vector<16x256xf32>
    %182 = arith.mulf %181, %180 : vector<16x256xf32>
    %cst_53 = arith.constant 0.00340829091 : f32
    %183 = vector.broadcast %cst_53 : f32 to vector<16x256xf32>
    %184 = arith.addf %182, %183 : vector<16x256xf32>
    %185 = arith.mulf %184, %180 : vector<16x256xf32>
    %cst_54 = arith.constant 0.0509556942 : f32
    %186 = vector.broadcast %cst_54 : f32 to vector<16x256xf32>
    %187 = arith.addf %185, %186 : vector<16x256xf32>
    %188 = arith.mulf %187, %180 : vector<16x256xf32>
    %cst_55 = arith.constant 0.185208321 : f32
    %189 = vector.broadcast %cst_55 : f32 to vector<16x256xf32>
    %190 = arith.addf %188, %189 : vector<16x256xf32>
    %191 = arith.mulf %190, %180 : vector<16x256xf32>
    %cst_56 = arith.constant 1.12837911 : f32
    %192 = vector.broadcast %cst_56 : f32 to vector<16x256xf32>
    %193 = arith.addf %191, %192 : vector<16x256xf32>
    %cst_57 = arith.constant -1.17916031E-7 : f32
    %194 = vector.broadcast %cst_57 : f32 to vector<16x256xf32>
    %195 = arith.mulf %194, %180 : vector<16x256xf32>
    %cst_58 = arith.constant 2.35479656E-5 : f32
    %196 = vector.broadcast %cst_58 : f32 to vector<16x256xf32>
    %197 = arith.addf %195, %196 : vector<16x256xf32>
    %198 = arith.mulf %197, %180 : vector<16x256xf32>
    %cst_59 = arith.constant 0.00101796258 : f32
    %199 = vector.broadcast %cst_59 : f32 to vector<16x256xf32>
    %200 = arith.addf %198, %199 : vector<16x256xf32>
    %201 = arith.mulf %200, %180 : vector<16x256xf32>
    %cst_60 = arith.constant 0.0140704699 : f32
    %202 = vector.broadcast %cst_60 : f32 to vector<16x256xf32>
    %203 = arith.addf %201, %202 : vector<16x256xf32>
    %204 = arith.mulf %203, %180 : vector<16x256xf32>
    %cst_61 = arith.constant 0.110985048 : f32
    %205 = vector.broadcast %cst_61 : f32 to vector<16x256xf32>
    %206 = arith.addf %204, %205 : vector<16x256xf32>
    %207 = arith.mulf %206, %180 : vector<16x256xf32>
    %cst_62 = arith.constant 0.497469246 : f32
    %208 = vector.broadcast %cst_62 : f32 to vector<16x256xf32>
    %209 = arith.addf %207, %208 : vector<16x256xf32>
    %210 = arith.mulf %209, %180 : vector<16x256xf32>
    %cst_63 = arith.constant 1.000000e+00 : f32
    %211 = vector.broadcast %cst_63 : f32 to vector<16x256xf32>
    %212 = arith.addf %210, %211 : vector<16x256xf32>
    %213 = arith.mulf %179, %193 : vector<16x256xf32>
    %214 = tpu.reciprocal %212 : vector<16x256xf32> -> vector<16x256xf32>
    %215 = arith.mulf %213, %214 : vector<16x256xf32>
    %cst_64 = arith.constant 1.000000e+00 : f32
    %216 = vector.broadcast %cst_64 : f32 to vector<16x256xf32>
    %217 = arith.addf %216, %215 : vector<16x256xf32>
    %218 = arith.mulf %173, %217 : vector<16x256xf32>
    %219 = arith.truncf %218 : vector<16x256xf32> to vector<16x256xbf16>
    %c0_65 = arith.constant 0 : index
    %c0_66 = arith.constant 0 : index
    %c0_67 = arith.constant 0 : index
    %220 = vector.load %arg10[%c0_65, %c0_66, %c0_67] : memref<1x256x128xbf16, #tpu.memory_space<vmem>>, vector<1x256x128xbf16>
    %221 = vector.shape_cast %220 : vector<1x256x128xbf16> to vector<256x128xbf16>
    %cst_68 = arith.constant dense<0.000000e+00> : vector<16x128xf32>
    %222 = tpu.matmul %219, %221, %cst_68 {dimension_numbers = #tpu.dot_dimension_numbers<[1], [0], [0], [1], [0, 0, 1, 1], [], []>} : vector<16x256xbf16>, vector<256x128xbf16>, vector<16x128xf32> -> vector<16x128xf32>
    %223 = vector.broadcast %10 : vector<1x128xf32> to vector<16x128xf32>
    %224 = arith.addf %222, %223 : vector<16x128xf32>
    %225 = tpu.iota {dimensions = array<i32: 0>} : vector<16x1xi32>
    %c7_i32 = arith.constant 7 : i32
    %226 = vector.broadcast %c7_i32 : i32 to vector<16x1xi32>
    %227 = arith.andi %225, %226 : vector<16x1xi32>
    %c5_i32_69 = arith.constant 5 : i32
    %228 = vector.broadcast %c5_i32_69 : i32 to vector<16x1xi32>
    %229 = arith.cmpi slt, %227, %228 : vector<16x1xi32>
    %230 = arith.extui %229 : vector<16x1xi1> to vector<16x1xi32>
    %231 = arith.sitofp %230 : vector<16x1xi32> to vector<16x1xf32>
    %232 = arith.addf %145, %224 : vector<16x128xf32>
    %233 = vector.broadcast %231 : vector<16x1xf32> to vector<16x128xf32>
    %234 = arith.mulf %232, %233 : vector<16x128xf32>
    %c0_70 = arith.constant 0 : index
    %c0_71 = arith.constant 0 : index
    %235 = vector.load %arg16[%c0_70, %c0_71] : memref<16x128xf32, #tpu.memory_space<vmem>>, vector<16x128xf32>
    tpu.vector_store %arg16[%c0_70, %c0_71], %234 {strides = array<i32>} : memref<16x128xf32, #tpu.memory_space<vmem>>, vector<16x128xf32>,
    %c1_i32 = arith.constant 1 : i32
    %236 = arith.cmpi eq, %arg0, %c1_i32 : i32
    %237 = arith.extui %236 : i1 to i32
    %c0_i32_72 = arith.constant 0 : i32
    %238 = arith.cmpi ne, %237, %c0_i32_72 : i32
    scf.if %238 {
      %c0_73 = arith.constant 0 : index
      %c0_74 = arith.constant 0 : index
      %239 = vector.load %arg11[%c0_73, %c0_74] : memref<1x128xf32, #tpu.memory_space<vmem>>, vector<1x128xf32>
      %c0_75 = arith.constant 0 : index
      %c0_76 = arith.constant 0 : index
      %240 = vector.load %arg12[%c0_75, %c0_76] : memref<1x128xf32, #tpu.memory_space<vmem>>, vector<1x128xf32>
      %cst_77 = arith.constant dense<0.000000e+00> : vector<16xf32>
      %241 = vector.multi_reduction <add>, %234, %cst_77 [1] : vector<16x128xf32> to vector<16xf32>
      %242 = vector.shape_cast %241 : vector<16xf32> to vector<16x1xf32>
      %cst_78 = arith.constant 1.280000e+02 : f32
      %243 = vector.broadcast %cst_78 : f32 to vector<16x1xf32>
      %244 = arith.divf %242, %243 : vector<16x1xf32>
      %245 = vector.broadcast %244 : vector<16x1xf32> to vector<16x128xf32>
      %246 = arith.subf %234, %245 : vector<16x128xf32>
      %247 = arith.mulf %246, %246 : vector<16x128xf32>
      %cst_79 = arith.constant dense<0.000000e+00> : vector<16xf32>
      %248 = vector.multi_reduction <add>, %247, %cst_79 [1] : vector<16x128xf32> to vector<16xf32>
      %249 = vector.shape_cast %248 : vector<16xf32> to vector<16x1xf32>
      %cst_80 = arith.constant 1.280000e+02 : f32
      %250 = vector.broadcast %cst_80 : f32 to vector<16x1xf32>
      %251 = arith.divf %249, %250 : vector<16x1xf32>
      %cst_81 = arith.constant 9.99999997E-7 : f32
      %252 = vector.broadcast %cst_81 : f32 to vector<16x1xf32>
      %253 = arith.addf %251, %252 : vector<16x1xf32>
      %254 = math.rsqrt %253 : vector<16x1xf32>
      %255 = vector.broadcast %254 : vector<16x1xf32> to vector<16x128xf32>
      %256 = arith.mulf %246, %255 : vector<16x128xf32>
      %257 = vector.broadcast %239 : vector<1x128xf32> to vector<16x128xf32>
      %258 = arith.mulf %256, %257 : vector<16x128xf32>
      %259 = vector.broadcast %240 : vector<1x128xf32> to vector<16x128xf32>
      %260 = arith.addf %258, %259 : vector<16x128xf32>
      %261 = arith.truncf %260 : vector<16x128xf32> to vector<16x128xbf16>
      %c0_82 = arith.constant 0 : index
      %c0_83 = arith.constant 0 : index
      %262 = vector.load %arg13[%c0_82, %c0_83] : memref<128x128xbf16, #tpu.memory_space<vmem>>, vector<128x128xbf16>
      %cst_84 = arith.constant dense<0.000000e+00> : vector<16x128xf32>
      %263 = tpu.matmul %261, %262, %cst_84 {dimension_numbers = #tpu.dot_dimension_numbers<[1], [0], [0], [1], [0, 0, 1, 1], [], []>} : vector<16x128xbf16>, vector<128x128xbf16>, vector<16x128xf32> -> vector<16x128xf32>
      %c0_85 = arith.constant 0 : index
      %c0_86 = arith.constant 0 : index
      %264 = vector.load %arg14[%c0_85, %c0_86] : memref<1x128xf32, #tpu.memory_space<vmem>>, vector<1x128xf32>
      %265 = vector.broadcast %264 : vector<1x128xf32> to vector<16x128xf32>
      %266 = arith.addf %263, %265 : vector<16x128xf32>
      %c0_87 = arith.constant 0 : index
      %c0_88 = arith.constant 0 : index
      %267 = vector.load %arg15[%c0_87, %c0_88] : memref<16x128xf32, #tpu.memory_space<vmem>>, vector<16x128xf32>
      tpu.vector_store %arg15[%c0_87, %c0_88], %266 {strides = array<i32>} : memref<16x128xf32, #tpu.memory_space<vmem>>, vector<16x128xf32>,
    } else {
    }
    return
  }
  func.func @transform_0(%arg0: i32) -> (i32, i32) {
    %c0_i32 = arith.constant 0 : i32
    %c0_i32_0 = arith.constant 0 : i32
    %c0_i32_1 = arith.constant 0 : i32
    return %c0_i32, %c0_i32_0 : i32, i32
  }
  func.func @transform_1(%arg0: i32) -> (i32, i32) {
    %c0_i32 = arith.constant 0 : i32
    %c0_i32_0 = arith.constant 0 : i32
    %c0_i32_1 = arith.constant 0 : i32
    return %c0_i32, %c0_i32_0 : i32, i32
  }
  func.func @transform_2(%arg0: i32) -> (i32, i32) {
    %c0_i32 = arith.constant 0 : i32
    %c0_i32_0 = arith.constant 0 : i32
    %c0_i32_1 = arith.constant 0 : i32
    return %c0_i32, %c0_i32_0 : i32, i32
  }
  func.func @transform_3(%arg0: i32) -> (i32, i32) {
    %c0_i32 = arith.constant 0 : i32
    %c0_i32_0 = arith.constant 0 : i32
    %c0_i32_1 = arith.constant 0 : i32
    return %c0_i32, %c0_i32_0 : i32, i32
  }
  func.func @transform_4(%arg0: i32) -> (i32, i32) {
    %c0_i32 = arith.constant 0 : i32
    %c0_i32_0 = arith.constant 0 : i32
    %c0_i32_1 = arith.constant 0 : i32
    return %c0_i32, %c0_i32_0 : i32, i32
  }
  func.func @transform_5(%arg0: i32) -> (i32, i32, i32) {
    %c0_i32 = arith.constant 0 : i32
    %c0_i32_0 = arith.constant 0 : i32
    %c0_i32_1 = arith.constant 0 : i32
    return %arg0, %c0_i32, %c0_i32_0 : i32, i32, i32
  }
  func.func @transform_6(%arg0: i32) -> (i32, i32, i32) {
    %c0_i32 = arith.constant 0 : i32
    %c0_i32_0 = arith.constant 0 : i32
    %c0_i32_1 = arith.constant 0 : i32
    return %arg0, %c0_i32, %c0_i32_0 : i32, i32, i32
  }
  func.func @transform_7(%arg0: i32) -> (i32, i32, i32) {
    %c0_i32 = arith.constant 0 : i32
    %c0_i32_0 = arith.constant 0 : i32
    %c0_i32_1 = arith.constant 0 : i32
    return %arg0, %c0_i32, %c0_i32_0 : i32, i32, i32
  }
  func.func @transform_8(%arg0: i32) -> (i32, i32, i32) {
    %c0_i32 = arith.constant 0 : i32
    %c0_i32_0 = arith.constant 0 : i32
    %c0_i32_1 = arith.constant 0 : i32
    return %arg0, %c0_i32, %c0_i32_0 : i32, i32, i32
  }
  func.func @transform_9(%arg0: i32) -> (i32, i32, i32) {
    %c0_i32 = arith.constant 0 : i32
    %c0_i32_0 = arith.constant 0 : i32
    %c0_i32_1 = arith.constant 0 : i32
    return %arg0, %c0_i32, %c0_i32_0 : i32, i32, i32
  }
  func.func @transform_10(%arg0: i32) -> (i32, i32) {
    %c0_i32 = arith.constant 0 : i32
    %c0_i32_0 = arith.constant 0 : i32
    %c0_i32_1 = arith.constant 0 : i32
    return %c0_i32, %c0_i32_0 : i32, i32
  }
  func.func @transform_11(%arg0: i32) -> (i32, i32) {
    %c0_i32 = arith.constant 0 : i32
    %c0_i32_0 = arith.constant 0 : i32
    %c0_i32_1 = arith.constant 0 : i32
    return %c0_i32, %c0_i32_0 : i32, i32
  }
  func.func @transform_12(%arg0: i32) -> (i32, i32) {
    %c0_i32 = arith.constant 0 : i32
    %c0_i32_0 = arith.constant 0 : i32
    %c0_i32_1 = arith.constant 0 : i32
    return %c0_i32, %c0_i32_0 : i32, i32
  }
  func.func @transform_13(%arg0: i32) -> (i32, i32) {
    %c0_i32 = arith.constant 0 : i32
    %c0_i32_0 = arith.constant 0 : i32
    %c0_i32_1 = arith.constant 0 : i32
    return %c0_i32, %c0_i32_0 : i32, i32
  }
  func.func @transform_14(%arg0: i32) -> (i32, i32) {
    %c0_i32 = arith.constant 0 : i32
    %c0_i32_0 = arith.constant 0 : i32
    %c0_i32_1 = arith.constant 0 : i32
    return %c0_i32, %c0_i32_0 : i32, i32
  }
}

</mosaic_0001>

<llo_original>
// kernel: vit_forward.1
$region0: #{vit_forward.1}
  #allocation0 [shape = 'u32[]', space=smem, size = 0x4, offset = 0x4, fixed_abs, tag = 'smem constant byte address 0x4 - core index']
  #allocation1 [shape = 'u32[144,128]{1,0:T(1,128)}', space=vmem, size = 0x12000, scoped, tag = 'internal scratch']
  #allocation2 [shape = 'f32[16,128]{1,0:T(8,128)}', space=vmem, size = 0x2000, scoped, tag = 'scratch operand']
  %s0 = inlined_call_operand.vmem [shape: f32[8,768], index: 0, kind: input, shape index: {}]
  %s1 = inlined_call_operand.vmem [shape: bf16[768,128], index: 1, kind: input, shape index: {}]
  %s2 = inlined_call_operand.vmem [shape: f32[1,128], index: 2, kind: input, shape index: {}]
  %s3 = inlined_call_operand.vmem [shape: f32[1,128], index: 3, kind: input, shape index: {}]
  %s4 = inlined_call_operand.vmem [shape: f32[5,128], index: 4, kind: input, shape index: {}]
  %s5 = inlined_call_operand.vmem [shape: f32[2,8,384], index: 5, kind: input, shape index: {}]
  %s6 = inlined_call_operand.vmem [shape: bf16[2,128,384], index: 6, kind: input, shape index: {}]
  %s7 = inlined_call_operand.vmem [shape: bf16[2,128,128], index: 7, kind: input, shape index: {}]
  %s8 = inlined_call_operand.vmem [shape: bf16[2,128,256], index: 8, kind: input, shape index: {}]
  %s9 = inlined_call_operand.vmem [shape: bf16[2,256,128], index: 9, kind: input, shape index: {}]
  %s10 = inlined_call_operand.vmem [shape: f32[1,128], index: 10, kind: input, shape index: {}]
  %s11 = inlined_call_operand.vmem [shape: f32[1,128], index: 11, kind: input, shape index: {}]
  %s12 = inlined_call_operand.vmem [shape: bf16[128,128], index: 12, kind: input, shape index: {}]
  %s13 = inlined_call_operand.vmem [shape: f32[1,128], index: 13, kind: input, shape index: {}]
  %s14 = inlined_call_operand.vmem [shape: f32[16,128], index: 14, kind: output, shape index: {}]
  %s15 = sld [smem:[#allocation0]]
  $region97: #{vit_forward.1} parent=0
    _
  %s17 = ssub.s32 1, %s15
  %s18 = scalar_select 0, %s17, %s15
  loop: start=0, step=1, limit=4
  $region2: #{vit_forward.1} parent=0 // loop_pre_header
    _
  $region3: #{vit_forward.1} parent=0 // loop_header
    %s20 = sphi 0, %s24
    %p21 = scmp.ge.s32.totalorder %s20, 4
    %s28 = sphi 0, %s28
    %s30 = sphi 0, %s28
    %s31 = sphi 0, %s30
    %s45 = sphi 0, %s31
    %s49 = sphi 0, %s49
    %s51 = sphi 0, %s49
    %s52 = sphi 0, %s51
    %s66 = sphi 0, %s52
    %s70 = sphi 0, %s70
    %s72 = sphi 0, %s70
    %s73 = sphi 0, %s72
    %s87 = sphi 0, %s73
    %s91 = sphi 0, %s91
    %s93 = sphi 0, %s91
    %s94 = sphi 0, %s93
    %s108 = sphi 0, %s94
    %s112 = sphi 0, %s112
    %s114 = sphi 0, %s112
    %s115 = sphi 0, %s114
    %s129 = sphi 0, %s115
    %s135 = sphi 0, %s137
    %s138 = sphi 0, %s135
    %s139 = sphi 0, %s138
    %s155 = sphi 0, %s139
    %s161 = sphi 0, %s163
    %s164 = sphi 0, %s161
    %s165 = sphi 0, %s164
    %s181 = sphi 0, %s165
    %s187 = sphi 0, %s189
    %s190 = sphi 0, %s187
    %s191 = sphi 0, %s190
    %s207 = sphi 0, %s191
    %s213 = sphi 0, %s215
    %s216 = sphi 0, %s213
    %s217 = sphi 0, %s216
    %s233 = sphi 0, %s217
    %s239 = sphi 0, %s241
    %s242 = sphi 0, %s239
    %s243 = sphi 0, %s242
    %s259 = sphi 0, %s243
    %s263 = sphi 0, %s263
    %s265 = sphi 0, %s263
    %s266 = sphi 0, %s265
    %s280 = sphi 0, %s266
    %s284 = sphi 0, %s284
    %s286 = sphi 0, %s284
    %s287 = sphi 0, %s286
    %s301 = sphi 0, %s287
    %s305 = sphi 0, %s305
    %s307 = sphi 0, %s305
    %s308 = sphi 0, %s307
    %s322 = sphi 0, %s308
    %s326 = sphi 0, %s326
    %s328 = sphi 0, %s326
    %s329 = sphi 0, %s328
    %s343 = sphi 0, %s329
    %s347 = sphi 0, %s347
    %s349 = sphi 0, %s347
    %s350 = sphi 0, %s349
    %s364 = sphi 0, %s350
  $region4: #{vit_forward.1} parent=0 // loop_header_branch
    %23 = sbr.rel (%p21) target = $region8
  $region5: #{vit_forward.1} parent=0 // loop_body
    %s25 = ssub.s32 %s20, 1
    %s26 = ssub.s32 %s20, 2
    %s27 = sadd.s32 %s20, 1
    %s29 = sadd.s32 %s28, 1
    %p32 = scmp.eq.s32.totalorder %s20, 1
    %p33 = scmp.ne.s32.totalorder %s28, %s30
    %p34 = scmp.eq.s32.totalorder %s20, 0
    %p35 = por %p33, %p34
    %p36 = scmp.ne.s32.totalorder %s28, %s30
    %p37 = scmp.eq.s32.totalorder %s25, 1
    %p38 = por %p36, %p37
    %p39 = scmp.ne.s32.totalorder %s30, %s31
    %p40 = scmp.eq.s32.totalorder %s25, 0
    %p41 = por %p39, %p40
    %p42 = scmp.ne.s32.totalorder %s30, %s31
    %p43 = scmp.eq.s32.totalorder %s26, 1
    %p44 = por %p42, %p43
    %p46 = scmp.ne.s32.totalorder %s31, %s45
    %p47 = scmp.eq.s32.totalorder %s26, 0
    %p48 = por %p46, %p47
    %s50 = sadd.s32 %s49, 1
    %p53 = scmp.eq.s32.totalorder %s20, 1
    %p54 = scmp.ne.s32.totalorder %s49, %s51
    %p55 = scmp.eq.s32.totalorder %s20, 0
    %p56 = por %p54, %p55
    %p57 = scmp.ne.s32.totalorder %s49, %s51
    %p58 = scmp.eq.s32.totalorder %s25, 1
    %p59 = por %p57, %p58
    %p60 = scmp.ne.s32.totalorder %s51, %s52
    %p61 = scmp.eq.s32.totalorder %s25, 0
    %p62 = por %p60, %p61
    %p63 = scmp.ne.s32.totalorder %s51, %s52
    %p64 = scmp.eq.s32.totalorder %s26, 1
    %p65 = por %p63, %p64
    %p67 = scmp.ne.s32.totalorder %s52, %s66
    %p68 = scmp.eq.s32.totalorder %s26, 0
    %p69 = por %p67, %p68
    %s71 = sadd.s32 %s70, 1
    %p74 = scmp.eq.s32.totalorder %s20, 1
    %p75 = scmp.ne.s32.totalorder %s70, %s72
    %p76 = scmp.eq.s32.totalorder %s20, 0
    %p77 = por %p75, %p76
    %p78 = scmp.ne.s32.totalorder %s70, %s72
    %p79 = scmp.eq.s32.totalorder %s25, 1
    %p80 = por %p78, %p79
    %p81 = scmp.ne.s32.totalorder %s72, %s73
    %p82 = scmp.eq.s32.totalorder %s25, 0
    %p83 = por %p81, %p82
    %p84 = scmp.ne.s32.totalorder %s72, %s73
    %p85 = scmp.eq.s32.totalorder %s26, 1
    %p86 = por %p84, %p85
    %p88 = scmp.ne.s32.totalorder %s73, %s87
    %p89 = scmp.eq.s32.totalorder %s26, 0
    %p90 = por %p88, %p89
    %s92 = sadd.s32 %s91, 1
    %p95 = scmp.eq.s32.totalorder %s20, 1
    %p96 = scmp.ne.s32.totalorder %s91, %s93
    %p97 = scmp.eq.s32.totalorder %s20, 0
    %p98 = por %p96, %p97
    %p99 = scmp.ne.s32.totalorder %s91, %s93
    %p100 = scmp.eq.s32.totalorder %s25, 1
    %p101 = por %p99, %p100
    %p102 = scmp.ne.s32.totalorder %s93, %s94
    %p103 = scmp.eq.s32.totalorder %s25, 0
    %p104 = por %p102, %p103
    %p105 = scmp.ne.s32.totalorder %s93, %s94
    %p106 = scmp.eq.s32.totalorder %s26, 1
    %p107 = por %p105, %p106
    %p109 = scmp.ne.s32.totalorder %s94, %s108
    %p110 = scmp.eq.s32.totalorder %s26, 0
    %p111 = por %p109, %p110
    %s113 = sadd.s32 %s112, 1
    %p116 = scmp.eq.s32.totalorder %s20, 1
    %p117 = scmp.ne.s32.totalorder %s112, %s114
    %p118 = scmp.eq.s32.totalorder %s20, 0
    %p119 = por %p117, %p118
    %p120 = scmp.ne.s32.totalorder %s112, %s114
    %p121 = scmp.eq.s32.totalorder %s25, 1
    %p122 = por %p120, %p121
    %p123 = scmp.ne.s32.totalorder %s114, %s115
    %p124 = scmp.eq.s32.totalorder %s25, 0
    %p125 = por %p123, %p124
    %p126 = scmp.ne.s32.totalorder %s114, %s115
    %p127 = scmp.eq.s32.totalorder %s26, 1
    %p128 = por %p126, %p127
    %p130 = scmp.ne.s32.totalorder %s115, %s129
    %p131 = scmp.eq.s32.totalorder %s26, 0
    %p132 = por %p130, %p131
    %s133 = ssub.s32 %s20, %s27
    %p134 = scmp.eq.s32.totalorder %s133, 0
    %s136 = sadd.s32 %s135, 1
    %s137 = scalar_select %p134, %s135, %s136
    %p140 = pneg %p134
    %p141 = scmp.eq.s32.totalorder %s20, 1
    %p142 = por %p140, %p141
    %p143 = scmp.ne.s32.totalorder %s135, %s138
    %p144 = scmp.eq.s32.totalorder %s20, 0
    %p145 = por %p143, %p144
    %p146 = scmp.ne.s32.totalorder %s135, %s138
    %p147 = scmp.eq.s32.totalorder %s25, 1
    %p148 = por %p146, %p147
    %p149 = scmp.ne.s32.totalorder %s138, %s139
    %p150 = scmp.eq.s32.totalorder %s25, 0
    %p151 = por %p149, %p150
    %p152 = scmp.ne.s32.totalorder %s138, %s139
    %p153 = scmp.eq.s32.totalorder %s26, 1
    %p154 = por %p152, %p153
    %p156 = scmp.ne.s32.totalorder %s139, %s155
    %p157 = scmp.eq.s32.totalorder %s26, 0
    %p158 = por %p156, %p157
    %s159 = ssub.s32 %s20, %s27
    %p160 = scmp.eq.s32.totalorder %s159, 0
    %s162 = sadd.s32 %s161, 1
    %s163 = scalar_select %p160, %s161, %s162
    %p166 = pneg %p160
    %p167 = scmp.eq.s32.totalorder %s20, 1
    %p168 = por %p166, %p167
    %p169 = scmp.ne.s32.totalorder %s161, %s164
    %p170 = scmp.eq.s32.totalorder %s20, 0
    %p171 = por %p169, %p170
    %p172 = scmp.ne.s32.totalorder %s161, %s164
    %p173 = scmp.eq.s32.totalorder %s25, 1
    %p174 = por %p172, %p173
    %p175 = scmp.ne.s32.totalorder %s164, %s165
    %p176 = scmp.eq.s32.totalorder %s25, 0
    %p177 = por %p175, %p176
    %p178 = scmp.ne.s32.totalorder %s164, %s165
    %p179 = scmp.eq.s32.totalorder %s26, 1
    %p180 = por %p178, %p179
    %p182 = scmp.ne.s32.totalorder %s165, %s181
    %p183 = scmp.eq.s32.totalorder %s26, 0
    %p184 = por %p182, %p183
    %s185 = ssub.s32 %s20, %s27
    %p186 = scmp.eq.s32.totalorder %s185, 0
    %s188 = sadd.s32 %s187, 1
    %s189 = scalar_select %p186, %s187, %s188
    %p192 = pneg %p186
    %p193 = scmp.eq.s32.totalorder %s20, 1
    %p194 = por %p192, %p193
    %p195 = scmp.ne.s32.totalorder %s187, %s190
    %p196 = scmp.eq.s32.totalorder %s20, 0
    %p197 = por %p195, %p196
    %p198 = scmp.ne.s32.totalorder %s187, %s190
    %p199 = scmp.eq.s32.totalorder %s25, 1
    %p200 = por %p198, %p199
    %p201 = scmp.ne.s32.totalorder %s190, %s191
    %p202 = scmp.eq.s32.totalorder %s25, 0
    %p203 = por %p201, %p202
    %p204 = scmp.ne.s32.totalorder %s190, %s191
    %p205 = scmp.eq.s32.totalorder %s26, 1
    %p206 = por %p204, %p205
    %p208 = scmp.ne.s32.totalorder %s191, %s207
    %p209 = scmp.eq.s32.totalorder %s26, 0
    %p210 = por %p208, %p209
    %s211 = ssub.s32 %s20, %s27
    %p212 = scmp.eq.s32.totalorder %s211, 0
    %s214 = sadd.s32 %s213, 1
    %s215 = scalar_select %p212, %s213, %s214
    %p218 = pneg %p212
    %p219 = scmp.eq.s32.totalorder %s20, 1
    %p220 = por %p218, %p219
    %p221 = scmp.ne.s32.totalorder %s213, %s216
    %p222 = scmp.eq.s32.totalorder %s20, 0
    %p223 = por %p221, %p222
    %p224 = scmp.ne.s32.totalorder %s213, %s216
    %p225 = scmp.eq.s32.totalorder %s25, 1
    %p226 = por %p224, %p225
    %p227 = scmp.ne.s32.totalorder %s216, %s217
    %p228 = scmp.eq.s32.totalorder %s25, 0
    %p229 = por %p227, %p228
    %p230 = scmp.ne.s32.totalorder %s216, %s217
    %p231 = scmp.eq.s32.totalorder %s26, 1
    %p232 = por %p230, %p231
    %p234 = scmp.ne.s32.totalorder %s217, %s233
    %p235 = scmp.eq.s32.totalorder %s26, 0
    %p236 = por %p234, %p235
    %s237 = ssub.s32 %s20, %s27
    %p238 = scmp.eq.s32.totalorder %s237, 0
    %s240 = sadd.s32 %s239, 1
    %s241 = scalar_select %p238, %s239, %s240
    %p244 = pneg %p238
    %p245 = scmp.eq.s32.totalorder %s20, 1
    %p246 = por %p244, %p245
    %p247 = scmp.ne.s32.totalorder %s239, %s242
    %p248 = scmp.eq.s32.totalorder %s20, 0
    %p249 = por %p247, %p248
    %p250 = scmp.ne.s32.totalorder %s239, %s242
    %p251 = scmp.eq.s32.totalorder %s25, 1
    %p252 = por %p250, %p251
    %p253 = scmp.ne.s32.totalorder %s242, %s243
    %p254 = scmp.eq.s32.totalorder %s25, 0
    %p255 = por %p253, %p254
    %p256 = scmp.ne.s32.totalorder %s242, %s243
    %p257 = scmp.eq.s32.totalorder %s26, 1
    %p258 = por %p256, %p257
    %p260 = scmp.ne.s32.totalorder %s243, %s259
    %p261 = scmp.eq.s32.totalorder %s26, 0
    %p262 = por %p260, %p261
    %s264 = sadd.s32 %s263, 1
    %p267 = scmp.eq.s32.totalorder %s20, 1
    %p268 = scmp.ne.s32.totalorder %s263, %s265
    %p269 = scmp.eq.s32.totalorder %s20, 0
    %p270 = por %p268, %p269
    %p271 = scmp.ne.s32.totalorder %s263, %s265
    %p272 = scmp.eq.s32.totalorder %s25, 1
    %p273 = por %p271, %p272
    %p274 = scmp.ne.s32.totalorder %s265, %s266
    %p275 = scmp.eq.s32.totalorder %s25, 0
    %p276 = por %p274, %p275
    %p277 = scmp.ne.s32.totalorder %s265, %s266
    %p278 = scmp.eq.s32.totalorder %s26, 1
    %p279 = por %p277, %p278
    %p281 = scmp.ne.s32.totalorder %s266, %s280
    %p282 = scmp.eq.s32.totalorder %s26, 0
    %p283 = por %p281, %p282
    %s285 = sadd.s32 %s284, 1
    %p288 = scmp.eq.s32.totalorder %s20, 1
    %p289 = scmp.ne.s32.totalorder %s284, %s286
    %p290 = scmp.eq.s32.totalorder %s20, 0
    %p291 = por %p289, %p290
    %p292 = scmp.ne.s32.totalorder %s284, %s286
    %p293 = scmp.eq.s32.totalorder %s25, 1
    %p294 = por %p292, %p293
    %p295 = scmp.ne.s32.totalorder %s286, %s287
    %p296 = scmp.eq.s32.totalorder %s25, 0
    %p297 = por %p295, %p296
    %p298 = scmp.ne.s32.totalorder %s286, %s287
    %p299 = scmp.eq.s32.totalorder %s26, 1
    %p300 = por %p298, %p299
    %p302 = scmp.ne.s32.totalorder %s287, %s301
    %p303 = scmp.eq.s32.totalorder %s26, 0
    %p304 = por %p302, %p303
    %s306 = sadd.s32 %s305, 1
    %p309 = scmp.eq.s32.totalorder %s20, 1
    %p310 = scmp.ne.s32.totalorder %s305, %s307
    %p311 = scmp.eq.s32.totalorder %s20, 0
    %p312 = por %p310, %p311
    %p313 = scmp.ne.s32.totalorder %s305, %s307
    %p314 = scmp.eq.s32.totalorder %s25, 1
    %p315 = por %p313, %p314
    %p316 = scmp.ne.s32.totalorder %s307, %s308
    %p317 = scmp.eq.s32.totalorder %s25, 0
    %p318 = por %p316, %p317
    %p319 = scmp.ne.s32.totalorder %s307, %s308
    %p320 = scmp.eq.s32.totalorder %s26, 1
    %p321 = por %p319, %p320
    %p323 = scmp.ne.s32.totalorder %s308, %s322
    %p324 = scmp.eq.s32.totalorder %s26, 0
    %p325 = por %p323, %p324
    %s327 = sadd.s32 %s326, 1
    %p330 = scmp.eq.s32.totalorder %s20, 1
    %p331 = scmp.ne.s32.totalorder %s326, %s328
    %p332 = scmp.eq.s32.totalorder %s20, 0
    %p333 = por %p331, %p332
    %p334 = scmp.ne.s32.totalorder %s326, %s328
    %p335 = scmp.eq.s32.totalorder %s25, 1
    %p336 = por %p334, %p335
    %p337 = scmp.ne.s32.totalorder %s328, %s329
    %p338 = scmp.eq.s32.totalorder %s25, 0
    %p339 = por %p337, %p338
    %p340 = scmp.ne.s32.totalorder %s328, %s329
    %p341 = scmp.eq.s32.totalorder %s26, 1
    %p342 = por %p340, %p341
    %p344 = scmp.ne.s32.totalorder %s329, %s343
    %p345 = scmp.eq.s32.totalorder %s26, 0
    %p346 = por %p344, %p345
    %s348 = sadd.s32 %s347, 1
    %p351 = scmp.eq.s32.totalorder %s20, 1
    %p352 = scmp.ne.s32.totalorder %s347, %s349
    %p353 = scmp.eq.s32.totalorder %s20, 0
    %p354 = por %p352, %p353
    %p355 = scmp.ne.s32.totalorder %s347, %s349
    %p356 = scmp.eq.s32.totalorder %s25, 1
    %p357 = por %p355, %p356
    %p358 = scmp.ne.s32.totalorder %s349, %s350
    %p359 = scmp.eq.s32.totalorder %s25, 0
    %p360 = por %p358, %p359
    %p361 = scmp.ne.s32.totalorder %s349, %s350
    %p362 = scmp.eq.s32.totalorder %s26, 1
    %p363 = por %p361, %p362
    %p365 = scmp.ne.s32.totalorder %s350, %s364
    %p366 = scmp.eq.s32.totalorder %s26, 0
    %p367 = por %p365, %p366
    %p368 = scmp.le.s32.totalorder 1, %s20
    %p369 = scmp.lt.s32.totalorder %s20, 3
    %p370 = pnand %p368, %p369
    %p371 = pneg %p370
    // Predicated region
    $region9: #{vit_forward.1} parent=5 // pred_check
      _
    $region10: #{vit_forward.1} parent=5 // pred_check_branch
      %373 = sbr.rel (%p370) target = $region12
    $region11: #{vit_forward.1} parent=5 // pred_region
      %s374 = ssub.s32 %s20, 1
      // Predicated region
      $region13: #{vit_forward.1} parent=11 // pred_check
        %p375 = pneg %p41
      $region14: #{vit_forward.1} parent=11 // pred_check_branch
        %377 = sbr.rel (%p375) target = $region16
      $region15: #{vit_forward.1} parent=11 // pred_region
        _
      $region16: #{vit_forward.1} parent=11 // pred_fallthru
        _
      // Predicated region
      $region17: #{vit_forward.1} parent=11 // pred_check
        %p378 = pneg %p62
      $region18: #{vit_forward.1} parent=11 // pred_check_branch
        %380 = sbr.rel (%p378) target = $region20
      $region19: #{vit_forward.1} parent=11 // pred_region
        _
      $region20: #{vit_forward.1} parent=11 // pred_fallthru
        _
      // Predicated region
      $region21: #{vit_forward.1} parent=11 // pred_check
        %p381 = pneg %p83
      $region22: #{vit_forward.1} parent=11 // pred_check_branch
        %383 = sbr.rel (%p381) target = $region24
      $region23: #{vit_forward.1} parent=11 // pred_region
        _
      $region24: #{vit_forward.1} parent=11 // pred_fallthru
        _
      // Predicated region
      $region25: #{vit_forward.1} parent=11 // pred_check
        %p384 = pneg %p104
      $region26: #{vit_forward.1} parent=11 // pred_check_branch
        %386 = sbr.rel (%p384) target = $region28
      $region27: #{vit_forward.1} parent=11 // pred_region
        _
      $region28: #{vit_forward.1} parent=11 // pred_fallthru
        _
      // Predicated region
      $region29: #{vit_forward.1} parent=11 // pred_check
        %p387 = pneg %p125
      $region30: #{vit_forward.1} parent=11 // pred_check_branch
        %389 = sbr.rel (%p387) target = $region32
      $region31: #{vit_forward.1} parent=11 // pred_region
        _
      $region32: #{vit_forward.1} parent=11 // pred_fallthru
        _
      // Predicated region
      $region33: #{vit_forward.1} parent=11 // pred_check
        %p390 = pneg %p276
      $region34: #{vit_forward.1} parent=11 // pred_check_branch
        %392 = sbr.rel (%p390) target = $region36
      $region35: #{vit_forward.1} parent=11 // pred_region
        _
      $region36: #{vit_forward.1} parent=11 // pred_fallthru
        _
      // Predicated region
      $region37: #{vit_forward.1} parent=11 // pred_check
        %p393 = pneg %p297
      $region38: #{vit_forward.1} parent=11 // pred_check_branch
        %395 = sbr.rel (%p393) target = $region40
      $region39: #{vit_forward.1} parent=11 // pred_region
        _
      $region40: #{vit_forward.1} parent=11 // pred_fallthru
        _
      // Predicated region
      $region41: #{vit_forward.1} parent=11 // pred_check
        %p396 = pneg %p318
      $region42: #{vit_forward.1} parent=11 // pred_check_branch
        %398 = sbr.rel (%p396) target = $region44
      $region43: #{vit_forward.1} parent=11 // pred_region
        _
      $region44: #{vit_forward.1} parent=11 // pred_fallthru
        _
      // Predicated region
      $region45: #{vit_forward.1} parent=11 // pred_check
        %p399 = pneg %p339
      $region46: #{vit_forward.1} parent=11 // pred_check_branch
        %401 = sbr.rel (%p399) target = $region48
      $region47: #{vit_forward.1} parent=11 // pred_region
        _
      $region48: #{vit_forward.1} parent=11 // pred_fallthru
        _
    $region12: #{vit_forward.1} parent=5 // pred_fallthru
      _
    %p402 = scmp.lt.s32.totalorder %s20, 2
    // Predicated region
    $region49: #{vit_forward.1} parent=5 // pred_check
      %p403 = pneg %p402
    $region50: #{vit_forward.1} parent=5 // pred_check_branch
      %405 = sbr.rel (%p403) target = $region52
    $region51: #{vit_forward.1} parent=5 // pred_region
      // Predicated region
      $region53: #{vit_forward.1} parent=51 // pred_check
        %p406 = pneg %p145
      $region54: #{vit_forward.1} parent=51 // pred_check_branch
        %408 = sbr.rel (%p406) target = $region56
      $region55: #{vit_forward.1} parent=51 // pred_region
        %p409 = scmp.lt.s32.totalorder %s20, 1
        %s410 = scalar_select %p409, %s20, 1
        %s411 = smul.addr %s410, 3
        %s412 = smul.addr %s411, 8
        %s413 = scalar_lea.vmem %s5, %s412
      $region56: #{vit_forward.1} parent=51 // pred_fallthru
        _
      // Predicated region
      $region57: #{vit_forward.1} parent=51 // pred_check
        %p414 = pneg %p171
      $region58: #{vit_forward.1} parent=51 // pred_check_branch
        %416 = sbr.rel (%p414) target = $region60
      $region59: #{vit_forward.1} parent=51 // pred_region
        %p417 = scmp.lt.s32.totalorder %s20, 1
        %s418 = scalar_select %p417, %s20, 1
        %s419 = smul.addr %s418, 48
        %s420 = smul.addr %s419, 4
        %s421 = scalar_lea.vmem %s6, %s420
      $region60: #{vit_forward.1} parent=51 // pred_fallthru
        _
      // Predicated region
      $region61: #{vit_forward.1} parent=51 // pred_check
        %p422 = pneg %p197
      $region62: #{vit_forward.1} parent=51 // pred_check_branch
        %424 = sbr.rel (%p422) target = $region64
      $region63: #{vit_forward.1} parent=51 // pred_region
        %p425 = scmp.lt.s32.totalorder %s20, 1
        %s426 = scalar_select %p425, %s20, 1
        %s427 = smul.addr %s426, 16
        %s428 = smul.addr %s427, 4
        %s429 = scalar_lea.vmem %s7, %s428
      $region64: #{vit_forward.1} parent=51 // pred_fallthru
        _
      // Predicated region
      $region65: #{vit_forward.1} parent=51 // pred_check
        %p430 = pneg %p223
      $region66: #{vit_forward.1} parent=51 // pred_check_branch
        %432 = sbr.rel (%p430) target = $region68
      $region67: #{vit_forward.1} parent=51 // pred_region
        %p433 = scmp.lt.s32.totalorder %s20, 1
        %s434 = scalar_select %p433, %s20, 1
        %s435 = smul.addr %s434, 32
        %s436 = smul.addr %s435, 4
        %s437 = scalar_lea.vmem %s8, %s436
      $region68: #{vit_forward.1} parent=51 // pred_fallthru
        _
      // Predicated region
      $region69: #{vit_forward.1} parent=51 // pred_check
        %p438 = pneg %p249
      $region70: #{vit_forward.1} parent=51 // pred_check_branch
        %440 = sbr.rel (%p438) target = $region72
      $region71: #{vit_forward.1} parent=51 // pred_region
        %p441 = scmp.lt.s32.totalorder %s20, 1
        %s442 = scalar_select %p441, %s20, 1
        %s443 = smul.addr %s442, 32
        %s444 = smul.addr %s443, 4
        %s445 = scalar_lea.vmem %s9, %s444
      $region72: #{vit_forward.1} parent=51 // pred_fallthru
        _
    $region52: #{vit_forward.1} parent=5 // pred_fallthru
      _
    %p446 = scmp.le.s32.totalorder 1, %s20
    %p447 = scmp.lt.s32.totalorder %s20, 3
    %p448 = pnand %p446, %p447
    %p449 = pneg %p448
    // Predicated region
    $region73: #{vit_forward.1} parent=5 // pred_check
      _
    $region74: #{vit_forward.1} parent=5 // pred_check_branch
      %451 = sbr.rel (%p448) target = $region76
    $region75: #{vit_forward.1} parent=5 // pred_region
      %s452 = ssub.s32 %s20, 1
      %p453 = pneg %p41
      %p454 = pneg %p38
      %p455 = pneg %p62
      %p456 = pneg %p59
      %p457 = pneg %p83
      %p458 = pneg %p80
      %p459 = pneg %p104
      %p460 = pneg %p101
      %p461 = pneg %p125
      %p462 = pneg %p122
      %p463 = scmp.lt.s32.totalorder %s25, 1
      %s464 = scalar_select %p463, %s25, 1
      %s465 = smul.addr %s464, 3
      %s466 = smul.addr %s465, 8
      %s467 = scalar_lea.vmem %s5, %s466
      %p468 = pneg %p151
      %p469 = pneg %p148
      %p470 = scmp.lt.s32.totalorder %s25, 1
      %s471 = scalar_select %p470, %s25, 1
      %s472 = smul.addr %s471, 48
      %s473 = smul.addr %s472, 4
      %s474 = scalar_lea.vmem %s6, %s473
      %p475 = pneg %p177
      %p476 = pneg %p174
      %p477 = scmp.lt.s32.totalorder %s25, 1
      %s478 = scalar_select %p477, %s25, 1
      %s479 = smul.addr %s478, 16
      %s480 = smul.addr %s479, 4
      %s481 = scalar_lea.vmem %s7, %s480
      %p482 = pneg %p203
      %p483 = pneg %p200
      %p484 = scmp.lt.s32.totalorder %s25, 1
      %s485 = scalar_select %p484, %s25, 1
      %s486 = smul.addr %s485, 32
      %s487 = smul.addr %s486, 4
      %s488 = scalar_lea.vmem %s8, %s487
      %p489 = pneg %p229
      %p490 = pneg %p226
      %p491 = scmp.lt.s32.totalorder %s25, 1
      %s492 = scalar_select %p491, %s25, 1
      %s493 = smul.addr %s492, 32
      %s494 = smul.addr %s493, 4
      %s495 = scalar_lea.vmem %s9, %s494
      %p496 = pneg %p255
      %p497 = pneg %p252
      %p498 = pneg %p276
      %p499 = pneg %p273
      %p500 = pneg %p297
      %p501 = pneg %p294
      %p502 = pneg %p318
      %p503 = pneg %p315
      %p504 = pneg %p339
      %p505 = pneg %p336
      %p506 = pneg %p360
      %p507 = pneg %p357
      %p508 = scmp.lt.s32.totalorder %s25, 1
      %s509 = scalar_select %p508, %s25, 1
      %s510 = smul.addr %s509, 3
      %s511 = smul.addr %s510, 8
      %s512 = scalar_lea.vmem %s5, %s511
      %p513 = scmp.lt.s32.totalorder %s25, 1
      %s514 = scalar_select %p513, %s25, 1
      %s515 = smul.addr %s514, 48
      %s516 = smul.addr %s515, 4
      %s517 = scalar_lea.vmem %s6, %s516
      %p518 = scmp.lt.s32.totalorder %s25, 1
      %s519 = scalar_select %p518, %s25, 1
      %s520 = smul.addr %s519, 16
      %s521 = smul.addr %s520, 4
      %s522 = scalar_lea.vmem %s7, %s521
      %p523 = scmp.lt.s32.totalorder %s25, 1
      %s524 = scalar_select %p523, %s25, 1
      %s525 = smul.addr %s524, 32
      %s526 = smul.addr %s525, 4
      %s527 = scalar_lea.vmem %s8, %s526
      %p528 = scmp.lt.s32.totalorder %s25, 1
      %s529 = scalar_select %p528, %s25, 1
      %s530 = smul.addr %s529, 32
      %s531 = smul.addr %s530, 4
      %s532 = scalar_lea.vmem %s9, %s531
      %p534 = scmp.eq.s32.totalorder %s25, 0
      // Predicated region
      $region77: #{vit_forward.1} parent=75 // pred_check
        %p535 = pneg %p534
      $region78: #{vit_forward.1} parent=75 // pred_check_branch
        %537 = sbr.rel (%p535) target = $region80
      $region79: #{vit_forward.1} parent=75 // pred_region
        %v538 = vld [vmem:[%s0] sm:$0xff]
        %v539 = vld [vmem:[%s0 + $0x8] sm:$0xff]
        %v540 = vld [vmem:[%s0 + $0x10] sm:$0xff]
        %v541 = vld [vmem:[%s0 + $0x18] sm:$0xff]
        %v542 = vld [vmem:[%s0 + $0x20] sm:$0xff]
        %v543 = vld [vmem:[%s0 + $0x28] sm:$0xff]
        %v544 = vpack.c.bf16 %v538, %v538
        %v545 = vpack.c.bf16 %v539, %v539
        %v546 = vpack.c.bf16 %v540, %v540
        %v547 = vpack.c.bf16 %v541, %v541
        %v548 = vpack.c.bf16 %v542, %v542
        %v549 = vpack.c.bf16 %v543, %v543
        %v550 = vld [vmem:[%s1] sm:$0xf]
        %v551 = vld [vmem:[%s1 + $0x4] sm:$0xf]
        %v552 = vld [vmem:[%s1 + $0x8] sm:$0xf]
        %v553 = vld [vmem:[%s1 + $0xc] sm:$0xf]
        %v554 = vld [vmem:[%s1 + $0x10] sm:$0xf]
        %v555 = vld [vmem:[%s1 + $0x14] sm:$0xf]
        %v556 = vld [vmem:[%s1 + $0x18] sm:$0xf]
        %v557 = vld [vmem:[%s1 + $0x1c] sm:$0xf]
        %v558 = vld [vmem:[%s1 + $0x20] sm:$0xf]
        %v559 = vld [vmem:[%s1 + $0x24] sm:$0xf]
        %v560 = vld [vmem:[%s1 + $0x28] sm:$0xf]
        %v561 = vld [vmem:[%s1 + $0x2c] sm:$0xf]
        %v562 = vld [vmem:[%s1 + $0x30] sm:$0xf]
        %v563 = vld [vmem:[%s1 + $0x34] sm:$0xf]
        %v564 = vld [vmem:[%s1 + $0x38] sm:$0xf]
        %v565 = vld [vmem:[%s1 + $0x3c] sm:$0xf]
        %v566 = vld [vmem:[%s1 + $0x40] sm:$0xf]
        %v567 = vld [vmem:[%s1 + $0x44] sm:$0xf]
        %v568 = vld [vmem:[%s1 + $0x48] sm:$0xf]
        %v569 = vld [vmem:[%s1 + $0x4c] sm:$0xf]
        %v570 = vld [vmem:[%s1 + $0x50] sm:$0xf]
        %v571 = vld [vmem:[%s1 + $0x54] sm:$0xf]
        %v572 = vld [vmem:[%s1 + $0x58] sm:$0xf]
        %v573 = vld [vmem:[%s1 + $0x5c] sm:$0xf]
        %v574 = vld [vmem:[%s1 + $0x60] sm:$0xf]
        %v575 = vld [vmem:[%s1 + $0x64] sm:$0xf]
        %v576 = vld [vmem:[%s1 + $0x68] sm:$0xf]
        %v577 = vld [vmem:[%s1 + $0x6c] sm:$0xf]
        %v578 = vld [vmem:[%s1 + $0x70] sm:$0xf]
        %v579 = vld [vmem:[%s1 + $0x74] sm:$0xf]
        %v580 = vld [vmem:[%s1 + $0x78] sm:$0xf]
        %v581 = vld [vmem:[%s1 + $0x7c] sm:$0xf]
        %v582 = vld [vmem:[%s1 + $0x80] sm:$0xf]
        %v583 = vld [vmem:[%s1 + $0x84] sm:$0xf]
        %v584 = vld [vmem:[%s1 + $0x88] sm:$0xf]
        %v585 = vld [vmem:[%s1 + $0x8c] sm:$0xf]
        %v586 = vld [vmem:[%s1 + $0x90] sm:$0xf]
        %v587 = vld [vmem:[%s1 + $0x94] sm:$0xf]
        %v588 = vld [vmem:[%s1 + $0x98] sm:$0xf]
        %v589 = vld [vmem:[%s1 + $0x9c] sm:$0xf]
        %v590 = vld [vmem:[%s1 + $0xa0] sm:$0xf]
        %v591 = vld [vmem:[%s1 + $0xa4] sm:$0xf]
        %v592 = vld [vmem:[%s1 + $0xa8] sm:$0xf]
        %v593 = vld [vmem:[%s1 + $0xac] sm:$0xf]
        %v594 = vld [vmem:[%s1 + $0xb0] sm:$0xf]
        %v595 = vld [vmem:[%s1 + $0xb4] sm:$0xf]
        %v596 = vld [vmem:[%s1 + $0xb8] sm:$0xf]
        %v597 = vld [vmem:[%s1 + $0xbc] sm:$0xf]
        %v598 = vld [vmem:[%s1 + $0xc0] sm:$0xf]
        %v599 = vld [vmem:[%s1 + $0xc4] sm:$0xf]
        %v600 = vld [vmem:[%s1 + $0xc8] sm:$0xf]
        %v601 = vld [vmem:[%s1 + $0xcc] sm:$0xf]
        %v602 = vld [vmem:[%s1 + $0xd0] sm:$0xf]
        %v603 = vld [vmem:[%s1 + $0xd4] sm:$0xf]
        %v604 = vld [vmem:[%s1 + $0xd8] sm:$0xf]
        %v605 = vld [vmem:[%s1 + $0xdc] sm:$0xf]
        %v606 = vld [vmem:[%s1 + $0xe0] sm:$0xf]
        %v607 = vld [vmem:[%s1 + $0xe4] sm:$0xf]
        %v608 = vld [vmem:[%s1 + $0xe8] sm:$0xf]
        %v609 = vld [vmem:[%s1 + $0xec] sm:$0xf]
        %v610 = vld [vmem:[%s1 + $0xf0] sm:$0xf]
        %v611 = vld [vmem:[%s1 + $0xf4] sm:$0xf]
        %v612 = vld [vmem:[%s1 + $0xf8] sm:$0xf]
        %v613 = vld [vmem:[%s1 + $0xfc] sm:$0xf]
        %v614 = vld [vmem:[%s1 + $0x100] sm:$0xf]
        %v615 = vld [vmem:[%s1 + $0x104] sm:$0xf]
        %v616 = vld [vmem:[%s1 + $0x108] sm:$0xf]
        %v617 = vld [vmem:[%s1 + $0x10c] sm:$0xf]
        %v618 = vld [vmem:[%s1 + $0x110] sm:$0xf]
        %v619 = vld [vmem:[%s1 + $0x114] sm:$0xf]
        %v620 = vld [vmem:[%s1 + $0x118] sm:$0xf]
        %v621 = vld [vmem:[%s1 + $0x11c] sm:$0xf]
        %v622 = vld [vmem:[%s1 + $0x120] sm:$0xf]
        %v623 = vld [vmem:[%s1 + $0x124] sm:$0xf]
        %v624 = vld [vmem:[%s1 + $0x128] sm:$0xf]
        %v625 = vld [vmem:[%s1 + $0x12c] sm:$0xf]
        %v626 = vld [vmem:[%s1 + $0x130] sm:$0xf]
        %v627 = vld [vmem:[%s1 + $0x134] sm:$0xf]
        %v628 = vld [vmem:[%s1 + $0x138] sm:$0xf]
        %v629 = vld [vmem:[%s1 + $0x13c] sm:$0xf]
        %v630 = vld [vmem:[%s1 + $0x140] sm:$0xf]
        %v631 = vld [vmem:[%s1 + $0x144] sm:$0xf]
        %v632 = vld [vmem:[%s1 + $0x148] sm:$0xf]
        %v633 = vld [vmem:[%s1 + $0x14c] sm:$0xf]
        %v634 = vld [vmem:[%s1 + $0x150] sm:$0xf]
        %v635 = vld [vmem:[%s1 + $0x154] sm:$0xf]
        %v636 = vld [vmem:[%s1 + $0x158] sm:$0xf]
        %v637 = vld [vmem:[%s1 + $0x15c] sm:$0xf]
        %v638 = vld [vmem:[%s1 + $0x160] sm:$0xf]
        %v639 = vld [vmem:[%s1 + $0x164] sm:$0xf]
        %v640 = vld [vmem:[%s1 + $0x168] sm:$0xf]
        %v641 = vld [vmem:[%s1 + $0x16c] sm:$0xf]
        %v642 = vld [vmem:[%s1 + $0x170] sm:$0xf]
        %v643 = vld [vmem:[%s1 + $0x174] sm:$0xf]
        %v644 = vld [vmem:[%s1 + $0x178] sm:$0xf]
        %v645 = vld [vmem:[%s1 + $0x17c] sm:$0xf]
        %v646 = vld [vmem:[%s2] sm:$0x1]
        %v648 = vlaneseq
        %v649 = vshrl.u32 %v648, 7
        %v650 = vsub.s32 0, %v649
        %v651 = vrot.slane %v646, %v650
        %v749 = vunpack.c.l.b16 %v550
        %v750 = vunpack.c.l.b16 %v551
        %v751 = vunpack.c.l.b16 %v552
        %v752 = vunpack.c.l.b16 %v553
        %v753 = vunpack.c.l.b16 %v554
        %v754 = vunpack.c.l.b16 %v555
        %v755 = vunpack.c.l.b16 %v556
        %v756 = vunpack.c.l.b16 %v557
        %v757 = vunpack.c.l.b16 %v558
        %v758 = vunpack.c.l.b16 %v559
        %v759 = vunpack.c.l.b16 %v560
        %v760 = vunpack.c.l.b16 %v561
        %v761 = vunpack.c.l.b16 %v562
        %v762 = vunpack.c.l.b16 %v563
        %v763 = vunpack.c.l.b16 %v564
        %v764 = vunpack.c.l.b16 %v565
        %v765 = vunpack.c.l.b16 %v566
        %v766 = vunpack.c.l.b16 %v567
        %v767 = vunpack.c.l.b16 %v568
        %v768 = vunpack.c.l.b16 %v569
        %v769 = vunpack.c.l.b16 %v570
        %v770 = vunpack.c.l.b16 %v571
        %v771 = vunpack.c.l.b16 %v572
        %v772 = vunpack.c.l.b16 %v573
        %v773 = vunpack.c.l.b16 %v574
        %v774 = vunpack.c.l.b16 %v575
        %v775 = vunpack.c.l.b16 %v576
        %v776 = vunpack.c.l.b16 %v577
        %v777 = vunpack.c.l.b16 %v578
        %v778 = vunpack.c.l.b16 %v579
        %v779 = vunpack.c.l.b16 %v580
        %v780 = vunpack.c.l.b16 %v581
        %v781 = vunpack.c.l.b16 %v582
        %v782 = vunpack.c.l.b16 %v583
        %v783 = vunpack.c.l.b16 %v584
        %v784 = vunpack.c.l.b16 %v585
        %v785 = vunpack.c.l.b16 %v586
        %v786 = vunpack.c.l.b16 %v587
        %v787 = vunpack.c.l.b16 %v588
        %v788 = vunpack.c.l.b16 %v589
        %v789 = vunpack.c.l.b16 %v590
        %v790 = vunpack.c.l.b16 %v591
        %v791 = vunpack.c.l.b16 %v592
        %v792 = vunpack.c.l.b16 %v593
        %v793 = vunpack.c.l.b16 %v594
        %v794 = vunpack.c.l.b16 %v595
        %v795 = vunpack.c.l.b16 %v596
        %v796 = vunpack.c.l.b16 %v597
        %v797 = vunpack.c.l.b16 %v598
        %v798 = vunpack.c.l.b16 %v599
        %v799 = vunpack.c.l.b16 %v600
        %v800 = vunpack.c.l.b16 %v601
        %v801 = vunpack.c.l.b16 %v602
        %v802 = vunpack.c.l.b16 %v603
        %v803 = vunpack.c.l.b16 %v604
        %v804 = vunpack.c.l.b16 %v605
        %v805 = vunpack.c.l.b16 %v606
        %v806 = vunpack.c.l.b16 %v607
        %v807 = vunpack.c.l.b16 %v608
        %v808 = vunpack.c.l.b16 %v609
        %v809 = vunpack.c.l.b16 %v610
        %v810 = vunpack.c.l.b16 %v611
        %v811 = vunpack.c.l.b16 %v612
        %v812 = vunpack.c.l.b16 %v613
        %v813 = vunpack.c.l.b16 %v614
        %v814 = vunpack.c.l.b16 %v615
        %v815 = vunpack.c.l.b16 %v616
        %v816 = vunpack.c.l.b16 %v617
        %v817 = vunpack.c.l.b16 %v618
        %v818 = vunpack.c.l.b16 %v619
        %v819 = vunpack.c.l.b16 %v620
        %v820 = vunpack.c.l.b16 %v621
        %v821 = vunpack.c.l.b16 %v622
        %v822 = vunpack.c.l.b16 %v623
        %v823 = vunpack.c.l.b16 %v624
        %v824 = vunpack.c.l.b16 %v625
        %v825 = vunpack.c.l.b16 %v626
        %v826 = vunpack.c.l.b16 %v627
        %v827 = vunpack.c.l.b16 %v628
        %v828 = vunpack.c.l.b16 %v629
        %v829 = vunpack.c.l.b16 %v630
        %v830 = vunpack.c.l.b16 %v631
        %v831 = vunpack.c.l.b16 %v632
        %v832 = vunpack.c.l.b16 %v633
        %v833 = vunpack.c.l.b16 %v634
        %v834 = vunpack.c.l.b16 %v635
        %v835 = vunpack.c.l.b16 %v636
        %v836 = vunpack.c.l.b16 %v637
        %v837 = vunpack.c.l.b16 %v638
        %v838 = vunpack.c.l.b16 %v639
        %v839 = vunpack.c.l.b16 %v640
        %v840 = vunpack.c.l.b16 %v641
        %v841 = vunpack.c.l.b16 %v642
        %v842 = vunpack.c.l.b16 %v643
        %v843 = vunpack.c.l.b16 %v644
        %v844 = vunpack.c.l.b16 %v645
        %v845 = vpack.c.b16 %v750, %v749
        %v846 = vpack.c.b16 %v752, %v751
        %v847 = vpack.c.b16 %v754, %v753
        %v848 = vpack.c.b16 %v756, %v755
        %v849 = vpack.c.b16 %v758, %v757
        %v850 = vpack.c.b16 %v760, %v759
        %v851 = vpack.c.b16 %v762, %v761
        %v852 = vpack.c.b16 %v764, %v763
        %v853 = vpack.c.b16 %v766, %v765
        %v854 = vpack.c.b16 %v768, %v767
        %v855 = vpack.c.b16 %v770, %v769
        %v856 = vpack.c.b16 %v772, %v771
        %v857 = vpack.c.b16 %v774, %v773
        %v858 = vpack.c.b16 %v776, %v775
        %v859 = vpack.c.b16 %v778, %v777
        %v860 = vpack.c.b16 %v780, %v779
        %v861 = vpack.c.b16 %v782, %v781
        %v862 = vpack.c.b16 %v784, %v783
        %v863 = vpack.c.b16 %v786, %v785
        %v864 = vpack.c.b16 %v788, %v787
        %v865 = vpack.c.b16 %v790, %v789
        %v866 = vpack.c.b16 %v792, %v791
        %v867 = vpack.c.b16 %v794, %v793
        %v868 = vpack.c.b16 %v796, %v795
        %v869 = vpack.c.b16 %v798, %v797
        %v870 = vpack.c.b16 %v800, %v799
        %v871 = vpack.c.b16 %v802, %v801
        %v872 = vpack.c.b16 %v804, %v803
        %v873 = vpack.c.b16 %v806, %v805
        %v874 = vpack.c.b16 %v808, %v807
        %v875 = vpack.c.b16 %v810, %v809
        %v876 = vpack.c.b16 %v812, %v811
        %v877 = vpack.c.b16 %v814, %v813
        %v878 = vpack.c.b16 %v816, %v815
        %v879 = vpack.c.b16 %v818, %v817
        %v880 = vpack.c.b16 %v820, %v819
        %v881 = vpack.c.b16 %v822, %v821
        %v882 = vpack.c.b16 %v824, %v823
        %v883 = vpack.c.b16 %v826, %v825
        %v884 = vpack.c.b16 %v828, %v827
        %v885 = vpack.c.b16 %v830, %v829
        %v886 = vpack.c.b16 %v832, %v831
        %v887 = vpack.c.b16 %v834, %v833
        %v888 = vpack.c.b16 %v836, %v835
        %v889 = vpack.c.b16 %v838, %v837
        %v890 = vpack.c.b16 %v840, %v839
        %v891 = vpack.c.b16 %v842, %v841
        %v892 = vpack.c.b16 %v844, %v843
        %941 = vmatprep.subr.bf16.mxu0 0
        %942 = vmatpush1.bf16.msra.mxu0 %v852
        %943 = vmatprep.subr.bf16.mxu0 0
        %944 = vmatpush1.bf16.msra.mxu0 %v851
        %945 = vmatprep.subr.bf16.mxu0 0
        %946 = vmatpush1.bf16.msra.mxu0 %v850
        %947 = vmatprep.subr.bf16.mxu0 0
        %948 = vmatpush1.bf16.msra.mxu0 %v849
        %949 = vmatprep.subr.bf16.mxu0 0
        %950 = vmatpush1.bf16.msra.mxu0 %v848
        %951 = vmatprep.subr.bf16.mxu0 0
        %952 = vmatpush1.bf16.msra.mxu0 %v847
        %953 = vmatprep.subr.bf16.mxu0 0
        %954 = vmatpush1.bf16.msra.mxu0 %v846
        %955 = vmatprep.subr.bf16.mxu0 0
        %956 = vmatpush1.bf16.msra.mxu0 %v845
        %957 = vmatprep.subr.bf16.mxu0 0
        %958 = vmatpush2.bf16.msra.mxu0 %v860
        %959 = vmatprep.subr.bf16.mxu0 0
        %960 = vmatpush2.bf16.msra.mxu0 %v859
        %961 = vmatprep.subr.bf16.mxu0 0
        %962 = vmatpush2.bf16.msra.mxu0 %v858
        %963 = vmatprep.subr.bf16.mxu0 0
        %964 = vmatpush2.bf16.msra.mxu0 %v857
        %965 = vmatprep.subr.bf16.mxu0 0
        %966 = vmatpush2.bf16.msra.mxu0 %v856
        %967 = vmatprep.subr.bf16.mxu0 0
        %968 = vmatpush2.bf16.msra.mxu0 %v855
        %969 = vmatprep.subr.bf16.mxu0 0
        %970 = vmatpush2.bf16.msra.mxu0 %v854
        %971 = vmatprep.subr.bf16.mxu0 0
        %972 = vmatpush2.bf16.msra.mxu0 %v853
        %973 = vmatprep.mubr.bf16.mxu0 %v545
        %974 = vmatmul.mubr.bf16.gmra.mxu0 %v544
        %v975 = vpop.f32.mrf.mxu0
        %v976 = vadd.f32 %v651, %v975
        %v977 = vpop.f32.mrf.mxu0
        %v978 = vpop.f32.mrf.mxu0
        %v979 = vpop.f32.mrf.mxu0
        %980 = vdwg.mxu0
        %981 = vmatprep.subr.bf16.mxu0 0
        %982 = vmatpush1.bf16.msra.mxu0 %v868
        %983 = vmatprep.subr.bf16.mxu0 0
        %984 = vmatpush1.bf16.msra.mxu0 %v867
        %985 = vmatprep.subr.bf16.mxu0 0
        %986 = vmatpush1.bf16.msra.mxu0 %v866
        %987 = vmatprep.subr.bf16.mxu0 0
        %988 = vmatpush1.bf16.msra.mxu0 %v865
        %989 = vmatprep.subr.bf16.mxu0 0
        %990 = vmatpush1.bf16.msra.mxu0 %v864
        %991 = vmatprep.subr.bf16.mxu0 0
        %992 = vmatpush1.bf16.msra.mxu0 %v863
        %993 = vmatprep.subr.bf16.mxu0 0
        %994 = vmatpush1.bf16.msra.mxu0 %v862
        %995 = vmatprep.subr.bf16.mxu0 0
        %996 = vmatpush1.bf16.msra.mxu0 %v861
        %997 = vmatprep.subr.bf16.mxu0 0
        %998 = vmatpush2.bf16.msra.mxu0 %v876
        %999 = vmatprep.subr.bf16.mxu0 0
        %1000 = vmatpush2.bf16.msra.mxu0 %v875
        %1001 = vmatprep.subr.bf16.mxu0 0
        %1002 = vmatpush2.bf16.msra.mxu0 %v874
        %1003 = vmatprep.subr.bf16.mxu0 0
        %1004 = vmatpush2.bf16.msra.mxu0 %v873
        %1005 = vmatprep.subr.bf16.mxu0 0
        %1006 = vmatpush2.bf16.msra.mxu0 %v872
        %1007 = vmatprep.subr.bf16.mxu0 0
        %1008 = vmatpush2.bf16.msra.mxu0 %v871
        %1009 = vmatprep.subr.bf16.mxu0 0
        %1010 = vmatpush2.bf16.msra.mxu0 %v870
        %1011 = vmatprep.subr.bf16.mxu0 0
        %1012 = vmatpush2.bf16.msra.mxu0 %v869
        %1013 = vmatprep.mubr.bf16.mxu0 %v547
        %1014 = vmatmul.mubr.bf16.gmra.mxu0 %v546
        %v1015 = vpop.f32.mrf.mxu0
        %v1016 = vadd.f32 %v976, %v1015
        %v1017 = vpop.f32.mrf.mxu0
        %v1018 = vpop.f32.mrf.mxu0
        %v1019 = vpop.f32.mrf.mxu0
        %1020 = vdwg.mxu0
        %1021 = vmatprep.subr.bf16.mxu0 0
        %1022 = vmatpush1.bf16.msra.mxu0 %v884
        %1023 = vmatprep.subr.bf16.mxu0 0
        %1024 = vmatpush1.bf16.msra.mxu0 %v883
        %1025 = vmatprep.subr.bf16.mxu0 0
        %1026 = vmatpush1.bf16.msra.mxu0 %v882
        %1027 = vmatprep.subr.bf16.mxu0 0
        %1028 = vmatpush1.bf16.msra.mxu0 %v881
        %1029 = vmatprep.subr.bf16.mxu0 0
        %1030 = vmatpush1.bf16.msra.mxu0 %v880
        %1031 = vmatprep.subr.bf16.mxu0 0
        %1032 = vmatpush1.bf16.msra.mxu0 %v879
        %1033 = vmatprep.subr.bf16.mxu0 0
        %1034 = vmatpush1.bf16.msra.mxu0 %v878
        %1035 = vmatprep.subr.bf16.mxu0 0
        %1036 = vmatpush1.bf16.msra.mxu0 %v877
        %1037 = vmatprep.subr.bf16.mxu0 0
        %1038 = vmatpush2.bf16.msra.mxu0 %v892
        %1039 = vmatprep.subr.bf16.mxu0 0
        %1040 = vmatpush2.bf16.msra.mxu0 %v891
        %1041 = vmatprep.subr.bf16.mxu0 0
        %1042 = vmatpush2.bf16.msra.mxu0 %v890
        %1043 = vmatprep.subr.bf16.mxu0 0
        %1044 = vmatpush2.bf16.msra.mxu0 %v889
        %1045 = vmatprep.subr.bf16.mxu0 0
        %1046 = vmatpush2.bf16.msra.mxu0 %v888
        %1047 = vmatprep.subr.bf16.mxu0 0
        %1048 = vmatpush2.bf16.msra.mxu0 %v887
        %1049 = vmatprep.subr.bf16.mxu0 0
        %1050 = vmatpush2.bf16.msra.mxu0 %v886
        %1051 = vmatprep.subr.bf16.mxu0 0
        %1052 = vmatpush2.bf16.msra.mxu0 %v885
        %1053 = vmatprep.mubr.bf16.mxu0 %v549
        %1054 = vmatmul.mubr.bf16.gmra.mxu0 %v548
        %v1055 = vpop.f32.mrf.mxu0
        %v1056 = vadd.f32 %v1016, %v1055
        %v1057 = vpop.f32.mrf.mxu0
        %v1058 = vpop.f32.mrf.mxu0
        %v1059 = vpop.f32.mrf.mxu0
        %1060 = vdwg.mxu0
        %v1062 = vcombine.high %v1056, %v1056
        %v1063 = vld [vmem:[%s3] sm:$0x1]
        %v1064 = vrot.slane %v1056, 7
        %v1065 = vrot.slane %v1062, 7
        %vm1068 = vcmask 1040384
        %v1069 = vsel %vm1068, %v1063, %v1064
        %v1070 = vsel %vm1068, %v1063, %v1065
        %v1071 = vld [vmem:[%s4] sm:$0x1f]
        %v1072 = vadd.f32 %v1069, %v1071
        %v1073 = vadd.f32 %v1070, %v1071
        %vm1074 = vcmask 1044480
        %v1075 = vsel %vm1074, %v1072, 0.0
        %v1076 = vsel %vm1074, %v1073, 0.0
        %1077 = vst [vmem:[#allocation2] sm:$0xff] %v1075
        %1078 = vst [vmem:[#allocation2 + $0x8] sm:$0xff] %v1076
      $region80: #{vit_forward.1} parent=75 // pred_fallthru
        _
      %v1079 = vld [vmem:[%s512] sm:$0xff]
      %v1080 = vld [vmem:[%s512 + $0x8] sm:$0xff]
      %v1081 = vld [vmem:[%s512 + $0x10] sm:$0xff]
      %v1082 = vld [vmem:[#allocation2] sm:$0xff]
      %v1083 = vld [vmem:[#allocation2 + $0x8] sm:$0xff]
      %1084 = vadd.xlane.f32.xlu0 %v1082
      %v1085 = vpop.xlane.xlu0 %1084
      %1086 = vadd.xlane.f32.xlu0 %v1083
      %v1087 = vpop.xlane.xlu0 %1086
      %v1088 = vrcp.pop 128.0
      %v1089 = vmul.f32 %v1085, %v1088
      %v1090 = vmul.f32 %v1087, %v1088
      %v1091 = vsub.f32 %v1082, %v1089
      %v1092 = vsub.f32 %v1083, %v1090
      %v1093 = vmul.f32 %v1091, %v1091
      %v1094 = vmul.f32 %v1092, %v1092
      %1095 = vadd.xlane.f32.xlu0 %v1093
      %v1096 = vpop.xlane.xlu0 %1095
      %1097 = vadd.xlane.f32.xlu0 %v1094
      %v1098 = vpop.xlane.xlu0 %1097
      %v1099 = vmul.f32 %v1096, %v1088
      %v1100 = vmul.f32 %v1098, %v1088
      %v1101 = vadd.f32 %v1099, 1e-06
      %v1102 = vadd.f32 %v1100, 1e-06
      %v1103 = vrsqrt.pop %v1101
      %v1104 = vrsqrt.pop %v1102
      %v1105 = vmul.f32 %v1091, %v1103
      %v1106 = vmul.f32 %v1092, %v1104
      %v1107 = vlaneseq
      %v1108 = vshrl.u32 %v1107, 7
      %v1109 = vsub.s32 0, %v1108
      %v1110 = vrot.slane %v1079, %v1109
      %v1111 = vmul.f32 %v1105, %v1110
      %v1112 = vmul.f32 %v1106, %v1110
      %v1113 = vlaneseq
      %v1114 = vshrl.u32 %v1113, 7
      %v1115 = vsub.s32 1, %v1114
      %v1116 = vrot.slane %v1079, %v1115
      %v1117 = vadd.f32 %v1111, %v1116
      %v1118 = vadd.f32 %v1112, %v1116
      %v1119 = vpack.c.bf16 %v1118, %v1117
      %v1120 = vld [vmem:[%s517] sm:$0xff]
      %v1121 = vld [vmem:[%s517 + $0x8] sm:$0xf]
      %v1122 = vld [vmem:[%s517 + $0xc] sm:$0xff]
      %v1123 = vld [vmem:[%s517 + $0x14] sm:$0xf]
      %v1124 = vld [vmem:[%s517 + $0x18] sm:$0xff]
      %v1125 = vld [vmem:[%s517 + $0x20] sm:$0xf]
      %v1126 = vld [vmem:[%s517 + $0x24] sm:$0xff]
      %v1127 = vld [vmem:[%s517 + $0x2c] sm:$0xf]
      %v1128 = vld [vmem:[%s517 + $0x30] sm:$0xff]
      %v1129 = vld [vmem:[%s517 + $0x38] sm:$0xf]
      %v1130 = vld [vmem:[%s517 + $0x3c] sm:$0xff]
      %v1131 = vld [vmem:[%s517 + $0x44] sm:$0xf]
      %v1132 = vld [vmem:[%s517 + $0x48] sm:$0xff]
      %v1133 = vld [vmem:[%s517 + $0x50] sm:$0xf]
      %v1134 = vld [vmem:[%s517 + $0x54] sm:$0xff]
      %v1135 = vld [vmem:[%s517 + $0x5c] sm:$0xf]
      %v1136 = vld [vmem:[%s517 + $0x60] sm:$0xff]
      %v1137 = vld [vmem:[%s517 + $0x68] sm:$0xf]
      %v1138 = vld [vmem:[%s517 + $0x6c] sm:$0xff]
      %v1139 = vld [vmem:[%s517 + $0x74] sm:$0xf]
      %v1140 = vld [vmem:[%s517 + $0x78] sm:$0xff]
      %v1141 = vld [vmem:[%s517 + $0x80] sm:$0xf]
      %v1142 = vld [vmem:[%s517 + $0x84] sm:$0xff]
      %v1143 = vld [vmem:[%s517 + $0x8c] sm:$0xf]
      %v1144 = vld [vmem:[%s517 + $0x90] sm:$0xff]
      %v1145 = vld [vmem:[%s517 + $0x98] sm:$0xf]
      %v1146 = vld [vmem:[%s517 + $0x9c] sm:$0xff]
      %v1147 = vld [vmem:[%s517 + $0xa4] sm:$0xf]
      %v1148 = vld [vmem:[%s517 + $0xa8] sm:$0xff]
      %v1149 = vld [vmem:[%s517 + $0xb0] sm:$0xf]
      %v1150 = vld [vmem:[%s517 + $0xb4] sm:$0xff]
      %v1151 = vld [vmem:[%s517 + $0xbc] sm:$0xf]
      %v1152 = vlaneseq
      %v1153 = vshrl.u32 %v1152, 7
      %v1154 = vsub.s32 6, %v1153
      %v1155 = vrot.slane %v1079, %v1154
      %v1156 = vlaneseq
      %v1157 = vshrl.u32 %v1156, 7
      %v1158 = vsub.s32 6, %v1157
      %v1159 = vrot.slane %v1080, %v1158
      %v1160 = vlaneseq
      %v1161 = vshrl.u32 %v1160, 7
      %v1162 = vsub.s32 6, %v1161
      %v1163 = vrot.slane %v1081, %v1162
      %v1196 = vunpack.c.l.b16 %v1120
      %v1197 = vunpack.c.h.b16 %v1120
      %v1198 = vunpack.c.l.b16 %v1121
      %v1199 = vunpack.c.l.b16 %v1122
      %v1200 = vunpack.c.h.b16 %v1122
      %v1201 = vunpack.c.l.b16 %v1123
      %v1202 = vunpack.c.l.b16 %v1124
      %v1203 = vunpack.c.h.b16 %v1124
      %v1204 = vunpack.c.l.b16 %v1125
      %v1205 = vunpack.c.l.b16 %v1126
      %v1206 = vunpack.c.h.b16 %v1126
      %v1207 = vunpack.c.l.b16 %v1127
      %v1208 = vunpack.c.l.b16 %v1128
      %v1209 = vunpack.c.h.b16 %v1128
      %v1210 = vunpack.c.l.b16 %v1129
      %v1211 = vunpack.c.l.b16 %v1130
      %v1212 = vunpack.c.h.b16 %v1130
      %v1213 = vunpack.c.l.b16 %v1131
      %v1214 = vunpack.c.l.b16 %v1132
      %v1215 = vunpack.c.h.b16 %v1132
      %v1216 = vunpack.c.l.b16 %v1133
      %v1217 = vunpack.c.l.b16 %v1134
      %v1218 = vunpack.c.h.b16 %v1134
      %v1219 = vunpack.c.l.b16 %v1135
      %v1220 = vunpack.c.l.b16 %v1136
      %v1221 = vunpack.c.h.b16 %v1136
      %v1222 = vunpack.c.l.b16 %v1137
      %v1223 = vunpack.c.l.b16 %v1138
      %v1224 = vunpack.c.h.b16 %v1138
      %v1225 = vunpack.c.l.b16 %v1139
      %v1226 = vunpack.c.l.b16 %v1140
      %v1227 = vunpack.c.h.b16 %v1140
      %v1228 = vunpack.c.l.b16 %v1141
      %v1229 = vunpack.c.l.b16 %v1142
      %v1230 = vunpack.c.h.b16 %v1142
      %v1231 = vunpack.c.l.b16 %v1143
      %v1232 = vunpack.c.l.b16 %v1144
      %v1233 = vunpack.c.h.b16 %v1144
      %v1234 = vunpack.c.l.b16 %v1145
      %v1235 = vunpack.c.l.b16 %v1146
      %v1236 = vunpack.c.h.b16 %v1146
      %v1237 = vunpack.c.l.b16 %v1147
      %v1238 = vunpack.c.l.b16 %v1148
      %v1239 = vunpack.c.h.b16 %v1148
      %v1240 = vunpack.c.l.b16 %v1149
      %v1241 = vunpack.c.l.b16 %v1150
      %v1242 = vunpack.c.h.b16 %v1150
      %v1243 = vunpack.c.l.b16 %v1151
      %v1244 = vpack.c.b16 %v1199, %v1196
      %v1245 = vpack.c.b16 %v1200, %v1197
      %v1246 = vpack.c.b16 %v1201, %v1198
      %v1247 = vpack.c.b16 %v1205, %v1202
      %v1248 = vpack.c.b16 %v1206, %v1203
      %v1249 = vpack.c.b16 %v1207, %v1204
      %v1250 = vpack.c.b16 %v1211, %v1208
      %v1251 = vpack.c.b16 %v1212, %v1209
      %v1252 = vpack.c.b16 %v1213, %v1210
      %v1253 = vpack.c.b16 %v1217, %v1214
      %v1254 = vpack.c.b16 %v1218, %v1215
      %v1255 = vpack.c.b16 %v1219, %v1216
      %v1256 = vpack.c.b16 %v1223, %v1220
      %v1257 = vpack.c.b16 %v1224, %v1221
      %v1258 = vpack.c.b16 %v1225, %v1222
      %v1259 = vpack.c.b16 %v1229, %v1226
      %v1260 = vpack.c.b16 %v1230, %v1227
      %v1261 = vpack.c.b16 %v1231, %v1228
      %v1262 = vpack.c.b16 %v1235, %v1232
      %v1263 = vpack.c.b16 %v1236, %v1233
      %v1264 = vpack.c.b16 %v1237, %v1234
      %v1265 = vpack.c.b16 %v1241, %v1238
      %v1266 = vpack.c.b16 %v1242, %v1239
      %v1267 = vpack.c.b16 %v1243, %v1240
      %1292 = vmatprep.subr.bf16.mxu0 %v1266
      %1293 = vmatpush1.bf16.msra.mxu0 %v1265
      %1294 = vmatprep.subr.bf16.mxu0 %v1263
      %1295 = vmatpush1.bf16.msra.mxu0 %v1262
      %1296 = vmatprep.subr.bf16.mxu0 %v1260
      %1297 = vmatpush1.bf16.msra.mxu0 %v1259
      %1298 = vmatprep.subr.bf16.mxu0 %v1257
      %1299 = vmatpush1.bf16.msra.mxu0 %v1256
      %1300 = vmatprep.subr.bf16.mxu0 %v1254
      %1301 = vmatpush1.bf16.msra.mxu0 %v1253
      %1302 = vmatprep.subr.bf16.mxu0 %v1251
      %1303 = vmatpush1.bf16.msra.mxu0 %v1250
      %1304 = vmatprep.subr.bf16.mxu0 %v1248
      %1305 = vmatpush1.bf16.msra.mxu0 %v1247
      %1306 = vmatprep.subr.bf16.mxu0 %v1245
      %1307 = vmatpush1.bf16.msra.mxu0 %v1244
      %1308 = vmatprep.subr.bf16.mxu0 0
      %1309 = vmatpush2.bf16.msra.mxu0 0
      %1310 = vmatprep.subr.bf16.mxu0 0
      %1311 = vmatpush2.bf16.msra.mxu0 0
      %1312 = vmatprep.subr.bf16.mxu0 0
      %1313 = vmatpush2.bf16.msra.mxu0 0
      %1314 = vmatprep.subr.bf16.mxu0 0
      %1315 = vmatpush2.bf16.msra.mxu0 0
      %1316 = vmatprep.subr.bf16.mxu0 0
      %1317 = vmatpush2.bf16.msra.mxu0 0
      %1318 = vmatprep.subr.bf16.mxu0 0
      %1319 = vmatpush2.bf16.msra.mxu0 0
      %1320 = vmatprep.subr.bf16.mxu0 0
      %1321 = vmatpush2.bf16.msra.mxu0 0
      %1322 = vmatprep.subr.bf16.mxu0 0
      %1323 = vmatpush2.bf16.msra.mxu0 0
      %1324 = vmatprep.mubr.bf16.mxu0 0
      %1325 = vmatmul.mubr.bf16.gmra.mxu0 %v1119
      %v1326 = vpop.f32.mrf.mxu0
      %v1327 = vadd.f32 %v1155, %v1326
      %v1328 = vpop.f32.mrf.mxu0
      %v1329 = vadd.f32 %v1159, %v1328
      %v1330 = vpop.f32.mrf.mxu0
      %v1331 = vadd.f32 %v1155, %v1330
      %v1332 = vpop.f32.mrf.mxu0
      %v1333 = vadd.f32 %v1159, %v1332
      %1334 = vdwg.mxu0
      %1335 = vmatprep.subr.bf16.mxu0 0
      %1336 = vmatpush1.bf16.msra.mxu0 %v1267
      %1337 = vmatprep.subr.bf16.mxu0 0
      %1338 = vmatpush1.bf16.msra.mxu0 %v1264
      %1339 = vmatprep.subr.bf16.mxu0 0
      %1340 = vmatpush1.bf16.msra.mxu0 %v1261
      %1341 = vmatprep.subr.bf16.mxu0 0
      %1342 = vmatpush1.bf16.msra.mxu0 %v1258
      %1343 = vmatprep.subr.bf16.mxu0 0
      %1344 = vmatpush1.bf16.msra.mxu0 %v1255
      %1345 = vmatprep.subr.bf16.mxu0 0
      %1346 = vmatpush1.bf16.msra.mxu0 %v1252
      %1347 = vmatprep.subr.bf16.mxu0 0
      %1348 = vmatpush1.bf16.msra.mxu0 %v1249
      %1349 = vmatprep.subr.bf16.mxu0 0
      %1350 = vmatpush1.bf16.msra.mxu0 %v1246
      %1351 = vmatprep.subr.bf16.mxu0 0
      %1352 = vmatpush2.bf16.msra.mxu0 0
      %1353 = vmatprep.subr.bf16.mxu0 0
      %1354 = vmatpush2.bf16.msra.mxu0 0
      %1355 = vmatprep.subr.bf16.mxu0 0
      %1356 = vmatpush2.bf16.msra.mxu0 0
      %1357 = vmatprep.subr.bf16.mxu0 0
      %1358 = vmatpush2.bf16.msra.mxu0 0
      %1359 = vmatprep.subr.bf16.mxu0 0
      %1360 = vmatpush2.bf16.msra.mxu0 0
      %1361 = vmatprep.subr.bf16.mxu0 0
      %1362 = vmatpush2.bf16.msra.mxu0 0
      %1363 = vmatprep.subr.bf16.mxu0 0
      %1364 = vmatpush2.bf16.msra.mxu0 0
      %1365 = vmatprep.subr.bf16.mxu0 0
      %1366 = vmatpush2.bf16.msra.mxu0 0
      %1367 = vmatprep.mubr.bf16.mxu0 0
      %1368 = vmatmul.mubr.bf16.gmra.mxu0 %v1119
      %v1369 = vpop.f32.mrf.mxu0
      %v1370 = vadd.f32 %v1163, %v1369
      %v1371 = vpop.f32.mrf.mxu0
      %v1372 = vpop.f32.mrf.mxu0
      %v1373 = vadd.f32 %v1163, %v1372
      %v1374 = vpop.f32.mrf.mxu0
      %1375 = vdwg.mxu0
      %v1376 = vlaneseq
      %v1377 = vand.u32 %v1376, 127
      %vm1378 = vcmp.lt.s32.totalorder %v1377, 5
      %v1379 = vsel %vm1378, 0.0, -1e+30
      %v1380 = vld [vmem:[%s522] sm:$0xf]
      %v1381 = vld [vmem:[%s522 + $0x4] sm:$0xf]
      %v1382 = vld [vmem:[%s522 + $0x8] sm:$0xf]
      %v1383 = vld [vmem:[%s522 + $0xc] sm:$0xf]
      %v1384 = vld [vmem:[%s522 + $0x10] sm:$0xf]
      %v1385 = vld [vmem:[%s522 + $0x14] sm:$0xf]
      %v1386 = vld [vmem:[%s522 + $0x18] sm:$0xf]
      %v1387 = vld [vmem:[%s522 + $0x1c] sm:$0xf]
      %v1388 = vld [vmem:[%s522 + $0x20] sm:$0xf]
      %v1389 = vld [vmem:[%s522 + $0x24] sm:$0xf]
      %v1390 = vld [vmem:[%s522 + $0x28] sm:$0xf]
      %v1391 = vld [vmem:[%s522 + $0x2c] sm:$0xf]
      %v1392 = vld [vmem:[%s522 + $0x30] sm:$0xf]
      %v1393 = vld [vmem:[%s522 + $0x34] sm:$0xf]
      %v1394 = vld [vmem:[%s522 + $0x38] sm:$0xf]
      %v1395 = vld [vmem:[%s522 + $0x3c] sm:$0xf]
      %vm1396 = vcmask 261120
      %v1398 = vsel %vm1396, %v1327, 0
      %v1401 = vsel %vm1396, %v1329, 0
      %1403 = vmatprep.subr.mxu0 0.0
      %1404 = vmatpush1.xpose.msra.mxu0 0.0
      %1405 = vmatprep.subr.mxu0 0.0
      %1406 = vmatpush1.xpose.msra.mxu0 0.0
      %1407 = vmatprep.subr.mxu0 0.0
      %1408 = vmatpush1.xpose.msra.mxu0 0.0
      %1409 = vmatprep.subr.mxu0 0.0
      %1410 = vmatpush1.xpose.msra.mxu0 0.0
      %1411 = vmatprep.subr.mxu0 0.0
      %1412 = vmatpush1.xpose.msra.mxu0 0.0
      %1413 = vmatprep.subr.mxu0 0.0
      %1414 = vmatpush1.xpose.msra.mxu0 0.0
      %1415 = vmatprep.subr.mxu0 0.0
      %1416 = vmatpush1.xpose.msra.mxu0 0.0
      %1417 = vmatprep.subr.mxu0 0.0
      %1418 = vmatpush1.xpose.msra.mxu0 0.0
      %1419 = vmatprep.subr.mxu0 0.0
      %1420 = vmatpush1.xpose.msra.mxu0 0.0
      %1421 = vmatprep.subr.mxu0 0.0
      %1422 = vmatpush1.xpose.msra.mxu0 0.0
      %1423 = vmatprep.subr.mxu0 0.0
      %1424 = vmatpush1.xpose.msra.mxu0 0.0
      %1425 = vmatprep.subr.mxu0 0.0
      %1426 = vmatpush1.xpose.msra.mxu0 0.0
      %1427 = vmatprep.subr.mxu0 0.0
      %1428 = vmatpush1.xpose.msra.mxu0 0.0
      %1429 = vmatprep.subr.mxu0 0.0
      %1430 = vmatpush1.xpose.msra.mxu0 0.0
      %1431 = vmatprep.subr.mxu0 0.0
      %1432 = vmatpush1.xpose.msra.mxu0 0.0
      %1433 = vmatprep.subr.mxu0 0.0
      %1434 = vmatpush1.xpose.msra.mxu0 %v1401
      %1435 = vmatprep.subr.mxu0 0.0
      %1436 = vmatpush2.xpose.msra.mxu0 0.0
      %1437 = vmatprep.subr.mxu0 0.0
      %1438 = vmatpush2.xpose.msra.mxu0 0.0
      %1439 = vmatprep.subr.mxu0 0.0
      %1440 = vmatpush2.xpose.msra.mxu0 0.0
      %1441 = vmatprep.subr.mxu0 0.0
      %1442 = vmatpush2.xpose.msra.mxu0 0.0
      %1443 = vmatprep.subr.mxu0 0.0
      %1444 = vmatpush2.xpose.msra.mxu0 0.0
      %1445 = vmatprep.subr.mxu0 0.0
      %1446 = vmatpush2.xpose.msra.mxu0 0.0
      %1447 = vmatprep.subr.mxu0 0.0
      %1448 = vmatpush2.xpose.msra.mxu0 0.0
      %1449 = vmatprep.subr.mxu0 0.0
      %1450 = vmatpush2.xpose.msra.mxu0 0.0
      %1451 = vmatprep.subr.mxu0 0.0
      %1452 = vmatpush2.xpose.msra.mxu0 0.0
      %1453 = vmatprep.subr.mxu0 0.0
      %1454 = vmatpush2.xpose.msra.mxu0 0.0
      %1455 = vmatprep.subr.mxu0 0.0
      %1456 = vmatpush2.xpose.msra.mxu0 0.0
      %1457 = vmatprep.subr.mxu0 0.0
      %1458 = vmatpush2.xpose.msra.mxu0 0.0
      %1459 = vmatprep.subr.mxu0 0.0
      %1460 = vmatpush2.xpose.msra.mxu0 0.0
      %1461 = vmatprep.subr.mxu0 0.0
      %1462 = vmatpush2.xpose.msra.mxu0 0.0
      %1463 = vmatprep.subr.mxu0 0.0
      %1464 = vmatpush2.xpose.msra.mxu0 0.0
      %1465 = vmatprep.subr.mxu0 0.0
      %1466 = vmatpush2.xpose.msra.mxu0 0.0
      %1467 = vmatprep.mubr.f32.mxu0 0.0
      %1468 = vmatmul.mubr.f32.gmra.mxu0 %v1398
      %v1469 = vpop.f32.mrf.mxu0
      %v1470 = vadd.f32 %v1379, %v1469
      %v1471 = vpop.f32.mrf.mxu0
      %1472 = vdwg.mxu0
      %v1474 = vsel %vm1396, %v1331, 0
      %v1477 = vsel %vm1396, %v1333, 0
      %1479 = vmatprep.subr.mxu0 0.0
      %1480 = vmatpush1.xpose.msra.mxu0 0.0
      %1481 = vmatprep.subr.mxu0 0.0
      %1482 = vmatpush1.xpose.msra.mxu0 0.0
      %1483 = vmatprep.subr.mxu0 0.0
      %1484 = vmatpush1.xpose.msra.mxu0 0.0
      %1485 = vmatprep.subr.mxu0 0.0
      %1486 = vmatpush1.xpose.msra.mxu0 0.0
      %1487 = vmatprep.subr.mxu0 0.0
      %1488 = vmatpush1.xpose.msra.mxu0 0.0
      %1489 = vmatprep.subr.mxu0 0.0
      %1490 = vmatpush1.xpose.msra.mxu0 0.0
      %1491 = vmatprep.subr.mxu0 0.0
      %1492 = vmatpush1.xpose.msra.mxu0 0.0
      %1493 = vmatprep.subr.mxu0 0.0
      %1494 = vmatpush1.xpose.msra.mxu0 0.0
      %1495 = vmatprep.subr.mxu0 0.0
      %1496 = vmatpush1.xpose.msra.mxu0 0.0
      %1497 = vmatprep.subr.mxu0 0.0
      %1498 = vmatpush1.xpose.msra.mxu0 0.0
      %1499 = vmatprep.subr.mxu0 0.0
      %1500 = vmatpush1.xpose.msra.mxu0 0.0
      %1501 = vmatprep.subr.mxu0 0.0
      %1502 = vmatpush1.xpose.msra.mxu0 0.0
      %1503 = vmatprep.subr.mxu0 0.0
      %1504 = vmatpush1.xpose.msra.mxu0 0.0
      %1505 = vmatprep.subr.mxu0 0.0
      %1506 = vmatpush1.xpose.msra.mxu0 0.0
      %1507 = vmatprep.subr.mxu0 0.0
      %1508 = vmatpush1.xpose.msra.mxu0 0.0
      %1509 = vmatprep.subr.mxu0 0.0
      %1510 = vmatpush1.xpose.msra.mxu0 %v1477
      %1511 = vmatprep.subr.mxu0 0.0
      %1512 = vmatpush2.xpose.msra.mxu0 0.0
      %1513 = vmatprep.subr.mxu0 0.0
      %1514 = vmatpush2.xpose.msra.mxu0 0.0
      %1515 = vmatprep.subr.mxu0 0.0
      %1516 = vmatpush2.xpose.msra.mxu0 0.0
      %1517 = vmatprep.subr.mxu0 0.0
      %1518 = vmatpush2.xpose.msra.mxu0 0.0
      %1519 = vmatprep.subr.mxu0 0.0
      %1520 = vmatpush2.xpose.msra.mxu0 0.0
      %1521 = vmatprep.subr.mxu0 0.0
      %1522 = vmatpush2.xpose.msra.mxu0 0.0
      %1523 = vmatprep.subr.mxu0 0.0
      %1524 = vmatpush2.xpose.msra.mxu0 0.0
      %1525 = vmatprep.subr.mxu0 0.0
      %1526 = vmatpush2.xpose.msra.mxu0 0.0
      %1527 = vmatprep.subr.mxu0 0.0
      %1528 = vmatpush2.xpose.msra.mxu0 0.0
      %1529 = vmatprep.subr.mxu0 0.0
      %1530 = vmatpush2.xpose.msra.mxu0 0.0
      %1531 = vmatprep.subr.mxu0 0.0
      %1532 = vmatpush2.xpose.msra.mxu0 0.0
      %1533 = vmatprep.subr.mxu0 0.0
      %1534 = vmatpush2.xpose.msra.mxu0 0.0
      %1535 = vmatprep.subr.mxu0 0.0
      %1536 = vmatpush2.xpose.msra.mxu0 0.0
      %1537 = vmatprep.subr.mxu0 0.0
      %1538 = vmatpush2.xpose.msra.mxu0 0.0
      %1539 = vmatprep.subr.mxu0 0.0
      %1540 = vmatpush2.xpose.msra.mxu0 0.0
      %1541 = vmatprep.subr.mxu0 0.0
      %1542 = vmatpush2.xpose.msra.mxu0 0.0
      %1543 = vmatprep.mubr.f32.mxu0 0.0
      %1544 = vmatmul.mubr.f32.gmra.mxu0 %v1474
      %v1545 = vpop.f32.mrf.mxu0
      %v1546 = vadd.f32 %v1379, %v1545
      %v1547 = vpop.f32.mrf.mxu0
      %1548 = vdwg.mxu0
      %vm1549 = vcmask 64512
      %v1550 = vsel %vm1549, %v1470, -inf
      %1551 = vmax.xlane.f32.xlu0 %v1550
      %v1552 = vpop.xlane.xlu0 %1551
      %v1553 = vsel %vm1549, %v1546, -inf
      %1554 = vmax.xlane.f32.xlu0 %v1553
      %v1555 = vpop.xlane.xlu0 %1554
      %v1556 = vsub.f32 %v1470, %v1552
      %v1557 = vsub.f32 %v1546, %v1555
      %v1558 = vmul.f32 %v1556, 1.442695
      %v1559 = vpow.pop %v1558
      %v1560 = vmul.f32 %v1557, 1.442695
      %v1561 = vpow.pop %v1560
      %v1562 = vsel %vm1549, %v1559, 0.0
      %1563 = vadd.xlane.f32.xlu0 %v1562
      %v1564 = vpop.xlane.xlu0 %1563
      %v1565 = vsel %vm1549, %v1561, 0.0
      %1566 = vadd.xlane.f32.xlu0 %v1565
      %v1567 = vpop.xlane.xlu0 %1566
      %v1568 = vrcp.pop %v1564
      %v1569 = vrcp.pop %v1567
      %v1570 = vmul.f32 %v1559, %v1568
      %v1571 = vmul.f32 %v1561, %v1569
      %v1573 = vsel %vm1549, %v1570, 0
      %1575 = vmatprep.subr.mxu0 0.0
      %1576 = vmatpush1.msra.mxu0 0.0
      %1577 = vmatprep.subr.mxu0 0.0
      %1578 = vmatpush1.msra.mxu0 0.0
      %1579 = vmatprep.subr.mxu0 0.0
      %1580 = vmatpush1.msra.mxu0 0.0
      %1581 = vmatprep.subr.mxu0 0.0
      %1582 = vmatpush1.msra.mxu0 0.0
      %1583 = vmatprep.subr.mxu0 0.0
      %1584 = vmatpush1.msra.mxu0 0.0
      %1585 = vmatprep.subr.mxu0 0.0
      %1586 = vmatpush1.msra.mxu0 0.0
      %1587 = vmatprep.subr.mxu0 0.0
      %1588 = vmatpush1.msra.mxu0 0.0
      %1589 = vmatprep.subr.mxu0 0.0
      %1590 = vmatpush1.msra.mxu0 0.0
      %1591 = vmatprep.subr.mxu0 0.0
      %1592 = vmatpush1.msra.mxu0 0.0
      %1593 = vmatprep.subr.mxu0 0.0
      %1594 = vmatpush1.msra.mxu0 0.0
      %1595 = vmatprep.subr.mxu0 0.0
      %1596 = vmatpush1.msra.mxu0 0.0
      %1597 = vmatprep.subr.mxu0 0.0
      %1598 = vmatpush1.msra.mxu0 0.0
      %1599 = vmatprep.subr.mxu0 0.0
      %1600 = vmatpush1.msra.mxu0 0.0
      %1601 = vmatprep.subr.mxu0 0.0
      %1602 = vmatpush1.msra.mxu0 0.0
      %1603 = vmatprep.subr.mxu0 0.0
      %1604 = vmatpush1.msra.mxu0 0.0
      %1605 = vmatprep.subr.mxu0 0.0
      %1606 = vmatpush1.msra.mxu0 %v1370
      %1607 = vmatprep.subr.mxu0 0.0
      %1608 = vmatpush2.msra.mxu0 0.0
      %1609 = vmatprep.subr.mxu0 0.0
      %1610 = vmatpush2.msra.mxu0 0.0
      %1611 = vmatprep.subr.mxu0 0.0
      %1612 = vmatpush2.msra.mxu0 0.0
      %1613 = vmatprep.subr.mxu0 0.0
      %1614 = vmatpush2.msra.mxu0 0.0
      %1615 = vmatprep.subr.mxu0 0.0
      %1616 = vmatpush2.msra.mxu0 0.0
      %1617 = vmatprep.subr.mxu0 0.0
      %1618 = vmatpush2.msra.mxu0 0.0
      %1619 = vmatprep.subr.mxu0 0.0
      %1620 = vmatpush2.msra.mxu0 0.0
      %1621 = vmatprep.subr.mxu0 0.0
      %1622 = vmatpush2.msra.mxu0 0.0
      %1623 = vmatprep.subr.mxu0 0.0
      %1624 = vmatpush2.msra.mxu0 0.0
      %1625 = vmatprep.subr.mxu0 0.0
      %1626 = vmatpush2.msra.mxu0 0.0
      %1627 = vmatprep.subr.mxu0 0.0
      %1628 = vmatpush2.msra.mxu0 0.0
      %1629 = vmatprep.subr.mxu0 0.0
      %1630 = vmatpush2.msra.mxu0 0.0
      %1631 = vmatprep.subr.mxu0 0.0
      %1632 = vmatpush2.msra.mxu0 0.0
      %1633 = vmatprep.subr.mxu0 0.0
      %1634 = vmatpush2.msra.mxu0 0.0
      %1635 = vmatprep.subr.mxu0 0.0
      %1636 = vmatpush2.msra.mxu0 0.0
      %1637 = vmatprep.subr.mxu0 0.0
      %1638 = vmatpush2.msra.mxu0 0.0
      %1639 = vmatprep.mubr.f32.mxu0 0.0
      %1640 = vmatmul.mubr.f32.gmra.mxu0 %v1573
      %v1641 = vpop.f32.mrf.mxu0
      %v1642 = vadd.f32 0.0, %v1641
      %v1643 = vpop.f32.mrf.mxu0
      %1644 = vdwg.mxu0
      %v1646 = vsel %vm1549, %v1571, 0
      %1648 = vmatprep.subr.mxu0 0.0
      %1649 = vmatpush1.msra.mxu0 0.0
      %1650 = vmatprep.subr.mxu0 0.0
      %1651 = vmatpush1.msra.mxu0 0.0
      %1652 = vmatprep.subr.mxu0 0.0
      %1653 = vmatpush1.msra.mxu0 0.0
      %1654 = vmatprep.subr.mxu0 0.0
      %1655 = vmatpush1.msra.mxu0 0.0
      %1656 = vmatprep.subr.mxu0 0.0
      %1657 = vmatpush1.msra.mxu0 0.0
      %1658 = vmatprep.subr.mxu0 0.0
      %1659 = vmatpush1.msra.mxu0 0.0
      %1660 = vmatprep.subr.mxu0 0.0
      %1661 = vmatpush1.msra.mxu0 0.0
      %1662 = vmatprep.subr.mxu0 0.0
      %1663 = vmatpush1.msra.mxu0 0.0
      %1664 = vmatprep.subr.mxu0 0.0
      %1665 = vmatpush1.msra.mxu0 0.0
      %1666 = vmatprep.subr.mxu0 0.0
      %1667 = vmatpush1.msra.mxu0 0.0
      %1668 = vmatprep.subr.mxu0 0.0
      %1669 = vmatpush1.msra.mxu0 0.0
      %1670 = vmatprep.subr.mxu0 0.0
      %1671 = vmatpush1.msra.mxu0 0.0
      %1672 = vmatprep.subr.mxu0 0.0
      %1673 = vmatpush1.msra.mxu0 0.0
      %1674 = vmatprep.subr.mxu0 0.0
      %1675 = vmatpush1.msra.mxu0 0.0
      %1676 = vmatprep.subr.mxu0 0.0
      %1677 = vmatpush1.msra.mxu0 0.0
      %1678 = vmatprep.subr.mxu0 0.0
      %1679 = vmatpush1.msra.mxu0 %v1373
      %1680 = vmatprep.subr.mxu0 0.0
      %1681 = vmatpush2.msra.mxu0 0.0
      %1682 = vmatprep.subr.mxu0 0.0
      %1683 = vmatpush2.msra.mxu0 0.0
      %1684 = vmatprep.subr.mxu0 0.0
      %1685 = vmatpush2.msra.mxu0 0.0
      %1686 = vmatprep.subr.mxu0 0.0
      %1687 = vmatpush2.msra.mxu0 0.0
      %1688 = vmatprep.subr.mxu0 0.0
      %1689 = vmatpush2.msra.mxu0 0.0
      %1690 = vmatprep.subr.mxu0 0.0
      %1691 = vmatpush2.msra.mxu0 0.0
      %1692 = vmatprep.subr.mxu0 0.0
      %1693 = vmatpush2.msra.mxu0 0.0
      %1694 = vmatprep.subr.mxu0 0.0
      %1695 = vmatpush2.msra.mxu0 0.0
      %1696 = vmatprep.subr.mxu0 0.0
      %1697 = vmatpush2.msra.mxu0 0.0
      %1698 = vmatprep.subr.mxu0 0.0
      %1699 = vmatpush2.msra.mxu0 0.0
      %1700 = vmatprep.subr.mxu0 0.0
      %1701 = vmatpush2.msra.mxu0 0.0
      %1702 = vmatprep.subr.mxu0 0.0
      %1703 = vmatpush2.msra.mxu0 0.0
      %1704 = vmatprep.subr.mxu0 0.0
      %1705 = vmatpush2.msra.mxu0 0.0
      %1706 = vmatprep.subr.mxu0 0.0
      %1707 = vmatpush2.msra.mxu0 0.0
      %1708 = vmatprep.subr.mxu0 0.0
      %1709 = vmatpush2.msra.mxu0 0.0
      %1710 = vmatprep.subr.mxu0 0.0
      %1711 = vmatpush2.msra.mxu0 0.0
      %1712 = vmatprep.mubr.f32.mxu0 0.0
      %1713 = vmatmul.mubr.f32.gmra.mxu0 %v1646
      %v1714 = vpop.f32.mrf.mxu0
      %v1715 = vadd.f32 0.0, %v1714
      %v1716 = vpop.f32.mrf.mxu0
      %1717 = vdwg.mxu0
      %v1718 = vpack.c.bf16 %v1715, %v1642
      %1719 = vrot.lane.b32.xlu0 %v1327, 96
      %v1720 = vpop.permute.xlu0 %1719
      %1721 = vrot.lane.b32.xlu0 %v1329, 96
      %v1722 = vpop.permute.xlu0 %1721
      %v1723 = vsel %vm1396, %v1720, 0
      %v1725 = vsel %vm1396, %v1722, 0
      %1727 = vmatprep.subr.mxu0 0.0
      %1728 = vmatpush1.xpose.msra.mxu0 0.0
      %1729 = vmatprep.subr.mxu0 0.0
      %1730 = vmatpush1.xpose.msra.mxu0 0.0
      %1731 = vmatprep.subr.mxu0 0.0
      %1732 = vmatpush1.xpose.msra.mxu0 0.0
      %1733 = vmatprep.subr.mxu0 0.0
      %1734 = vmatpush1.xpose.msra.mxu0 0.0
      %1735 = vmatprep.subr.mxu0 0.0
      %1736 = vmatpush1.xpose.msra.mxu0 0.0
      %1737 = vmatprep.subr.mxu0 0.0
      %1738 = vmatpush1.xpose.msra.mxu0 0.0
      %1739 = vmatprep.subr.mxu0 0.0
      %1740 = vmatpush1.xpose.msra.mxu0 0.0
      %1741 = vmatprep.subr.mxu0 0.0
      %1742 = vmatpush1.xpose.msra.mxu0 0.0
      %1743 = vmatprep.subr.mxu0 0.0
      %1744 = vmatpush1.xpose.msra.mxu0 0.0
      %1745 = vmatprep.subr.mxu0 0.0
      %1746 = vmatpush1.xpose.msra.mxu0 0.0
      %1747 = vmatprep.subr.mxu0 0.0
      %1748 = vmatpush1.xpose.msra.mxu0 0.0
      %1749 = vmatprep.subr.mxu0 0.0
      %1750 = vmatpush1.xpose.msra.mxu0 0.0
      %1751 = vmatprep.subr.mxu0 0.0
      %1752 = vmatpush1.xpose.msra.mxu0 0.0
      %1753 = vmatprep.subr.mxu0 0.0
      %1754 = vmatpush1.xpose.msra.mxu0 0.0
      %1755 = vmatprep.subr.mxu0 0.0
      %1756 = vmatpush1.xpose.msra.mxu0 0.0
      %1757 = vmatprep.subr.mxu0 0.0
      %1758 = vmatpush1.xpose.msra.mxu0 %v1725
      %1759 = vmatprep.subr.mxu0 0.0
      %1760 = vmatpush2.xpose.msra.mxu0 0.0
      %1761 = vmatprep.subr.mxu0 0.0
      %1762 = vmatpush2.xpose.msra.mxu0 0.0
      %1763 = vmatprep.subr.mxu0 0.0
      %1764 = vmatpush2.xpose.msra.mxu0 0.0
      %1765 = vmatprep.subr.mxu0 0.0
      %1766 = vmatpush2.xpose.msra.mxu0 0.0
      %1767 = vmatprep.subr.mxu0 0.0
      %1768 = vmatpush2.xpose.msra.mxu0 0.0
      %1769 = vmatprep.subr.mxu0 0.0
      %1770 = vmatpush2.xpose.msra.mxu0 0.0
      %1771 = vmatprep.subr.mxu0 0.0
      %1772 = vmatpush2.xpose.msra.mxu0 0.0
      %1773 = vmatprep.subr.mxu0 0.0
      %1774 = vmatpush2.xpose.msra.mxu0 0.0
      %1775 = vmatprep.subr.mxu0 0.0
      %1776 = vmatpush2.xpose.msra.mxu0 0.0
      %1777 = vmatprep.subr.mxu0 0.0
      %1778 = vmatpush2.xpose.msra.mxu0 0.0
      %1779 = vmatprep.subr.mxu0 0.0
      %1780 = vmatpush2.xpose.msra.mxu0 0.0
      %1781 = vmatprep.subr.mxu0 0.0
      %1782 = vmatpush2.xpose.msra.mxu0 0.0
      %1783 = vmatprep.subr.mxu0 0.0
      %1784 = vmatpush2.xpose.msra.mxu0 0.0
      %1785 = vmatprep.subr.mxu0 0.0
      %1786 = vmatpush2.xpose.msra.mxu0 0.0
      %1787 = vmatprep.subr.mxu0 0.0
      %1788 = vmatpush2.xpose.msra.mxu0 0.0
      %1789 = vmatprep.subr.mxu0 0.0
      %1790 = vmatpush2.xpose.msra.mxu0 0.0
      %1791 = vmatprep.mubr.f32.mxu0 0.0
      %1792 = vmatmul.mubr.f32.gmra.mxu0 %v1723
      %v1793 = vpop.f32.mrf.mxu0
      %v1794 = vadd.f32 %v1379, %v1793
      %v1795 = vpop.f32.mrf.mxu0
      %1796 = vdwg.mxu0
      %1797 = vrot.lane.b32.xlu0 %v1331, 96
      %v1798 = vpop.permute.xlu0 %1797
      %1799 = vrot.lane.b32.xlu0 %v1333, 96
      %v1800 = vpop.permute.xlu0 %1799
      %v1801 = vsel %vm1396, %v1798, 0
      %v1803 = vsel %vm1396, %v1800, 0
      %1805 = vmatprep.subr.mxu0 0.0
      %1806 = vmatpush1.xpose.msra.mxu0 0.0
      %1807 = vmatprep.subr.mxu0 0.0
      %1808 = vmatpush1.xpose.msra.mxu0 0.0
      %1809 = vmatprep.subr.mxu0 0.0
      %1810 = vmatpush1.xpose.msra.mxu0 0.0
      %1811 = vmatprep.subr.mxu0 0.0
      %1812 = vmatpush1.xpose.msra.mxu0 0.0
      %1813 = vmatprep.subr.mxu0 0.0
      %1814 = vmatpush1.xpose.msra.mxu0 0.0
      %1815 = vmatprep.subr.mxu0 0.0
      %1816 = vmatpush1.xpose.msra.mxu0 0.0
      %1817 = vmatprep.subr.mxu0 0.0
      %1818 = vmatpush1.xpose.msra.mxu0 0.0
      %1819 = vmatprep.subr.mxu0 0.0
      %1820 = vmatpush1.xpose.msra.mxu0 0.0
      %1821 = vmatprep.subr.mxu0 0.0
      %1822 = vmatpush1.xpose.msra.mxu0 0.0
      %1823 = vmatprep.subr.mxu0 0.0
      %1824 = vmatpush1.xpose.msra.mxu0 0.0
      %1825 = vmatprep.subr.mxu0 0.0
      %1826 = vmatpush1.xpose.msra.mxu0 0.0
      %1827 = vmatprep.subr.mxu0 0.0
      %1828 = vmatpush1.xpose.msra.mxu0 0.0
      %1829 = vmatprep.subr.mxu0 0.0
      %1830 = vmatpush1.xpose.msra.mxu0 0.0
      %1831 = vmatprep.subr.mxu0 0.0
      %1832 = vmatpush1.xpose.msra.mxu0 0.0
      %1833 = vmatprep.subr.mxu0 0.0
      %1834 = vmatpush1.xpose.msra.mxu0 0.0
      %1835 = vmatprep.subr.mxu0 0.0
      %1836 = vmatpush1.xpose.msra.mxu0 %v1803
      %1837 = vmatprep.subr.mxu0 0.0
      %1838 = vmatpush2.xpose.msra.mxu0 0.0
      %1839 = vmatprep.subr.mxu0 0.0
      %1840 = vmatpush2.xpose.msra.mxu0 0.0
      %1841 = vmatprep.subr.mxu0 0.0
      %1842 = vmatpush2.xpose.msra.mxu0 0.0
      %1843 = vmatprep.subr.mxu0 0.0
      %1844 = vmatpush2.xpose.msra.mxu0 0.0
      %1845 = vmatprep.subr.mxu0 0.0
      %1846 = vmatpush2.xpose.msra.mxu0 0.0
      %1847 = vmatprep.subr.mxu0 0.0
      %1848 = vmatpush2.xpose.msra.mxu0 0.0
      %1849 = vmatprep.subr.mxu0 0.0
      %1850 = vmatpush2.xpose.msra.mxu0 0.0
      %1851 = vmatprep.subr.mxu0 0.0
      %1852 = vmatpush2.xpose.msra.mxu0 0.0
      %1853 = vmatprep.subr.mxu0 0.0
      %1854 = vmatpush2.xpose.msra.mxu0 0.0
      %1855 = vmatprep.subr.mxu0 0.0
      %1856 = vmatpush2.xpose.msra.mxu0 0.0
      %1857 = vmatprep.subr.mxu0 0.0
      %1858 = vmatpush2.xpose.msra.mxu0 0.0
      %1859 = vmatprep.subr.mxu0 0.0
      %1860 = vmatpush2.xpose.msra.mxu0 0.0
      %1861 = vmatprep.subr.mxu0 0.0
      %1862 = vmatpush2.xpose.msra.mxu0 0.0
      %1863 = vmatprep.subr.mxu0 0.0
      %1864 = vmatpush2.xpose.msra.mxu0 0.0
      %1865 = vmatprep.subr.mxu0 0.0
      %1866 = vmatpush2.xpose.msra.mxu0 0.0
      %1867 = vmatprep.subr.mxu0 0.0
      %1868 = vmatpush2.xpose.msra.mxu0 0.0
      %1869 = vmatprep.mubr.f32.mxu0 0.0
      %1870 = vmatmul.mubr.f32.gmra.mxu0 %v1801
      %v1871 = vpop.f32.mrf.mxu0
      %v1872 = vadd.f32 %v1379, %v1871
      %v1873 = vpop.f32.mrf.mxu0
      %1874 = vdwg.mxu0
      %v1875 = vsel %vm1549, %v1794, -inf
      %1876 = vmax.xlane.f32.xlu0 %v1875
      %v1877 = vpop.xlane.xlu0 %1876
      %v1878 = vsel %vm1549, %v1872, -inf
      %1879 = vmax.xlane.f32.xlu0 %v1878
      %v1880 = vpop.xlane.xlu0 %1879
      %v1881 = vsub.f32 %v1794, %v1877
      %v1882 = vsub.f32 %v1872, %v1880
      %v1883 = vmul.f32 %v1881, 1.442695
      %v1884 = vpow.pop %v1883
      %v1885 = vmul.f32 %v1882, 1.442695
      %v1886 = vpow.pop %v1885
      %v1887 = vsel %vm1549, %v1884, 0.0
      %1888 = vadd.xlane.f32.xlu0 %v1887
      %v1889 = vpop.xlane.xlu0 %1888
      %v1890 = vsel %vm1549, %v1886, 0.0
      %1891 = vadd.xlane.f32.xlu0 %v1890
      %v1892 = vpop.xlane.xlu0 %1891
      %v1893 = vrcp.pop %v1889
      %v1894 = vrcp.pop %v1892
      %v1895 = vmul.f32 %v1884, %v1893
      %v1896 = vmul.f32 %v1886, %v1894
      %1898 = vrot.lane.b32.xlu0 %v1370, 96
      %v1899 = vpop.permute.xlu0 %1898
      %v1902 = vsel %vm1549, %v1895, 0
      %1904 = vmatprep.subr.mxu0 0.0
      %1905 = vmatpush1.msra.mxu0 0.0
      %1906 = vmatprep.subr.mxu0 0.0
      %1907 = vmatpush1.msra.mxu0 0.0
      %1908 = vmatprep.subr.mxu0 0.0
      %1909 = vmatpush1.msra.mxu0 0.0
      %1910 = vmatprep.subr.mxu0 0.0
      %1911 = vmatpush1.msra.mxu0 0.0
      %1912 = vmatprep.subr.mxu0 0.0
      %1913 = vmatpush1.msra.mxu0 0.0
      %1914 = vmatprep.subr.mxu0 0.0
      %1915 = vmatpush1.msra.mxu0 0.0
      %1916 = vmatprep.subr.mxu0 0.0
      %1917 = vmatpush1.msra.mxu0 0.0
      %1918 = vmatprep.subr.mxu0 0.0
      %1919 = vmatpush1.msra.mxu0 0.0
      %1920 = vmatprep.subr.mxu0 0.0
      %1921 = vmatpush1.msra.mxu0 0.0
      %1922 = vmatprep.subr.mxu0 0.0
      %1923 = vmatpush1.msra.mxu0 0.0
      %1924 = vmatprep.subr.mxu0 0.0
      %1925 = vmatpush1.msra.mxu0 0.0
      %1926 = vmatprep.subr.mxu0 0.0
      %1927 = vmatpush1.msra.mxu0 0.0
      %1928 = vmatprep.subr.mxu0 0.0
      %1929 = vmatpush1.msra.mxu0 0.0
      %1930 = vmatprep.subr.mxu0 0.0
      %1931 = vmatpush1.msra.mxu0 0.0
      %1932 = vmatprep.subr.mxu0 0.0
      %1933 = vmatpush1.msra.mxu0 0.0
      %1934 = vmatprep.subr.mxu0 0.0
      %1935 = vmatpush1.msra.mxu0 %v1899
      %1936 = vmatprep.subr.mxu0 0.0
      %1937 = vmatpush2.msra.mxu0 0.0
      %1938 = vmatprep.subr.mxu0 0.0
      %1939 = vmatpush2.msra.mxu0 0.0
      %1940 = vmatprep.subr.mxu0 0.0
      %1941 = vmatpush2.msra.mxu0 0.0
      %1942 = vmatprep.subr.mxu0 0.0
      %1943 = vmatpush2.msra.mxu0 0.0
      %1944 = vmatprep.subr.mxu0 0.0
      %1945 = vmatpush2.msra.mxu0 0.0
      %1946 = vmatprep.subr.mxu0 0.0
      %1947 = vmatpush2.msra.mxu0 0.0
      %1948 = vmatprep.subr.mxu0 0.0
      %1949 = vmatpush2.msra.mxu0 0.0
      %1950 = vmatprep.subr.mxu0 0.0
      %1951 = vmatpush2.msra.mxu0 0.0
      %1952 = vmatprep.subr.mxu0 0.0
      %1953 = vmatpush2.msra.mxu0 0.0
      %1954 = vmatprep.subr.mxu0 0.0
      %1955 = vmatpush2.msra.mxu0 0.0
      %1956 = vmatprep.subr.mxu0 0.0
      %1957 = vmatpush2.msra.mxu0 0.0
      %1958 = vmatprep.subr.mxu0 0.0
      %1959 = vmatpush2.msra.mxu0 0.0
      %1960 = vmatprep.subr.mxu0 0.0
      %1961 = vmatpush2.msra.mxu0 0.0
      %1962 = vmatprep.subr.mxu0 0.0
      %1963 = vmatpush2.msra.mxu0 0.0
      %1964 = vmatprep.subr.mxu0 0.0
      %1965 = vmatpush2.msra.mxu0 0.0
      %1966 = vmatprep.subr.mxu0 0.0
      %1967 = vmatpush2.msra.mxu0 0.0
      %1968 = vmatprep.mubr.f32.mxu0 0.0
      %1969 = vmatmul.mubr.f32.gmra.mxu0 %v1902
      %v1970 = vpop.f32.mrf.mxu0
      %v1971 = vadd.f32 0.0, %v1970
      %v1972 = vpop.f32.mrf.mxu0
      %1973 = vdwg.mxu0
      %1975 = vrot.lane.b32.xlu0 %v1373, 96
      %v1976 = vpop.permute.xlu0 %1975
      %v1979 = vsel %vm1549, %v1896, 0
      %1981 = vmatprep.subr.mxu0 0.0
      %1982 = vmatpush1.msra.mxu0 0.0
      %1983 = vmatprep.subr.mxu0 0.0
      %1984 = vmatpush1.msra.mxu0 0.0
      %1985 = vmatprep.subr.mxu0 0.0
      %1986 = vmatpush1.msra.mxu0 0.0
      %1987 = vmatprep.subr.mxu0 0.0
      %1988 = vmatpush1.msra.mxu0 0.0
      %1989 = vmatprep.subr.mxu0 0.0
      %1990 = vmatpush1.msra.mxu0 0.0
      %1991 = vmatprep.subr.mxu0 0.0
      %1992 = vmatpush1.msra.mxu0 0.0
      %1993 = vmatprep.subr.mxu0 0.0
      %1994 = vmatpush1.msra.mxu0 0.0
      %1995 = vmatprep.subr.mxu0 0.0
      %1996 = vmatpush1.msra.mxu0 0.0
      %1997 = vmatprep.subr.mxu0 0.0
      %1998 = vmatpush1.msra.mxu0 0.0
      %1999 = vmatprep.subr.mxu0 0.0
      %2000 = vmatpush1.msra.mxu0 0.0
      %2001 = vmatprep.subr.mxu0 0.0
      %2002 = vmatpush1.msra.mxu0 0.0
      %2003 = vmatprep.subr.mxu0 0.0
      %2004 = vmatpush1.msra.mxu0 0.0
      %2005 = vmatprep.subr.mxu0 0.0
      %2006 = vmatpush1.msra.mxu0 0.0
      %2007 = vmatprep.subr.mxu0 0.0
      %2008 = vmatpush1.msra.mxu0 0.0
      %2009 = vmatprep.subr.mxu0 0.0
      %2010 = vmatpush1.msra.mxu0 0.0
      %2011 = vmatprep.subr.mxu0 0.0
      %2012 = vmatpush1.msra.mxu0 %v1976
      %2013 = vmatprep.subr.mxu0 0.0
      %2014 = vmatpush2.msra.mxu0 0.0
      %2015 = vmatprep.subr.mxu0 0.0
      %2016 = vmatpush2.msra.mxu0 0.0
      %2017 = vmatprep.subr.mxu0 0.0
      %2018 = vmatpush2.msra.mxu0 0.0
      %2019 = vmatprep.subr.mxu0 0.0
      %2020 = vmatpush2.msra.mxu0 0.0
      %2021 = vmatprep.subr.mxu0 0.0
      %2022 = vmatpush2.msra.mxu0 0.0
      %2023 = vmatprep.subr.mxu0 0.0
      %2024 = vmatpush2.msra.mxu0 0.0
      %2025 = vmatprep.subr.mxu0 0.0
      %2026 = vmatpush2.msra.mxu0 0.0
      %2027 = vmatprep.subr.mxu0 0.0
      %2028 = vmatpush2.msra.mxu0 0.0
      %2029 = vmatprep.subr.mxu0 0.0
      %2030 = vmatpush2.msra.mxu0 0.0
      %2031 = vmatprep.subr.mxu0 0.0
      %2032 = vmatpush2.msra.mxu0 0.0
      %2033 = vmatprep.subr.mxu0 0.0
      %2034 = vmatpush2.msra.mxu0 0.0
      %2035 = vmatprep.subr.mxu0 0.0
      %2036 = vmatpush2.msra.mxu0 0.0
      %2037 = vmatprep.subr.mxu0 0.0
      %2038 = vmatpush2.msra.mxu0 0.0
      %2039 = vmatprep.subr.mxu0 0.0
      %2040 = vmatpush2.msra.mxu0 0.0
      %2041 = vmatprep.subr.mxu0 0.0
      %2042 = vmatpush2.msra.mxu0 0.0
      %2043 = vmatprep.subr.mxu0 0.0
      %2044 = vmatpush2.msra.mxu0 0.0
      %2045 = vmatprep.mubr.f32.mxu0 0.0
      %2046 = vmatmul.mubr.f32.gmra.mxu0 %v1979
      %v2047 = vpop.f32.mrf.mxu0
      %v2048 = vadd.f32 0.0, %v2047
      %v2049 = vpop.f32.mrf.mxu0
      %2050 = vdwg.mxu0
      %v2051 = vpack.c.bf16 %v2048, %v1971
      %v2056 = vunpack.c.l.b16 %v1384
      %v2057 = vunpack.c.l.b16 %v1385
      %v2058 = vunpack.c.l.b16 %v1386
      %v2059 = vunpack.c.l.b16 %v1387
      %v2060 = vpack.c.b16 %v2057, %v2056
      %v2061 = vpack.c.b16 %v2059, %v2058
      %v2065 = vsel %vm1396, %v2051, 0
      %2067 = vmatprep.subr.bf16.mxu0 0
      %2068 = vmatpush1.bf16.msra.mxu0 0
      %2069 = vmatprep.subr.bf16.mxu0 0
      %2070 = vmatpush1.bf16.msra.mxu0 0
      %2071 = vmatprep.subr.bf16.mxu0 0
      %2072 = vmatpush1.bf16.msra.mxu0 0
      %2073 = vmatprep.subr.bf16.mxu0 0
      %2074 = vmatpush1.bf16.msra.mxu0 0
      %2075 = vmatprep.subr.bf16.mxu0 0
      %2076 = vmatpush1.bf16.msra.mxu0 0
      %2077 = vmatprep.subr.bf16.mxu0 0
      %2078 = vmatpush1.bf16.msra.mxu0 0
      %2079 = vmatprep.subr.bf16.mxu0 0
      %2080 = vmatpush1.bf16.msra.mxu0 %v2061
      %2081 = vmatprep.subr.bf16.mxu0 0
      %2082 = vmatpush1.bf16.msra.mxu0 %v2060
      %2083 = vmatprep.subr.bf16.mxu0 0
      %2084 = vmatpush2.bf16.msra.mxu0 0
      %2085 = vmatprep.subr.bf16.mxu0 0
      %2086 = vmatpush2.bf16.msra.mxu0 0
      %2087 = vmatprep.subr.bf16.mxu0 0
      %2088 = vmatpush2.bf16.msra.mxu0 0
      %2089 = vmatprep.subr.bf16.mxu0 0
      %2090 = vmatpush2.bf16.msra.mxu0 0
      %2091 = vmatprep.subr.bf16.mxu0 0
      %2092 = vmatpush2.bf16.msra.mxu0 0
      %2093 = vmatprep.subr.bf16.mxu0 0
      %2094 = vmatpush2.bf16.msra.mxu0 0
      %2095 = vmatprep.subr.bf16.mxu0 0
      %2096 = vmatpush2.bf16.msra.mxu0 0
      %2097 = vmatprep.subr.bf16.mxu0 0
      %2098 = vmatpush2.bf16.msra.mxu0 0
      %2099 = vmatprep.mubr.bf16.mxu0 0
      %2100 = vmatmul.mubr.bf16.gmra.mxu0 %v2065
      %v2101 = vpop.f32.mrf.mxu0
      %v2102 = vadd.f32 0.0, %v2101
      %v2103 = vpop.f32.mrf.mxu0
      %v2104 = vpop.f32.mrf.mxu0
      %v2105 = vadd.f32 0.0, %v2104
      %v2106 = vpop.f32.mrf.mxu0
      %2107 = vdwg.mxu0
      %v2112 = vunpack.c.l.b16 %v1380
      %v2113 = vunpack.c.l.b16 %v1381
      %v2114 = vunpack.c.l.b16 %v1382
      %v2115 = vunpack.c.l.b16 %v1383
      %v2116 = vpack.c.b16 %v2113, %v2112
      %v2117 = vpack.c.b16 %v2115, %v2114
      %v2121 = vsel %vm1396, %v1718, 0
      %2123 = vmatprep.subr.bf16.mxu0 0
      %2124 = vmatpush1.bf16.msra.mxu0 0
      %2125 = vmatprep.subr.bf16.mxu0 0
      %2126 = vmatpush1.bf16.msra.mxu0 0
      %2127 = vmatprep.subr.bf16.mxu0 0
      %2128 = vmatpush1.bf16.msra.mxu0 0
      %2129 = vmatprep.subr.bf16.mxu0 0
      %2130 = vmatpush1.bf16.msra.mxu0 0
      %2131 = vmatprep.subr.bf16.mxu0 0
      %2132 = vmatpush1.bf16.msra.mxu0 0
      %2133 = vmatprep.subr.bf16.mxu0 0
      %2134 = vmatpush1.bf16.msra.mxu0 0
      %2135 = vmatprep.subr.bf16.mxu0 0
      %2136 = vmatpush1.bf16.msra.mxu0 %v2117
      %2137 = vmatprep.subr.bf16.mxu0 0
      %2138 = vmatpush1.bf16.msra.mxu0 %v2116
      %2139 = vmatprep.subr.bf16.mxu0 0
      %2140 = vmatpush2.bf16.msra.mxu0 0
      %2141 = vmatprep.subr.bf16.mxu0 0
      %2142 = vmatpush2.bf16.msra.mxu0 0
      %2143 = vmatprep.subr.bf16.mxu0 0
      %2144 = vmatpush2.bf16.msra.mxu0 0
      %2145 = vmatprep.subr.bf16.mxu0 0
      %2146 = vmatpush2.bf16.msra.mxu0 0
      %2147 = vmatprep.subr.bf16.mxu0 0
      %2148 = vmatpush2.bf16.msra.mxu0 0
      %2149 = vmatprep.subr.bf16.mxu0 0
      %2150 = vmatpush2.bf16.msra.mxu0 0
      %2151 = vmatprep.subr.bf16.mxu0 0
      %2152 = vmatpush2.bf16.msra.mxu0 0
      %2153 = vmatprep.subr.bf16.mxu0 0
      %2154 = vmatpush2.bf16.msra.mxu0 0
      %2155 = vmatprep.mubr.bf16.mxu0 0
      %2156 = vmatmul.mubr.bf16.gmra.mxu0 %v2121
      %v2157 = vpop.f32.mrf.mxu0
      %v2158 = vadd.f32 %v2102, %v2157
      %v2159 = vpop.f32.mrf.mxu0
      %v2160 = vpop.f32.mrf.mxu0
      %v2161 = vadd.f32 %v2105, %v2160
      %v2162 = vpop.f32.mrf.mxu0
      %2163 = vdwg.mxu0
      %2164 = vrot.lane.b32.xlu0 %v1327, 64
      %v2165 = vpop.permute.xlu0 %2164
      %2166 = vrot.lane.b32.xlu0 %v1329, 64
      %v2167 = vpop.permute.xlu0 %2166
      %v2168 = vsel %vm1396, %v2165, 0
      %v2170 = vsel %vm1396, %v2167, 0
      %2172 = vmatprep.subr.mxu0 0.0
      %2173 = vmatpush1.xpose.msra.mxu0 0.0
      %2174 = vmatprep.subr.mxu0 0.0
      %2175 = vmatpush1.xpose.msra.mxu0 0.0
      %2176 = vmatprep.subr.mxu0 0.0
      %2177 = vmatpush1.xpose.msra.mxu0 0.0
      %2178 = vmatprep.subr.mxu0 0.0
      %2179 = vmatpush1.xpose.msra.mxu0 0.0
      %2180 = vmatprep.subr.mxu0 0.0
      %2181 = vmatpush1.xpose.msra.mxu0 0.0
      %2182 = vmatprep.subr.mxu0 0.0
      %2183 = vmatpush1.xpose.msra.mxu0 0.0
      %2184 = vmatprep.subr.mxu0 0.0
      %2185 = vmatpush1.xpose.msra.mxu0 0.0
      %2186 = vmatprep.subr.mxu0 0.0
      %2187 = vmatpush1.xpose.msra.mxu0 0.0
      %2188 = vmatprep.subr.mxu0 0.0
      %2189 = vmatpush1.xpose.msra.mxu0 0.0
      %2190 = vmatprep.subr.mxu0 0.0
      %2191 = vmatpush1.xpose.msra.mxu0 0.0
      %2192 = vmatprep.subr.mxu0 0.0
      %2193 = vmatpush1.xpose.msra.mxu0 0.0
      %2194 = vmatprep.subr.mxu0 0.0
      %2195 = vmatpush1.xpose.msra.mxu0 0.0
      %2196 = vmatprep.subr.mxu0 0.0
      %2197 = vmatpush1.xpose.msra.mxu0 0.0
      %2198 = vmatprep.subr.mxu0 0.0
      %2199 = vmatpush1.xpose.msra.mxu0 0.0
      %2200 = vmatprep.subr.mxu0 0.0
      %2201 = vmatpush1.xpose.msra.mxu0 0.0
      %2202 = vmatprep.subr.mxu0 0.0
      %2203 = vmatpush1.xpose.msra.mxu0 %v2170
      %2204 = vmatprep.subr.mxu0 0.0
      %2205 = vmatpush2.xpose.msra.mxu0 0.0
      %2206 = vmatprep.subr.mxu0 0.0
      %2207 = vmatpush2.xpose.msra.mxu0 0.0
      %2208 = vmatprep.subr.mxu0 0.0
      %2209 = vmatpush2.xpose.msra.mxu0 0.0
      %2210 = vmatprep.subr.mxu0 0.0
      %2211 = vmatpush2.xpose.msra.mxu0 0.0
      %2212 = vmatprep.subr.mxu0 0.0
      %2213 = vmatpush2.xpose.msra.mxu0 0.0
      %2214 = vmatprep.subr.mxu0 0.0
      %2215 = vmatpush2.xpose.msra.mxu0 0.0
      %2216 = vmatprep.subr.mxu0 0.0
      %2217 = vmatpush2.xpose.msra.mxu0 0.0
      %2218 = vmatprep.subr.mxu0 0.0
      %2219 = vmatpush2.xpose.msra.mxu0 0.0
      %2220 = vmatprep.subr.mxu0 0.0
      %2221 = vmatpush2.xpose.msra.mxu0 0.0
      %2222 = vmatprep.subr.mxu0 0.0
      %2223 = vmatpush2.xpose.msra.mxu0 0.0
      %2224 = vmatprep.subr.mxu0 0.0
      %2225 = vmatpush2.xpose.msra.mxu0 0.0
      %2226 = vmatprep.subr.mxu0 0.0
      %2227 = vmatpush2.xpose.msra.mxu0 0.0
      %2228 = vmatprep.subr.mxu0 0.0
      %2229 = vmatpush2.xpose.msra.mxu0 0.0
      %2230 = vmatprep.subr.mxu0 0.0
      %2231 = vmatpush2.xpose.msra.mxu0 0.0
      %2232 = vmatprep.subr.mxu0 0.0
      %2233 = vmatpush2.xpose.msra.mxu0 0.0
      %2234 = vmatprep.subr.mxu0 0.0
      %2235 = vmatpush2.xpose.msra.mxu0 0.0
      %2236 = vmatprep.mubr.f32.mxu0 0.0
      %2237 = vmatmul.mubr.f32.gmra.mxu0 %v2168
      %v2238 = vpop.f32.mrf.mxu0
      %v2239 = vadd.f32 %v1379, %v2238
      %v2240 = vpop.f32.mrf.mxu0
      %2241 = vdwg.mxu0
      %2242 = vrot.lane.b32.xlu0 %v1331, 64
      %v2243 = vpop.permute.xlu0 %2242
      %2244 = vrot.lane.b32.xlu0 %v1333, 64
      %v2245 = vpop.permute.xlu0 %2244
      %v2246 = vsel %vm1396, %v2243, 0
      %v2248 = vsel %vm1396, %v2245, 0
      %2250 = vmatprep.subr.mxu0 0.0
      %2251 = vmatpush1.xpose.msra.mxu0 0.0
      %2252 = vmatprep.subr.mxu0 0.0
      %2253 = vmatpush1.xpose.msra.mxu0 0.0
      %2254 = vmatprep.subr.mxu0 0.0
      %2255 = vmatpush1.xpose.msra.mxu0 0.0
      %2256 = vmatprep.subr.mxu0 0.0
      %2257 = vmatpush1.xpose.msra.mxu0 0.0
      %2258 = vmatprep.subr.mxu0 0.0
      %2259 = vmatpush1.xpose.msra.mxu0 0.0
      %2260 = vmatprep.subr.mxu0 0.0
      %2261 = vmatpush1.xpose.msra.mxu0 0.0
      %2262 = vmatprep.subr.mxu0 0.0
      %2263 = vmatpush1.xpose.msra.mxu0 0.0
      %2264 = vmatprep.subr.mxu0 0.0
      %2265 = vmatpush1.xpose.msra.mxu0 0.0
      %2266 = vmatprep.subr.mxu0 0.0
      %2267 = vmatpush1.xpose.msra.mxu0 0.0
      %2268 = vmatprep.subr.mxu0 0.0
      %2269 = vmatpush1.xpose.msra.mxu0 0.0
      %2270 = vmatprep.subr.mxu0 0.0
      %2271 = vmatpush1.xpose.msra.mxu0 0.0
      %2272 = vmatprep.subr.mxu0 0.0
      %2273 = vmatpush1.xpose.msra.mxu0 0.0
      %2274 = vmatprep.subr.mxu0 0.0
      %2275 = vmatpush1.xpose.msra.mxu0 0.0
      %2276 = vmatprep.subr.mxu0 0.0
      %2277 = vmatpush1.xpose.msra.mxu0 0.0
      %2278 = vmatprep.subr.mxu0 0.0
      %2279 = vmatpush1.xpose.msra.mxu0 0.0
      %2280 = vmatprep.subr.mxu0 0.0
      %2281 = vmatpush1.xpose.msra.mxu0 %v2248
      %2282 = vmatprep.subr.mxu0 0.0
      %2283 = vmatpush2.xpose.msra.mxu0 0.0
      %2284 = vmatprep.subr.mxu0 0.0
      %2285 = vmatpush2.xpose.msra.mxu0 0.0
      %2286 = vmatprep.subr.mxu0 0.0
      %2287 = vmatpush2.xpose.msra.mxu0 0.0
      %2288 = vmatprep.subr.mxu0 0.0
      %2289 = vmatpush2.xpose.msra.mxu0 0.0
      %2290 = vmatprep.subr.mxu0 0.0
      %2291 = vmatpush2.xpose.msra.mxu0 0.0
      %2292 = vmatprep.subr.mxu0 0.0
      %2293 = vmatpush2.xpose.msra.mxu0 0.0
      %2294 = vmatprep.subr.mxu0 0.0
      %2295 = vmatpush2.xpose.msra.mxu0 0.0
      %2296 = vmatprep.subr.mxu0 0.0
      %2297 = vmatpush2.xpose.msra.mxu0 0.0
      %2298 = vmatprep.subr.mxu0 0.0
      %2299 = vmatpush2.xpose.msra.mxu0 0.0
      %2300 = vmatprep.subr.mxu0 0.0
      %2301 = vmatpush2.xpose.msra.mxu0 0.0
      %2302 = vmatprep.subr.mxu0 0.0
      %2303 = vmatpush2.xpose.msra.mxu0 0.0
      %2304 = vmatprep.subr.mxu0 0.0
      %2305 = vmatpush2.xpose.msra.mxu0 0.0
      %2306 = vmatprep.subr.mxu0 0.0
      %2307 = vmatpush2.xpose.msra.mxu0 0.0
      %2308 = vmatprep.subr.mxu0 0.0
      %2309 = vmatpush2.xpose.msra.mxu0 0.0
      %2310 = vmatprep.subr.mxu0 0.0
      %2311 = vmatpush2.xpose.msra.mxu0 0.0
      %2312 = vmatprep.subr.mxu0 0.0
      %2313 = vmatpush2.xpose.msra.mxu0 0.0
      %2314 = vmatprep.mubr.f32.mxu0 0.0
      %2315 = vmatmul.mubr.f32.gmra.mxu0 %v2246
      %v2316 = vpop.f32.mrf.mxu0
      %v2317 = vadd.f32 %v1379, %v2316
      %v2318 = vpop.f32.mrf.mxu0
      %2319 = vdwg.mxu0
      %v2320 = vsel %vm1549, %v2239, -inf
      %2321 = vmax.xlane.f32.xlu0 %v2320
      %v2322 = vpop.xlane.xlu0 %2321
      %v2323 = vsel %vm1549, %v2317, -inf
      %2324 = vmax.xlane.f32.xlu0 %v2323
      %v2325 = vpop.xlane.xlu0 %2324
      %v2326 = vsub.f32 %v2239, %v2322
      %v2327 = vsub.f32 %v2317, %v2325
      %v2328 = vmul.f32 %v2326, 1.442695
      %v2329 = vpow.pop %v2328
      %v2330 = vmul.f32 %v2327, 1.442695
      %v2331 = vpow.pop %v2330
      %v2332 = vsel %vm1549, %v2329, 0.0
      %2333 = vadd.xlane.f32.xlu0 %v2332
      %v2334 = vpop.xlane.xlu0 %2333
      %v2335 = vsel %vm1549, %v2331, 0.0
      %2336 = vadd.xlane.f32.xlu0 %v2335
      %v2337 = vpop.xlane.xlu0 %2336
      %v2338 = vrcp.pop %v2334
      %v2339 = vrcp.pop %v2337
      %v2340 = vmul.f32 %v2329, %v2338
      %v2341 = vmul.f32 %v2331, %v2339
      %2342 = vrot.lane.b32.xlu0 %v1370, 64
      %v2343 = vpop.permute.xlu0 %2342
      %v2346 = vsel %vm1549, %v2340, 0
      %2348 = vmatprep.subr.mxu0 0.0
      %2349 = vmatpush1.msra.mxu0 0.0
      %2350 = vmatprep.subr.mxu0 0.0
      %2351 = vmatpush1.msra.mxu0 0.0
      %2352 = vmatprep.subr.mxu0 0.0
      %2353 = vmatpush1.msra.mxu0 0.0
      %2354 = vmatprep.subr.mxu0 0.0
      %2355 = vmatpush1.msra.mxu0 0.0
      %2356 = vmatprep.subr.mxu0 0.0
      %2357 = vmatpush1.msra.mxu0 0.0
      %2358 = vmatprep.subr.mxu0 0.0
      %2359 = vmatpush1.msra.mxu0 0.0
      %2360 = vmatprep.subr.mxu0 0.0
      %2361 = vmatpush1.msra.mxu0 0.0
      %2362 = vmatprep.subr.mxu0 0.0
      %2363 = vmatpush1.msra.mxu0 0.0
      %2364 = vmatprep.subr.mxu0 0.0
      %2365 = vmatpush1.msra.mxu0 0.0
      %2366 = vmatprep.subr.mxu0 0.0
      %2367 = vmatpush1.msra.mxu0 0.0
      %2368 = vmatprep.subr.mxu0 0.0
      %2369 = vmatpush1.msra.mxu0 0.0
      %2370 = vmatprep.subr.mxu0 0.0
      %2371 = vmatpush1.msra.mxu0 0.0
      %2372 = vmatprep.subr.mxu0 0.0
      %2373 = vmatpush1.msra.mxu0 0.0
      %2374 = vmatprep.subr.mxu0 0.0
      %2375 = vmatpush1.msra.mxu0 0.0
      %2376 = vmatprep.subr.mxu0 0.0
      %2377 = vmatpush1.msra.mxu0 0.0
      %2378 = vmatprep.subr.mxu0 0.0
      %2379 = vmatpush1.msra.mxu0 %v2343
      %2380 = vmatprep.subr.mxu0 0.0
      %2381 = vmatpush2.msra.mxu0 0.0
      %2382 = vmatprep.subr.mxu0 0.0
      %2383 = vmatpush2.msra.mxu0 0.0
      %2384 = vmatprep.subr.mxu0 0.0
      %2385 = vmatpush2.msra.mxu0 0.0
      %2386 = vmatprep.subr.mxu0 0.0
      %2387 = vmatpush2.msra.mxu0 0.0
      %2388 = vmatprep.subr.mxu0 0.0
      %2389 = vmatpush2.msra.mxu0 0.0
      %2390 = vmatprep.subr.mxu0 0.0
      %2391 = vmatpush2.msra.mxu0 0.0
      %2392 = vmatprep.subr.mxu0 0.0
      %2393 = vmatpush2.msra.mxu0 0.0
      %2394 = vmatprep.subr.mxu0 0.0
      %2395 = vmatpush2.msra.mxu0 0.0
      %2396 = vmatprep.subr.mxu0 0.0
      %2397 = vmatpush2.msra.mxu0 0.0
      %2398 = vmatprep.subr.mxu0 0.0
      %2399 = vmatpush2.msra.mxu0 0.0
      %2400 = vmatprep.subr.mxu0 0.0
      %2401 = vmatpush2.msra.mxu0 0.0
      %2402 = vmatprep.subr.mxu0 0.0
      %2403 = vmatpush2.msra.mxu0 0.0
      %2404 = vmatprep.subr.mxu0 0.0
      %2405 = vmatpush2.msra.mxu0 0.0
      %2406 = vmatprep.subr.mxu0 0.0
      %2407 = vmatpush2.msra.mxu0 0.0
      %2408 = vmatprep.subr.mxu0 0.0
      %2409 = vmatpush2.msra.mxu0 0.0
      %2410 = vmatprep.subr.mxu0 0.0
      %2411 = vmatpush2.msra.mxu0 0.0
      %2412 = vmatprep.mubr.f32.mxu0 0.0
      %2413 = vmatmul.mubr.f32.gmra.mxu0 %v2346
      %v2414 = vpop.f32.mrf.mxu0
      %v2415 = vadd.f32 0.0, %v2414
      %v2416 = vpop.f32.mrf.mxu0
      %2417 = vdwg.mxu0
      %2418 = vrot.lane.b32.xlu0 %v1373, 64
      %v2419 = vpop.permute.xlu0 %2418
      %v2422 = vsel %vm1549, %v2341, 0
      %2424 = vmatprep.subr.mxu0 0.0
      %2425 = vmatpush1.msra.mxu0 0.0
      %2426 = vmatprep.subr.mxu0 0.0
      %2427 = vmatpush1.msra.mxu0 0.0
      %2428 = vmatprep.subr.mxu0 0.0
      %2429 = vmatpush1.msra.mxu0 0.0
      %2430 = vmatprep.subr.mxu0 0.0
      %2431 = vmatpush1.msra.mxu0 0.0
      %2432 = vmatprep.subr.mxu0 0.0
      %2433 = vmatpush1.msra.mxu0 0.0
      %2434 = vmatprep.subr.mxu0 0.0
      %2435 = vmatpush1.msra.mxu0 0.0
      %2436 = vmatprep.subr.mxu0 0.0
      %2437 = vmatpush1.msra.mxu0 0.0
      %2438 = vmatprep.subr.mxu0 0.0
      %2439 = vmatpush1.msra.mxu0 0.0
      %2440 = vmatprep.subr.mxu0 0.0
      %2441 = vmatpush1.msra.mxu0 0.0
      %2442 = vmatprep.subr.mxu0 0.0
      %2443 = vmatpush1.msra.mxu0 0.0
      %2444 = vmatprep.subr.mxu0 0.0
      %2445 = vmatpush1.msra.mxu0 0.0
      %2446 = vmatprep.subr.mxu0 0.0
      %2447 = vmatpush1.msra.mxu0 0.0
      %2448 = vmatprep.subr.mxu0 0.0
      %2449 = vmatpush1.msra.mxu0 0.0
      %2450 = vmatprep.subr.mxu0 0.0
      %2451 = vmatpush1.msra.mxu0 0.0
      %2452 = vmatprep.subr.mxu0 0.0
      %2453 = vmatpush1.msra.mxu0 0.0
      %2454 = vmatprep.subr.mxu0 0.0
      %2455 = vmatpush1.msra.mxu0 %v2419
      %2456 = vmatprep.subr.mxu0 0.0
      %2457 = vmatpush2.msra.mxu0 0.0
      %2458 = vmatprep.subr.mxu0 0.0
      %2459 = vmatpush2.msra.mxu0 0.0
      %2460 = vmatprep.subr.mxu0 0.0
      %2461 = vmatpush2.msra.mxu0 0.0
      %2462 = vmatprep.subr.mxu0 0.0
      %2463 = vmatpush2.msra.mxu0 0.0
      %2464 = vmatprep.subr.mxu0 0.0
      %2465 = vmatpush2.msra.mxu0 0.0
      %2466 = vmatprep.subr.mxu0 0.0
      %2467 = vmatpush2.msra.mxu0 0.0
      %2468 = vmatprep.subr.mxu0 0.0
      %2469 = vmatpush2.msra.mxu0 0.0
      %2470 = vmatprep.subr.mxu0 0.0
      %2471 = vmatpush2.msra.mxu0 0.0
      %2472 = vmatprep.subr.mxu0 0.0
      %2473 = vmatpush2.msra.mxu0 0.0
      %2474 = vmatprep.subr.mxu0 0.0
      %2475 = vmatpush2.msra.mxu0 0.0
      %2476 = vmatprep.subr.mxu0 0.0
      %2477 = vmatpush2.msra.mxu0 0.0
      %2478 = vmatprep.subr.mxu0 0.0
      %2479 = vmatpush2.msra.mxu0 0.0
      %2480 = vmatprep.subr.mxu0 0.0
      %2481 = vmatpush2.msra.mxu0 0.0
      %2482 = vmatprep.subr.mxu0 0.0
      %2483 = vmatpush2.msra.mxu0 0.0
      %2484 = vmatprep.subr.mxu0 0.0
      %2485 = vmatpush2.msra.mxu0 0.0
      %2486 = vmatprep.subr.mxu0 0.0
      %2487 = vmatpush2.msra.mxu0 0.0
      %2488 = vmatprep.mubr.f32.mxu0 0.0
      %2489 = vmatmul.mubr.f32.gmra.mxu0 %v2422
      %v2490 = vpop.f32.mrf.mxu0
      %v2491 = vadd.f32 0.0, %v2490
      %v2492 = vpop.f32.mrf.mxu0
      %2493 = vdwg.mxu0
      %v2494 = vpack.c.bf16 %v2491, %v2415
      %v2499 = vunpack.c.l.b16 %v1388
      %v2500 = vunpack.c.l.b16 %v1389
      %v2501 = vunpack.c.l.b16 %v1390
      %v2502 = vunpack.c.l.b16 %v1391
      %v2503 = vpack.c.b16 %v2500, %v2499
      %v2504 = vpack.c.b16 %v2502, %v2501
      %v2508 = vsel %vm1396, %v2494, 0
      %2510 = vmatprep.subr.bf16.mxu0 0
      %2511 = vmatpush1.bf16.msra.mxu0 0
      %2512 = vmatprep.subr.bf16.mxu0 0
      %2513 = vmatpush1.bf16.msra.mxu0 0
      %2514 = vmatprep.subr.bf16.mxu0 0
      %2515 = vmatpush1.bf16.msra.mxu0 0
      %2516 = vmatprep.subr.bf16.mxu0 0
      %2517 = vmatpush1.bf16.msra.mxu0 0
      %2518 = vmatprep.subr.bf16.mxu0 0
      %2519 = vmatpush1.bf16.msra.mxu0 0
      %2520 = vmatprep.subr.bf16.mxu0 0
      %2521 = vmatpush1.bf16.msra.mxu0 0
      %2522 = vmatprep.subr.bf16.mxu0 0
      %2523 = vmatpush1.bf16.msra.mxu0 %v2504
      %2524 = vmatprep.subr.bf16.mxu0 0
      %2525 = vmatpush1.bf16.msra.mxu0 %v2503
      %2526 = vmatprep.subr.bf16.mxu0 0
      %2527 = vmatpush2.bf16.msra.mxu0 0
      %2528 = vmatprep.subr.bf16.mxu0 0
      %2529 = vmatpush2.bf16.msra.mxu0 0
      %2530 = vmatprep.subr.bf16.mxu0 0
      %2531 = vmatpush2.bf16.msra.mxu0 0
      %2532 = vmatprep.subr.bf16.mxu0 0
      %2533 = vmatpush2.bf16.msra.mxu0 0
      %2534 = vmatprep.subr.bf16.mxu0 0
      %2535 = vmatpush2.bf16.msra.mxu0 0
      %2536 = vmatprep.subr.bf16.mxu0 0
      %2537 = vmatpush2.bf16.msra.mxu0 0
      %2538 = vmatprep.subr.bf16.mxu0 0
      %2539 = vmatpush2.bf16.msra.mxu0 0
      %2540 = vmatprep.subr.bf16.mxu0 0
      %2541 = vmatpush2.bf16.msra.mxu0 0
      %2542 = vmatprep.mubr.bf16.mxu0 0
      %2543 = vmatmul.mubr.bf16.gmra.mxu0 %v2508
      %v2544 = vpop.f32.mrf.mxu0
      %v2545 = vadd.f32 0.0, %v2544
      %v2546 = vpop.f32.mrf.mxu0
      %v2547 = vpop.f32.mrf.mxu0
      %v2548 = vadd.f32 0.0, %v2547
      %v2549 = vpop.f32.mrf.mxu0
      %2550 = vdwg.mxu0
      %v2551 = vadd.f32 %v2158, %v2545
      %v2552 = vadd.f32 %v2161, %v2548
      %2553 = vrot.lane.b32.xlu0 %v1327, 32
      %v2554 = vpop.permute.xlu0 %2553
      %2555 = vrot.lane.b32.xlu0 %v1329, 32
      %v2556 = vpop.permute.xlu0 %2555
      %v2557 = vsel %vm1396, %v2554, 0
      %v2559 = vsel %vm1396, %v2556, 0
      %2561 = vmatprep.subr.mxu0 0.0
      %2562 = vmatpush1.xpose.msra.mxu0 0.0
      %2563 = vmatprep.subr.mxu0 0.0
      %2564 = vmatpush1.xpose.msra.mxu0 0.0
      %2565 = vmatprep.subr.mxu0 0.0
      %2566 = vmatpush1.xpose.msra.mxu0 0.0
      %2567 = vmatprep.subr.mxu0 0.0
      %2568 = vmatpush1.xpose.msra.mxu0 0.0
      %2569 = vmatprep.subr.mxu0 0.0
      %2570 = vmatpush1.xpose.msra.mxu0 0.0
      %2571 = vmatprep.subr.mxu0 0.0
      %2572 = vmatpush1.xpose.msra.mxu0 0.0
      %2573 = vmatprep.subr.mxu0 0.0
      %2574 = vmatpush1.xpose.msra.mxu0 0.0
      %2575 = vmatprep.subr.mxu0 0.0
      %2576 = vmatpush1.xpose.msra.mxu0 0.0
      %2577 = vmatprep.subr.mxu0 0.0
      %2578 = vmatpush1.xpose.msra.mxu0 0.0
      %2579 = vmatprep.subr.mxu0 0.0
      %2580 = vmatpush1.xpose.msra.mxu0 0.0
      %2581 = vmatprep.subr.mxu0 0.0
      %2582 = vmatpush1.xpose.msra.mxu0 0.0
      %2583 = vmatprep.subr.mxu0 0.0
      %2584 = vmatpush1.xpose.msra.mxu0 0.0
      %2585 = vmatprep.subr.mxu0 0.0
      %2586 = vmatpush1.xpose.msra.mxu0 0.0
      %2587 = vmatprep.subr.mxu0 0.0
      %2588 = vmatpush1.xpose.msra.mxu0 0.0
      %2589 = vmatprep.subr.mxu0 0.0
      %2590 = vmatpush1.xpose.msra.mxu0 0.0
      %2591 = vmatprep.subr.mxu0 0.0
      %2592 = vmatpush1.xpose.msra.mxu0 %v2559
      %2593 = vmatprep.subr.mxu0 0.0
      %2594 = vmatpush2.xpose.msra.mxu0 0.0
      %2595 = vmatprep.subr.mxu0 0.0
      %2596 = vmatpush2.xpose.msra.mxu0 0.0
      %2597 = vmatprep.subr.mxu0 0.0
      %2598 = vmatpush2.xpose.msra.mxu0 0.0
      %2599 = vmatprep.subr.mxu0 0.0
      %2600 = vmatpush2.xpose.msra.mxu0 0.0
      %2601 = vmatprep.subr.mxu0 0.0
      %2602 = vmatpush2.xpose.msra.mxu0 0.0
      %2603 = vmatprep.subr.mxu0 0.0
      %2604 = vmatpush2.xpose.msra.mxu0 0.0
      %2605 = vmatprep.subr.mxu0 0.0
      %2606 = vmatpush2.xpose.msra.mxu0 0.0
      %2607 = vmatprep.subr.mxu0 0.0
      %2608 = vmatpush2.xpose.msra.mxu0 0.0
      %2609 = vmatprep.subr.mxu0 0.0
      %2610 = vmatpush2.xpose.msra.mxu0 0.0
      %2611 = vmatprep.subr.mxu0 0.0
      %2612 = vmatpush2.xpose.msra.mxu0 0.0
      %2613 = vmatprep.subr.mxu0 0.0
      %2614 = vmatpush2.xpose.msra.mxu0 0.0
      %2615 = vmatprep.subr.mxu0 0.0
      %2616 = vmatpush2.xpose.msra.mxu0 0.0
      %2617 = vmatprep.subr.mxu0 0.0
      %2618 = vmatpush2.xpose.msra.mxu0 0.0
      %2619 = vmatprep.subr.mxu0 0.0
      %2620 = vmatpush2.xpose.msra.mxu0 0.0
      %2621 = vmatprep.subr.mxu0 0.0
      %2622 = vmatpush2.xpose.msra.mxu0 0.0
      %2623 = vmatprep.subr.mxu0 0.0
      %2624 = vmatpush2.xpose.msra.mxu0 0.0
      %2625 = vmatprep.mubr.f32.mxu0 0.0
      %2626 = vmatmul.mubr.f32.gmra.mxu0 %v2557
      %v2627 = vpop.f32.mrf.mxu0
      %v2628 = vadd.f32 %v1379, %v2627
      %v2629 = vpop.f32.mrf.mxu0
      %2630 = vdwg.mxu0
      %2631 = vrot.lane.b32.xlu0 %v1331, 32
      %v2632 = vpop.permute.xlu0 %2631
      %2633 = vrot.lane.b32.xlu0 %v1333, 32
      %v2634 = vpop.permute.xlu0 %2633
      %v2635 = vsel %vm1396, %v2632, 0
      %v2637 = vsel %vm1396, %v2634, 0
      %2639 = vmatprep.subr.mxu0 0.0
      %2640 = vmatpush1.xpose.msra.mxu0 0.0
      %2641 = vmatprep.subr.mxu0 0.0
      %2642 = vmatpush1.xpose.msra.mxu0 0.0
      %2643 = vmatprep.subr.mxu0 0.0
      %2644 = vmatpush1.xpose.msra.mxu0 0.0
      %2645 = vmatprep.subr.mxu0 0.0
      %2646 = vmatpush1.xpose.msra.mxu0 0.0
      %2647 = vmatprep.subr.mxu0 0.0
      %2648 = vmatpush1.xpose.msra.mxu0 0.0
      %2649 = vmatprep.subr.mxu0 0.0
      %2650 = vmatpush1.xpose.msra.mxu0 0.0
      %2651 = vmatprep.subr.mxu0 0.0
      %2652 = vmatpush1.xpose.msra.mxu0 0.0
      %2653 = vmatprep.subr.mxu0 0.0
      %2654 = vmatpush1.xpose.msra.mxu0 0.0
      %2655 = vmatprep.subr.mxu0 0.0
      %2656 = vmatpush1.xpose.msra.mxu0 0.0
      %2657 = vmatprep.subr.mxu0 0.0
      %2658 = vmatpush1.xpose.msra.mxu0 0.0
      %2659 = vmatprep.subr.mxu0 0.0
      %2660 = vmatpush1.xpose.msra.mxu0 0.0
      %2661 = vmatprep.subr.mxu0 0.0
      %2662 = vmatpush1.xpose.msra.mxu0 0.0
      %2663 = vmatprep.subr.mxu0 0.0
      %2664 = vmatpush1.xpose.msra.mxu0 0.0
      %2665 = vmatprep.subr.mxu0 0.0
      %2666 = vmatpush1.xpose.msra.mxu0 0.0
      %2667 = vmatprep.subr.mxu0 0.0
      %2668 = vmatpush1.xpose.msra.mxu0 0.0
      %2669 = vmatprep.subr.mxu0 0.0
      %2670 = vmatpush1.xpose.msra.mxu0 %v2637
      %2671 = vmatprep.subr.mxu0 0.0
      %2672 = vmatpush2.xpose.msra.mxu0 0.0
      %2673 = vmatprep.subr.mxu0 0.0
      %2674 = vmatpush2.xpose.msra.mxu0 0.0
      %2675 = vmatprep.subr.mxu0 0.0
      %2676 = vmatpush2.xpose.msra.mxu0 0.0
      %2677 = vmatprep.subr.mxu0 0.0
      %2678 = vmatpush2.xpose.msra.mxu0 0.0
      %2679 = vmatprep.subr.mxu0 0.0
      %2680 = vmatpush2.xpose.msra.mxu0 0.0
      %2681 = vmatprep.subr.mxu0 0.0
      %2682 = vmatpush2.xpose.msra.mxu0 0.0
      %2683 = vmatprep.subr.mxu0 0.0
      %2684 = vmatpush2.xpose.msra.mxu0 0.0
      %2685 = vmatprep.subr.mxu0 0.0
      %2686 = vmatpush2.xpose.msra.mxu0 0.0
      %2687 = vmatprep.subr.mxu0 0.0
      %2688 = vmatpush2.xpose.msra.mxu0 0.0
      %2689 = vmatprep.subr.mxu0 0.0
      %2690 = vmatpush2.xpose.msra.mxu0 0.0
      %2691 = vmatprep.subr.mxu0 0.0
      %2692 = vmatpush2.xpose.msra.mxu0 0.0
      %2693 = vmatprep.subr.mxu0 0.0
      %2694 = vmatpush2.xpose.msra.mxu0 0.0
      %2695 = vmatprep.subr.mxu0 0.0
      %2696 = vmatpush2.xpose.msra.mxu0 0.0
      %2697 = vmatprep.subr.mxu0 0.0
      %2698 = vmatpush2.xpose.msra.mxu0 0.0
      %2699 = vmatprep.subr.mxu0 0.0
      %2700 = vmatpush2.xpose.msra.mxu0 0.0
      %2701 = vmatprep.subr.mxu0 0.0
      %2702 = vmatpush2.xpose.msra.mxu0 0.0
      %2703 = vmatprep.mubr.f32.mxu0 0.0
      %2704 = vmatmul.mubr.f32.gmra.mxu0 %v2635
      %v2705 = vpop.f32.mrf.mxu0
      %v2706 = vadd.f32 %v1379, %v2705
      %v2707 = vpop.f32.mrf.mxu0
      %2708 = vdwg.mxu0
      %v2709 = vsel %vm1549, %v2628, -inf
      %2710 = vmax.xlane.f32.xlu0 %v2709
      %v2711 = vpop.xlane.xlu0 %2710
      %v2712 = vsel %vm1549, %v2706, -inf
      %2713 = vmax.xlane.f32.xlu0 %v2712
      %v2714 = vpop.xlane.xlu0 %2713
      %v2715 = vsub.f32 %v2628, %v2711
      %v2716 = vsub.f32 %v2706, %v2714
      %v2717 = vmul.f32 %v2715, 1.442695
      %v2718 = vpow.pop %v2717
      %v2719 = vmul.f32 %v2716, 1.442695
      %v2720 = vpow.pop %v2719
      %v2721 = vsel %vm1549, %v2718, 0.0
      %2722 = vadd.xlane.f32.xlu0 %v2721
      %v2723 = vpop.xlane.xlu0 %2722
      %v2724 = vsel %vm1549, %v2720, 0.0
      %2725 = vadd.xlane.f32.xlu0 %v2724
      %v2726 = vpop.xlane.xlu0 %2725
      %v2727 = vrcp.pop %v2723
      %v2728 = vrcp.pop %v2726
      %v2729 = vmul.f32 %v2718, %v2727
      %v2730 = vmul.f32 %v2720, %v2728
      %2731 = vrot.lane.b32.xlu0 %v1370, 32
      %v2732 = vpop.permute.xlu0 %2731
      %v2735 = vsel %vm1549, %v2729, 0
      %2737 = vmatprep.subr.mxu0 0.0
      %2738 = vmatpush1.msra.mxu0 0.0
      %2739 = vmatprep.subr.mxu0 0.0
      %2740 = vmatpush1.msra.mxu0 0.0
      %2741 = vmatprep.subr.mxu0 0.0
      %2742 = vmatpush1.msra.mxu0 0.0
      %2743 = vmatprep.subr.mxu0 0.0
      %2744 = vmatpush1.msra.mxu0 0.0
      %2745 = vmatprep.subr.mxu0 0.0
      %2746 = vmatpush1.msra.mxu0 0.0
      %2747 = vmatprep.subr.mxu0 0.0
      %2748 = vmatpush1.msra.mxu0 0.0
      %2749 = vmatprep.subr.mxu0 0.0
      %2750 = vmatpush1.msra.mxu0 0.0
      %2751 = vmatprep.subr.mxu0 0.0
      %2752 = vmatpush1.msra.mxu0 0.0
      %2753 = vmatprep.subr.mxu0 0.0
      %2754 = vmatpush1.msra.mxu0 0.0
      %2755 = vmatprep.subr.mxu0 0.0
      %2756 = vmatpush1.msra.mxu0 0.0
      %2757 = vmatprep.subr.mxu0 0.0
      %2758 = vmatpush1.msra.mxu0 0.0
      %2759 = vmatprep.subr.mxu0 0.0
      %2760 = vmatpush1.msra.mxu0 0.0
      %2761 = vmatprep.subr.mxu0 0.0
      %2762 = vmatpush1.msra.mxu0 0.0
      %2763 = vmatprep.subr.mxu0 0.0
      %2764 = vmatpush1.msra.mxu0 0.0
      %2765 = vmatprep.subr.mxu0 0.0
      %2766 = vmatpush1.msra.mxu0 0.0
      %2767 = vmatprep.subr.mxu0 0.0
      %2768 = vmatpush1.msra.mxu0 %v2732
      %2769 = vmatprep.subr.mxu0 0.0
      %2770 = vmatpush2.msra.mxu0 0.0
      %2771 = vmatprep.subr.mxu0 0.0
      %2772 = vmatpush2.msra.mxu0 0.0
      %2773 = vmatprep.subr.mxu0 0.0
      %2774 = vmatpush2.msra.mxu0 0.0
      %2775 = vmatprep.subr.mxu0 0.0
      %2776 = vmatpush2.msra.mxu0 0.0
      %2777 = vmatprep.subr.mxu0 0.0
      %2778 = vmatpush2.msra.mxu0 0.0
      %2779 = vmatprep.subr.mxu0 0.0
      %2780 = vmatpush2.msra.mxu0 0.0
      %2781 = vmatprep.subr.mxu0 0.0
      %2782 = vmatpush2.msra.mxu0 0.0
      %2783 = vmatprep.subr.mxu0 0.0
      %2784 = vmatpush2.msra.mxu0 0.0
      %2785 = vmatprep.subr.mxu0 0.0
      %2786 = vmatpush2.msra.mxu0 0.0
      %2787 = vmatprep.subr.mxu0 0.0
      %2788 = vmatpush2.msra.mxu0 0.0
      %2789 = vmatprep.subr.mxu0 0.0
      %2790 = vmatpush2.msra.mxu0 0.0
      %2791 = vmatprep.subr.mxu0 0.0
      %2792 = vmatpush2.msra.mxu0 0.0
      %2793 = vmatprep.subr.mxu0 0.0
      %2794 = vmatpush2.msra.mxu0 0.0
      %2795 = vmatprep.subr.mxu0 0.0
      %2796 = vmatpush2.msra.mxu0 0.0
      %2797 = vmatprep.subr.mxu0 0.0
      %2798 = vmatpush2.msra.mxu0 0.0
      %2799 = vmatprep.subr.mxu0 0.0
      %2800 = vmatpush2.msra.mxu0 0.0
      %2801 = vmatprep.mubr.f32.mxu0 0.0
      %2802 = vmatmul.mubr.f32.gmra.mxu0 %v2735
      %v2803 = vpop.f32.mrf.mxu0
      %v2804 = vadd.f32 0.0, %v2803
      %v2805 = vpop.f32.mrf.mxu0
      %2806 = vdwg.mxu0
      %2807 = vrot.lane.b32.xlu0 %v1373, 32
      %v2808 = vpop.permute.xlu0 %2807
      %v2811 = vsel %vm1549, %v2730, 0
      %2813 = vmatprep.subr.mxu0 0.0
      %2814 = vmatpush1.msra.mxu0 0.0
      %2815 = vmatprep.subr.mxu0 0.0
      %2816 = vmatpush1.msra.mxu0 0.0
      %2817 = vmatprep.subr.mxu0 0.0
      %2818 = vmatpush1.msra.mxu0 0.0
      %2819 = vmatprep.subr.mxu0 0.0
      %2820 = vmatpush1.msra.mxu0 0.0
      %2821 = vmatprep.subr.mxu0 0.0
      %2822 = vmatpush1.msra.mxu0 0.0
      %2823 = vmatprep.subr.mxu0 0.0
      %2824 = vmatpush1.msra.mxu0 0.0
      %2825 = vmatprep.subr.mxu0 0.0
      %2826 = vmatpush1.msra.mxu0 0.0
      %2827 = vmatprep.subr.mxu0 0.0
      %2828 = vmatpush1.msra.mxu0 0.0
      %2829 = vmatprep.subr.mxu0 0.0
      %2830 = vmatpush1.msra.mxu0 0.0
      %2831 = vmatprep.subr.mxu0 0.0
      %2832 = vmatpush1.msra.mxu0 0.0
      %2833 = vmatprep.subr.mxu0 0.0
      %2834 = vmatpush1.msra.mxu0 0.0
      %2835 = vmatprep.subr.mxu0 0.0
      %2836 = vmatpush1.msra.mxu0 0.0
      %2837 = vmatprep.subr.mxu0 0.0
      %2838 = vmatpush1.msra.mxu0 0.0
      %2839 = vmatprep.subr.mxu0 0.0
      %2840 = vmatpush1.msra.mxu0 0.0
      %2841 = vmatprep.subr.mxu0 0.0
      %2842 = vmatpush1.msra.mxu0 0.0
      %2843 = vmatprep.subr.mxu0 0.0
      %2844 = vmatpush1.msra.mxu0 %v2808
      %2845 = vmatprep.subr.mxu0 0.0
      %2846 = vmatpush2.msra.mxu0 0.0
      %2847 = vmatprep.subr.mxu0 0.0
      %2848 = vmatpush2.msra.mxu0 0.0
      %2849 = vmatprep.subr.mxu0 0.0
      %2850 = vmatpush2.msra.mxu0 0.0
      %2851 = vmatprep.subr.mxu0 0.0
      %2852 = vmatpush2.msra.mxu0 0.0
      %2853 = vmatprep.subr.mxu0 0.0
      %2854 = vmatpush2.msra.mxu0 0.0
      %2855 = vmatprep.subr.mxu0 0.0
      %2856 = vmatpush2.msra.mxu0 0.0
      %2857 = vmatprep.subr.mxu0 0.0
      %2858 = vmatpush2.msra.mxu0 0.0
      %2859 = vmatprep.subr.mxu0 0.0
      %2860 = vmatpush2.msra.mxu0 0.0
      %2861 = vmatprep.subr.mxu0 0.0
      %2862 = vmatpush2.msra.mxu0 0.0
      %2863 = vmatprep.subr.mxu0 0.0
      %2864 = vmatpush2.msra.mxu0 0.0
      %2865 = vmatprep.subr.mxu0 0.0
      %2866 = vmatpush2.msra.mxu0 0.0
      %2867 = vmatprep.subr.mxu0 0.0
      %2868 = vmatpush2.msra.mxu0 0.0
      %2869 = vmatprep.subr.mxu0 0.0
      %2870 = vmatpush2.msra.mxu0 0.0
      %2871 = vmatprep.subr.mxu0 0.0
      %2872 = vmatpush2.msra.mxu0 0.0
      %2873 = vmatprep.subr.mxu0 0.0
      %2874 = vmatpush2.msra.mxu0 0.0
      %2875 = vmatprep.subr.mxu0 0.0
      %2876 = vmatpush2.msra.mxu0 0.0
      %2877 = vmatprep.mubr.f32.mxu0 0.0
      %2878 = vmatmul.mubr.f32.gmra.mxu0 %v2811
      %v2879 = vpop.f32.mrf.mxu0
      %v2880 = vadd.f32 0.0, %v2879
      %v2881 = vpop.f32.mrf.mxu0
      %2882 = vdwg.mxu0
      %v2883 = vpack.c.bf16 %v2880, %v2804
      %v2888 = vunpack.c.l.b16 %v1392
      %v2889 = vunpack.c.l.b16 %v1393
      %v2890 = vunpack.c.l.b16 %v1394
      %v2891 = vunpack.c.l.b16 %v1395
      %v2892 = vpack.c.b16 %v2889, %v2888
      %v2893 = vpack.c.b16 %v2891, %v2890
      %v2897 = vsel %vm1396, %v2883, 0
      %2899 = vmatprep.subr.bf16.mxu0 0
      %2900 = vmatpush1.bf16.msra.mxu0 0
      %2901 = vmatprep.subr.bf16.mxu0 0
      %2902 = vmatpush1.bf16.msra.mxu0 0
      %2903 = vmatprep.subr.bf16.mxu0 0
      %2904 = vmatpush1.bf16.msra.mxu0 0
      %2905 = vmatprep.subr.bf16.mxu0 0
      %2906 = vmatpush1.bf16.msra.mxu0 0
      %2907 = vmatprep.subr.bf16.mxu0 0
      %2908 = vmatpush1.bf16.msra.mxu0 0
      %2909 = vmatprep.subr.bf16.mxu0 0
      %2910 = vmatpush1.bf16.msra.mxu0 0
      %2911 = vmatprep.subr.bf16.mxu0 0
      %2912 = vmatpush1.bf16.msra.mxu0 %v2893
      %2913 = vmatprep.subr.bf16.mxu0 0
      %2914 = vmatpush1.bf16.msra.mxu0 %v2892
      %2915 = vmatprep.subr.bf16.mxu0 0
      %2916 = vmatpush2.bf16.msra.mxu0 0
      %2917 = vmatprep.subr.bf16.mxu0 0
      %2918 = vmatpush2.bf16.msra.mxu0 0
      %2919 = vmatprep.subr.bf16.mxu0 0
      %2920 = vmatpush2.bf16.msra.mxu0 0
      %2921 = vmatprep.subr.bf16.mxu0 0
      %2922 = vmatpush2.bf16.msra.mxu0 0
      %2923 = vmatprep.subr.bf16.mxu0 0
      %2924 = vmatpush2.bf16.msra.mxu0 0
      %2925 = vmatprep.subr.bf16.mxu0 0
      %2926 = vmatpush2.bf16.msra.mxu0 0
      %2927 = vmatprep.subr.bf16.mxu0 0
      %2928 = vmatpush2.bf16.msra.mxu0 0
      %2929 = vmatprep.subr.bf16.mxu0 0
      %2930 = vmatpush2.bf16.msra.mxu0 0
      %2931 = vmatprep.mubr.bf16.mxu0 0
      %2932 = vmatmul.mubr.bf16.gmra.mxu0 %v2897
      %v2933 = vpop.f32.mrf.mxu0
      %v2934 = vadd.f32 0.0, %v2933
      %v2935 = vpop.f32.mrf.mxu0
      %v2936 = vpop.f32.mrf.mxu0
      %v2937 = vadd.f32 0.0, %v2936
      %v2938 = vpop.f32.mrf.mxu0
      %2939 = vdwg.mxu0
      %v2940 = vadd.f32 %v2551, %v2934
      %v2941 = vadd.f32 %v2552, %v2937
      %v2942 = vadd.f32 %v1082, %v2940
      %v2943 = vadd.f32 %v1083, %v2941
      %v2944 = vlaneseq
      %v2945 = vshrl.u32 %v2944, 7
      %v2946 = vsub.s32 4, %v2945
      %v2947 = vrot.slane %v1079, %v2946
      %v2948 = vadd.f32 %v2942, %v2947
      %v2949 = vadd.f32 %v2943, %v2947
      %2950 = vadd.xlane.f32.xlu0 %v2948
      %v2951 = vpop.xlane.xlu0 %2950
      %2952 = vadd.xlane.f32.xlu0 %v2949
      %v2953 = vpop.xlane.xlu0 %2952
      %v2954 = vmul.f32 %v2951, %v1088
      %v2955 = vmul.f32 %v2953, %v1088
      %v2956 = vsub.f32 %v2948, %v2954
      %v2957 = vsub.f32 %v2949, %v2955
      %v2958 = vmul.f32 %v2956, %v2956
      %v2959 = vmul.f32 %v2957, %v2957
      %2960 = vadd.xlane.f32.xlu0 %v2958
      %v2961 = vpop.xlane.xlu0 %2960
      %2962 = vadd.xlane.f32.xlu0 %v2959
      %v2963 = vpop.xlane.xlu0 %2962
      %v2964 = vmul.f32 %v2961, %v1088
      %v2965 = vmul.f32 %v2963, %v1088
      %v2966 = vadd.f32 %v2964, 1e-06
      %v2967 = vadd.f32 %v2965, 1e-06
      %v2968 = vrsqrt.pop %v2966
      %v2969 = vrsqrt.pop %v2967
      %v2970 = vmul.f32 %v2956, %v2968
      %v2971 = vmul.f32 %v2957, %v2969
      %v2972 = vlaneseq
      %v2973 = vshrl.u32 %v2972, 7
      %v2974 = vsub.s32 2, %v2973
      %v2975 = vrot.slane %v1079, %v2974
      %v2976 = vmul.f32 %v2970, %v2975
      %v2977 = vmul.f32 %v2971, %v2975
      %v2978 = vlaneseq
      %v2979 = vshrl.u32 %v2978, 7
      %v2980 = vsub.s32 3, %v2979
      %v2981 = vrot.slane %v1079, %v2980
      %v2982 = vadd.f32 %v2976, %v2981
      %v2983 = vadd.f32 %v2977, %v2981
      %v2984 = vpack.c.bf16 %v2983, %v2982
      %v2985 = vld [vmem:[%s527] sm:$0xff]
      %v2986 = vld [vmem:[%s527 + $0x8] sm:$0xff]
      %v2987 = vld [vmem:[%s527 + $0x10] sm:$0xff]
      %v2988 = vld [vmem:[%s527 + $0x18] sm:$0xff]
      %v2989 = vld [vmem:[%s527 + $0x20] sm:$0xff]
      %v2990 = vld [vmem:[%s527 + $0x28] sm:$0xff]
      %v2991 = vld [vmem:[%s527 + $0x30] sm:$0xff]
      %v2992 = vld [vmem:[%s527 + $0x38] sm:$0xff]
      %v2993 = vld [vmem:[%s527 + $0x40] sm:$0xff]
      %v2994 = vld [vmem:[%s527 + $0x48] sm:$0xff]
      %v2995 = vld [vmem:[%s527 + $0x50] sm:$0xff]
      %v2996 = vld [vmem:[%s527 + $0x58] sm:$0xff]
      %v2997 = vld [vmem:[%s527 + $0x60] sm:$0xff]
      %v2998 = vld [vmem:[%s527 + $0x68] sm:$0xff]
      %v2999 = vld [vmem:[%s527 + $0x70] sm:$0xff]
      %v3000 = vld [vmem:[%s527 + $0x78] sm:$0xff]
      %v3001 = vlaneseq
      %v3002 = vshrl.u32 %v3001, 7
      %v3003 = vsub.s32 7, %v3002
      %v3004 = vrot.slane %v1079, %v3003
      %v3005 = vlaneseq
      %v3006 = vshrl.u32 %v3005, 7
      %v3007 = vsub.s32 7, %v3006
      %v3008 = vrot.slane %v1080, %v3007
      %v3025 = vunpack.c.l.b16 %v2985
      %v3026 = vunpack.c.h.b16 %v2985
      %v3027 = vunpack.c.l.b16 %v2986
      %v3028 = vunpack.c.h.b16 %v2986
      %v3029 = vunpack.c.l.b16 %v2987
      %v3030 = vunpack.c.h.b16 %v2987
      %v3031 = vunpack.c.l.b16 %v2988
      %v3032 = vunpack.c.h.b16 %v2988
      %v3033 = vunpack.c.l.b16 %v2989
      %v3034 = vunpack.c.h.b16 %v2989
      %v3035 = vunpack.c.l.b16 %v2990
      %v3036 = vunpack.c.h.b16 %v2990
      %v3037 = vunpack.c.l.b16 %v2991
      %v3038 = vunpack.c.h.b16 %v2991
      %v3039 = vunpack.c.l.b16 %v2992
      %v3040 = vunpack.c.h.b16 %v2992
      %v3041 = vunpack.c.l.b16 %v2993
      %v3042 = vunpack.c.h.b16 %v2993
      %v3043 = vunpack.c.l.b16 %v2994
      %v3044 = vunpack.c.h.b16 %v2994
      %v3045 = vunpack.c.l.b16 %v2995
      %v3046 = vunpack.c.h.b16 %v2995
      %v3047 = vunpack.c.l.b16 %v2996
      %v3048 = vunpack.c.h.b16 %v2996
      %v3049 = vunpack.c.l.b16 %v2997
      %v3050 = vunpack.c.h.b16 %v2997
      %v3051 = vunpack.c.l.b16 %v2998
      %v3052 = vunpack.c.h.b16 %v2998
      %v3053 = vunpack.c.l.b16 %v2999
      %v3054 = vunpack.c.h.b16 %v2999
      %v3055 = vunpack.c.l.b16 %v3000
      %v3056 = vunpack.c.h.b16 %v3000
      %v3057 = vpack.c.b16 %v3027, %v3025
      %v3058 = vpack.c.b16 %v3028, %v3026
      %v3059 = vpack.c.b16 %v3031, %v3029
      %v3060 = vpack.c.b16 %v3032, %v3030
      %v3061 = vpack.c.b16 %v3035, %v3033
      %v3062 = vpack.c.b16 %v3036, %v3034
      %v3063 = vpack.c.b16 %v3039, %v3037
      %v3064 = vpack.c.b16 %v3040, %v3038
      %v3065 = vpack.c.b16 %v3043, %v3041
      %v3066 = vpack.c.b16 %v3044, %v3042
      %v3067 = vpack.c.b16 %v3047, %v3045
      %v3068 = vpack.c.b16 %v3048, %v3046
      %v3069 = vpack.c.b16 %v3051, %v3049
      %v3070 = vpack.c.b16 %v3052, %v3050
      %v3071 = vpack.c.b16 %v3055, %v3053
      %v3072 = vpack.c.b16 %v3056, %v3054
      %3089 = vmatprep.subr.bf16.mxu0 %v3072
      %3090 = vmatpush1.bf16.msra.mxu0 %v3071
      %3091 = vmatprep.subr.bf16.mxu0 %v3070
      %3092 = vmatpush1.bf16.msra.mxu0 %v3069
      %3093 = vmatprep.subr.bf16.mxu0 %v3068
      %3094 = vmatpush1.bf16.msra.mxu0 %v3067
      %3095 = vmatprep.subr.bf16.mxu0 %v3066
      %3096 = vmatpush1.bf16.msra.mxu0 %v3065
      %3097 = vmatprep.subr.bf16.mxu0 %v3064
      %3098 = vmatpush1.bf16.msra.mxu0 %v3063
      %3099 = vmatprep.subr.bf16.mxu0 %v3062
      %3100 = vmatpush1.bf16.msra.mxu0 %v3061
      %3101 = vmatprep.subr.bf16.mxu0 %v3060
      %3102 = vmatpush1.bf16.msra.mxu0 %v3059
      %3103 = vmatprep.subr.bf16.mxu0 %v3058
      %3104 = vmatpush1.bf16.msra.mxu0 %v3057
      %3105 = vmatprep.subr.bf16.mxu0 0
      %3106 = vmatpush2.bf16.msra.mxu0 0
      %3107 = vmatprep.subr.bf16.mxu0 0
      %3108 = vmatpush2.bf16.msra.mxu0 0
      %3109 = vmatprep.subr.bf16.mxu0 0
      %3110 = vmatpush2.bf16.msra.mxu0 0
      %3111 = vmatprep.subr.bf16.mxu0 0
      %3112 = vmatpush2.bf16.msra.mxu0 0
      %3113 = vmatprep.subr.bf16.mxu0 0
      %3114 = vmatpush2.bf16.msra.mxu0 0
      %3115 = vmatprep.subr.bf16.mxu0 0
      %3116 = vmatpush2.bf16.msra.mxu0 0
      %3117 = vmatprep.subr.bf16.mxu0 0
      %3118 = vmatpush2.bf16.msra.mxu0 0
      %3119 = vmatprep.subr.bf16.mxu0 0
      %3120 = vmatpush2.bf16.msra.mxu0 0
      %3121 = vmatprep.mubr.bf16.mxu0 0
      %3122 = vmatmul.mubr.bf16.gmra.mxu0 %v2984
      %v3123 = vpop.f32.mrf.mxu0
      %v3124 = vadd.f32 %v3004, %v3123
      %v3125 = vpop.f32.mrf.mxu0
      %v3126 = vadd.f32 %v3008, %v3125
      %v3127 = vpop.f32.mrf.mxu0
      %v3128 = vadd.f32 %v3004, %v3127
      %v3129 = vpop.f32.mrf.mxu0
      %v3130 = vadd.f32 %v3008, %v3129
      %3131 = vdwg.mxu0
      %v3132 = vmul.f32 %v3124, 0.5
      %v3133 = vmul.f32 %v3126, 0.5
      %v3134 = vmul.f32 %v3128, 0.5
      %v3135 = vmul.f32 %v3130, 0.5
      %v3136 = vmul.f32 %v3124, 0.70710677
      %v3137 = vmul.f32 %v3126, 0.70710677
      %v3138 = vmul.f32 %v3128, 0.70710677
      %v3139 = vmul.f32 %v3130, 0.70710677
      %v3140 = vmax.f32 %v3136, -3.832507
      %v3141 = vmax.f32 %v3137, -3.832507
      %v3142 = vmax.f32 %v3138, -3.832507
      %v3143 = vmax.f32 %v3139, -3.832507
      %v3144 = vmin.f32 %v3140, 3.832507
      %v3145 = vmin.f32 %v3141, 3.832507
      %v3146 = vmin.f32 %v3142, 3.832507
      %v3147 = vmin.f32 %v3143, 3.832507
      %v3148 = vmul.f32 %v3144, %v3144
      %v3149 = vmul.f32 %v3145, %v3145
      %v3150 = vmul.f32 %v3146, %v3146
      %v3151 = vmul.f32 %v3147, %v3147
      %v3152 = vmul.f32 %v3148, 0.00022905065
      %v3153 = vmul.f32 %v3149, 0.00022905065
      %v3154 = vmul.f32 %v3150, 0.00022905065
      %v3155 = vmul.f32 %v3151, 0.00022905065
      %v3156 = vadd.f32 %v3152, 0.003408291
      %v3157 = vadd.f32 %v3153, 0.003408291
      %v3158 = vadd.f32 %v3154, 0.003408291
      %v3159 = vadd.f32 %v3155, 0.003408291
      %v3160 = vmul.f32 %v3156, %v3148
      %v3161 = vmul.f32 %v3157, %v3149
      %v3162 = vmul.f32 %v3158, %v3150
      %v3163 = vmul.f32 %v3159, %v3151
      %v3164 = vadd.f32 %v3160, 0.050955694
      %v3165 = vadd.f32 %v3161, 0.050955694
      %v3166 = vadd.f32 %v3162, 0.050955694
      %v3167 = vadd.f32 %v3163, 0.050955694
      %v3168 = vmul.f32 %v3164, %v3148
      %v3169 = vmul.f32 %v3165, %v3149
      %v3170 = vmul.f32 %v3166, %v3150
      %v3171 = vmul.f32 %v3167, %v3151
      %v3172 = vadd.f32 %v3168, 0.18520832
      %v3173 = vadd.f32 %v3169, 0.18520832
      %v3174 = vadd.f32 %v3170, 0.18520832
      %v3175 = vadd.f32 %v3171, 0.18520832
      %v3176 = vmul.f32 %v3172, %v3148
      %v3177 = vmul.f32 %v3173, %v3149
      %v3178 = vmul.f32 %v3174, %v3150
      %v3179 = vmul.f32 %v3175, %v3151
      %v3180 = vadd.f32 %v3176, 1.1283791
      %v3181 = vadd.f32 %v3177, 1.1283791
      %v3182 = vadd.f32 %v3178, 1.1283791
      %v3183 = vadd.f32 %v3179, 1.1283791
      %v3184 = vmul.f32 %v3148, -1.1791603e-07
      %v3185 = vmul.f32 %v3149, -1.1791603e-07
      %v3186 = vmul.f32 %v3150, -1.1791603e-07
      %v3187 = vmul.f32 %v3151, -1.1791603e-07
      %v3188 = vadd.f32 %v3184, 2.3547966e-05
      %v3189 = vadd.f32 %v3185, 2.3547966e-05
      %v3190 = vadd.f32 %v3186, 2.3547966e-05
      %v3191 = vadd.f32 %v3187, 2.3547966e-05
      %v3192 = vmul.f32 %v3188, %v3148
      %v3193 = vmul.f32 %v3189, %v3149
      %v3194 = vmul.f32 %v3190, %v3150
      %v3195 = vmul.f32 %v3191, %v3151
      %v3196 = vadd.f32 %v3192, 0.0010179626
      %v3197 = vadd.f32 %v3193, 0.0010179626
      %v3198 = vadd.f32 %v3194, 0.0010179626
      %v3199 = vadd.f32 %v3195, 0.0010179626
      %v3200 = vmul.f32 %v3196, %v3148
      %v3201 = vmul.f32 %v3197, %v3149
      %v3202 = vmul.f32 %v3198, %v3150
      %v3203 = vmul.f32 %v3199, %v3151
      %v3204 = vadd.f32 %v3200, 0.01407047
      %v3205 = vadd.f32 %v3201, 0.01407047
      %v3206 = vadd.f32 %v3202, 0.01407047
      %v3207 = vadd.f32 %v3203, 0.01407047
      %v3208 = vmul.f32 %v3204, %v3148
      %v3209 = vmul.f32 %v3205, %v3149
      %v3210 = vmul.f32 %v3206, %v3150
      %v3211 = vmul.f32 %v3207, %v3151
      %v3212 = vadd.f32 %v3208, 0.11098505
      %v3213 = vadd.f32 %v3209, 0.11098505
      %v3214 = vadd.f32 %v3210, 0.11098505
      %v3215 = vadd.f32 %v3211, 0.11098505
      %v3216 = vmul.f32 %v3212, %v3148
      %v3217 = vmul.f32 %v3213, %v3149
      %v3218 = vmul.f32 %v3214, %v3150
      %v3219 = vmul.f32 %v3215, %v3151
      %v3220 = vadd.f32 %v3216, 0.49746925
      %v3221 = vadd.f32 %v3217, 0.49746925
      %v3222 = vadd.f32 %v3218, 0.49746925
      %v3223 = vadd.f32 %v3219, 0.49746925
      %v3224 = vmul.f32 %v3220, %v3148
      %v3225 = vmul.f32 %v3221, %v3149
      %v3226 = vmul.f32 %v3222, %v3150
      %v3227 = vmul.f32 %v3223, %v3151
      %v3228 = vadd.f32 %v3224, 1.0
      %v3229 = vadd.f32 %v3225, 1.0
      %v3230 = vadd.f32 %v3226, 1.0
      %v3231 = vadd.f32 %v3227, 1.0
      %v3232 = vmul.f32 %v3144, %v3180
      %v3233 = vmul.f32 %v3145, %v3181
      %v3234 = vmul.f32 %v3146, %v3182
      %v3235 = vmul.f32 %v3147, %v3183
      %v3236 = vrcp.pop %v3228
      %v3237 = vrcp.pop %v3229
      %v3238 = vrcp.pop %v3230
      %v3239 = vrcp.pop %v3231
      %v3240 = vmul.f32 %v3232, %v3236
      %v3241 = vmul.f32 %v3233, %v3237
      %v3242 = vmul.f32 %v3234, %v3238
      %v3243 = vmul.f32 %v3235, %v3239
      %v3244 = vadd.f32 %v3240, 1.0
      %v3245 = vadd.f32 %v3241, 1.0
      %v3246 = vadd.f32 %v3242, 1.0
      %v3247 = vadd.f32 %v3243, 1.0
      %v3248 = vmul.f32 %v3132, %v3244
      %v3249 = vmul.f32 %v3133, %v3245
      %v3250 = vmul.f32 %v3134, %v3246
      %v3251 = vmul.f32 %v3135, %v3247
      %v3252 = vpack.c.bf16 %v3250, %v3248
      %v3253 = vpack.c.bf16 %v3251, %v3249
      %v3254 = vld [vmem:[%s532] sm:$0xf]
      %v3255 = vld [vmem:[%s532 + $0x4] sm:$0xf]
      %v3256 = vld [vmem:[%s532 + $0x8] sm:$0xf]
      %v3257 = vld [vmem:[%s532 + $0xc] sm:$0xf]
      %v3258 = vld [vmem:[%s532 + $0x10] sm:$0xf]
      %v3259 = vld [vmem:[%s532 + $0x14] sm:$0xf]
      %v3260 = vld [vmem:[%s532 + $0x18] sm:$0xf]
      %v3261 = vld [vmem:[%s532 + $0x1c] sm:$0xf]
      %v3262 = vld [vmem:[%s532 + $0x20] sm:$0xf]
      %v3263 = vld [vmem:[%s532 + $0x24] sm:$0xf]
      %v3264 = vld [vmem:[%s532 + $0x28] sm:$0xf]
      %v3265 = vld [vmem:[%s532 + $0x2c] sm:$0xf]
      %v3266 = vld [vmem:[%s532 + $0x30] sm:$0xf]
      %v3267 = vld [vmem:[%s532 + $0x34] sm:$0xf]
      %v3268 = vld [vmem:[%s532 + $0x38] sm:$0xf]
      %v3269 = vld [vmem:[%s532 + $0x3c] sm:$0xf]
      %v3270 = vld [vmem:[%s532 + $0x40] sm:$0xf]
      %v3271 = vld [vmem:[%s532 + $0x44] sm:$0xf]
      %v3272 = vld [vmem:[%s532 + $0x48] sm:$0xf]
      %v3273 = vld [vmem:[%s532 + $0x4c] sm:$0xf]
      %v3274 = vld [vmem:[%s532 + $0x50] sm:$0xf]
      %v3275 = vld [vmem:[%s532 + $0x54] sm:$0xf]
      %v3276 = vld [vmem:[%s532 + $0x58] sm:$0xf]
      %v3277 = vld [vmem:[%s532 + $0x5c] sm:$0xf]
      %v3278 = vld [vmem:[%s532 + $0x60] sm:$0xf]
      %v3279 = vld [vmem:[%s532 + $0x64] sm:$0xf]
      %v3280 = vld [vmem:[%s532 + $0x68] sm:$0xf]
      %v3281 = vld [vmem:[%s532 + $0x6c] sm:$0xf]
      %v3282 = vld [vmem:[%s532 + $0x70] sm:$0xf]
      %v3283 = vld [vmem:[%s532 + $0x74] sm:$0xf]
      %v3284 = vld [vmem:[%s532 + $0x78] sm:$0xf]
      %v3285 = vld [vmem:[%s532 + $0x7c] sm:$0xf]
      %v3286 = vlaneseq
      %v3287 = vshrl.u32 %v3286, 7
      %v3288 = vsub.s32 5, %v3287
      %v3289 = vrot.slane %v1079, %v3288
      %v3322 = vunpack.c.l.b16 %v3254
      %v3323 = vunpack.c.l.b16 %v3255
      %v3324 = vunpack.c.l.b16 %v3256
      %v3325 = vunpack.c.l.b16 %v3257
      %v3326 = vunpack.c.l.b16 %v3258
      %v3327 = vunpack.c.l.b16 %v3259
      %v3328 = vunpack.c.l.b16 %v3260
      %v3329 = vunpack.c.l.b16 %v3261
      %v3330 = vunpack.c.l.b16 %v3262
      %v3331 = vunpack.c.l.b16 %v3263
      %v3332 = vunpack.c.l.b16 %v3264
      %v3333 = vunpack.c.l.b16 %v3265
      %v3334 = vunpack.c.l.b16 %v3266
      %v3335 = vunpack.c.l.b16 %v3267
      %v3336 = vunpack.c.l.b16 %v3268
      %v3337 = vunpack.c.l.b16 %v3269
      %v3338 = vunpack.c.l.b16 %v3270
      %v3339 = vunpack.c.l.b16 %v3271
      %v3340 = vunpack.c.l.b16 %v3272
      %v3341 = vunpack.c.l.b16 %v3273
      %v3342 = vunpack.c.l.b16 %v3274
      %v3343 = vunpack.c.l.b16 %v3275
      %v3344 = vunpack.c.l.b16 %v3276
      %v3345 = vunpack.c.l.b16 %v3277
      %v3346 = vunpack.c.l.b16 %v3278
      %v3347 = vunpack.c.l.b16 %v3279
      %v3348 = vunpack.c.l.b16 %v3280
      %v3349 = vunpack.c.l.b16 %v3281
      %v3350 = vunpack.c.l.b16 %v3282
      %v3351 = vunpack.c.l.b16 %v3283
      %v3352 = vunpack.c.l.b16 %v3284
      %v3353 = vunpack.c.l.b16 %v3285
      %v3354 = vpack.c.b16 %v3323, %v3322
      %v3355 = vpack.c.b16 %v3325, %v3324
      %v3356 = vpack.c.b16 %v3327, %v3326
      %v3357 = vpack.c.b16 %v3329, %v3328
      %v3358 = vpack.c.b16 %v3331, %v3330
      %v3359 = vpack.c.b16 %v3333, %v3332
      %v3360 = vpack.c.b16 %v3335, %v3334
      %v3361 = vpack.c.b16 %v3337, %v3336
      %v3362 = vpack.c.b16 %v3339, %v3338
      %v3363 = vpack.c.b16 %v3341, %v3340
      %v3364 = vpack.c.b16 %v3343, %v3342
      %v3365 = vpack.c.b16 %v3345, %v3344
      %v3366 = vpack.c.b16 %v3347, %v3346
      %v3367 = vpack.c.b16 %v3349, %v3348
      %v3368 = vpack.c.b16 %v3351, %v3350
      %v3369 = vpack.c.b16 %v3353, %v3352
      %3386 = vmatprep.subr.bf16.mxu0 0
      %3387 = vmatpush1.bf16.msra.mxu0 %v3361
      %3388 = vmatprep.subr.bf16.mxu0 0
      %3389 = vmatpush1.bf16.msra.mxu0 %v3360
      %3390 = vmatprep.subr.bf16.mxu0 0
      %3391 = vmatpush1.bf16.msra.mxu0 %v3359
      %3392 = vmatprep.subr.bf16.mxu0 0
      %3393 = vmatpush1.bf16.msra.mxu0 %v3358
      %3394 = vmatprep.subr.bf16.mxu0 0
      %3395 = vmatpush1.bf16.msra.mxu0 %v3357
      %3396 = vmatprep.subr.bf16.mxu0 0
      %3397 = vmatpush1.bf16.msra.mxu0 %v3356
      %3398 = vmatprep.subr.bf16.mxu0 0
      %3399 = vmatpush1.bf16.msra.mxu0 %v3355
      %3400 = vmatprep.subr.bf16.mxu0 0
      %3401 = vmatpush1.bf16.msra.mxu0 %v3354
      %3402 = vmatprep.subr.bf16.mxu0 0
      %3403 = vmatpush2.bf16.msra.mxu0 %v3369
      %3404 = vmatprep.subr.bf16.mxu0 0
      %3405 = vmatpush2.bf16.msra.mxu0 %v3368
      %3406 = vmatprep.subr.bf16.mxu0 0
      %3407 = vmatpush2.bf16.msra.mxu0 %v3367
      %3408 = vmatprep.subr.bf16.mxu0 0
      %3409 = vmatpush2.bf16.msra.mxu0 %v3366
      %3410 = vmatprep.subr.bf16.mxu0 0
      %3411 = vmatpush2.bf16.msra.mxu0 %v3365
      %3412 = vmatprep.subr.bf16.mxu0 0
      %3413 = vmatpush2.bf16.msra.mxu0 %v3364
      %3414 = vmatprep.subr.bf16.mxu0 0
      %3415 = vmatpush2.bf16.msra.mxu0 %v3363
      %3416 = vmatprep.subr.bf16.mxu0 0
      %3417 = vmatpush2.bf16.msra.mxu0 %v3362
      %3418 = vmatprep.mubr.bf16.mxu0 %v3253
      %3419 = vmatmul.mubr.bf16.gmra.mxu0 %v3252
      %v3420 = vpop.f32.mrf.mxu0
      %v3421 = vadd.f32 %v3289, %v3420
      %v3422 = vpop.f32.mrf.mxu0
      %v3423 = vpop.f32.mrf.mxu0
      %v3424 = vadd.f32 %v3289, %v3423
      %v3425 = vpop.f32.mrf.mxu0
      %3426 = vdwg.mxu0
      %v3427 = vlaneseq
      %v3428 = vshrl.u32 %v3427, 7
      %v3429 = vadd.s32 %v3428, 8
      %v3430 = vand.u32 %v3428, 7
      %v3431 = vand.u32 %v3429, 7
      %vm3432 = vcmp.lt.s32.totalorder %v3430, 5
      %vm3433 = vcmp.lt.s32.totalorder %v3431, 5
      %v3434 = vsel %vm3432, 1, 0
      %v3435 = vsel %vm3433, 1, 0
      %v3436 = vcvt.s32.f32 %v3434
      %v3437 = vcvt.s32.f32 %v3435
      %v3438 = vadd.f32 %v2948, %v3421
      %v3439 = vadd.f32 %v2949, %v3424
      %v3440 = vmul.f32 %v3438, %v3436
      %v3441 = vmul.f32 %v3439, %v3437
      %3442 = vst [vmem:[#allocation2] sm:$0xff] %v3440
      %3443 = vst [vmem:[#allocation2 + $0x8] sm:$0xff] %v3441
      %p3444 = scmp.eq.s32.totalorder %s25, 1
      // Predicated region
      $region81: #{vit_forward.1} parent=75 // pred_check
        %p3445 = pneg %p3444
      $region82: #{vit_forward.1} parent=75 // pred_check_branch
        %3447 = sbr.rel (%p3445) target = $region84
      $region83: #{vit_forward.1} parent=75 // pred_region
        %v3448 = vld [vmem:[%s10] sm:$0x1]
        %v3449 = vld [vmem:[%s11] sm:$0x1]
        %3450 = vadd.xlane.f32.xlu0 %v3440
        %v3451 = vpop.xlane.xlu0 %3450
        %3452 = vadd.xlane.f32.xlu0 %v3441
        %v3453 = vpop.xlane.xlu0 %3452
        %v3454 = vmul.f32 %v3451, %v1088
        %v3455 = vmul.f32 %v3453, %v1088
        %v3456 = vsub.f32 %v3440, %v3454
        %v3457 = vsub.f32 %v3441, %v3455
        %v3458 = vmul.f32 %v3456, %v3456
        %v3459 = vmul.f32 %v3457, %v3457
        %3460 = vadd.xlane.f32.xlu0 %v3458
        %v3461 = vpop.xlane.xlu0 %3460
        %3462 = vadd.xlane.f32.xlu0 %v3459
        %v3463 = vpop.xlane.xlu0 %3462
        %v3464 = vmul.f32 %v3461, %v1088
        %v3465 = vmul.f32 %v3463, %v1088
        %v3466 = vadd.f32 %v3464, 1e-06
        %v3467 = vadd.f32 %v3465, 1e-06
        %v3468 = vrsqrt.pop %v3466
        %v3469 = vrsqrt.pop %v3467
        %v3470 = vmul.f32 %v3456, %v3468
        %v3471 = vmul.f32 %v3457, %v3469
        %v3473 = vlaneseq
        %v3474 = vshrl.u32 %v3473, 7
        %v3475 = vsub.s32 0, %v3474
        %v3476 = vrot.slane %v3448, %v3475
        %v3478 = vmul.f32 %v3470, %v3476
        %v3479 = vmul.f32 %v3471, %v3476
        %v3481 = vlaneseq
        %v3482 = vshrl.u32 %v3481, 7
        %v3483 = vsub.s32 0, %v3482
        %v3484 = vrot.slane %v3449, %v3483
        %v3486 = vadd.f32 %v3478, %v3484
        %v3487 = vadd.f32 %v3479, %v3484
        %v3488 = vpack.c.bf16 %v3487, %v3486
        %v3489 = vld [vmem:[%s12] sm:$0xf]
        %v3490 = vld [vmem:[%s12 + $0x4] sm:$0xf]
        %v3491 = vld [vmem:[%s12 + $0x8] sm:$0xf]
        %v3492 = vld [vmem:[%s12 + $0xc] sm:$0xf]
        %v3493 = vld [vmem:[%s12 + $0x10] sm:$0xf]
        %v3494 = vld [vmem:[%s12 + $0x14] sm:$0xf]
        %v3495 = vld [vmem:[%s12 + $0x18] sm:$0xf]
        %v3496 = vld [vmem:[%s12 + $0x1c] sm:$0xf]
        %v3497 = vld [vmem:[%s12 + $0x20] sm:$0xf]
        %v3498 = vld [vmem:[%s12 + $0x24] sm:$0xf]
        %v3499 = vld [vmem:[%s12 + $0x28] sm:$0xf]
        %v3500 = vld [vmem:[%s12 + $0x2c] sm:$0xf]
        %v3501 = vld [vmem:[%s12 + $0x30] sm:$0xf]
        %v3502 = vld [vmem:[%s12 + $0x34] sm:$0xf]
        %v3503 = vld [vmem:[%s12 + $0x38] sm:$0xf]
        %v3504 = vld [vmem:[%s12 + $0x3c] sm:$0xf]
        %v3505 = vld [vmem:[%s13] sm:$0x1]
        %v3507 = vlaneseq
        %v3508 = vshrl.u32 %v3507, 7
        %v3509 = vsub.s32 0, %v3508
        %v3510 = vrot.slane %v3505, %v3509
        %v3528 = vunpack.c.l.b16 %v3489
        %v3529 = vunpack.c.l.b16 %v3490
        %v3530 = vunpack.c.l.b16 %v3491
        %v3531 = vunpack.c.l.b16 %v3492
        %v3532 = vunpack.c.l.b16 %v3493
        %v3533 = vunpack.c.l.b16 %v3494
        %v3534 = vunpack.c.l.b16 %v3495
        %v3535 = vunpack.c.l.b16 %v3496
        %v3536 = vunpack.c.l.b16 %v3497
        %v3537 = vunpack.c.l.b16 %v3498
        %v3538 = vunpack.c.l.b16 %v3499
        %v3539 = vunpack.c.l.b16 %v3500
        %v3540 = vunpack.c.l.b16 %v3501
        %v3541 = vunpack.c.l.b16 %v3502
        %v3542 = vunpack.c.l.b16 %v3503
        %v3543 = vunpack.c.l.b16 %v3504
        %v3544 = vpack.c.b16 %v3529, %v3528
        %v3545 = vpack.c.b16 %v3531, %v3530
        %v3546 = vpack.c.b16 %v3533, %v3532
        %v3547 = vpack.c.b16 %v3535, %v3534
        %v3548 = vpack.c.b16 %v3537, %v3536
        %v3549 = vpack.c.b16 %v3539, %v3538
        %v3550 = vpack.c.b16 %v3541, %v3540
        %v3551 = vpack.c.b16 %v3543, %v3542
        %3560 = vmatprep.subr.bf16.mxu0 0
        %3561 = vmatpush1.bf16.msra.mxu0 %v3551
        %3562 = vmatprep.subr.bf16.mxu0 0
        %3563 = vmatpush1.bf16.msra.mxu0 %v3550
        %3564 = vmatprep.subr.bf16.mxu0 0
        %3565 = vmatpush1.bf16.msra.mxu0 %v3549
        %3566 = vmatprep.subr.bf16.mxu0 0
        %3567 = vmatpush1.bf16.msra.mxu0 %v3548
        %3568 = vmatprep.subr.bf16.mxu0 0
        %3569 = vmatpush1.bf16.msra.mxu0 %v3547
        %3570 = vmatprep.subr.bf16.mxu0 0
        %3571 = vmatpush1.bf16.msra.mxu0 %v3546
        %3572 = vmatprep.subr.bf16.mxu0 0
        %3573 = vmatpush1.bf16.msra.mxu0 %v3545
        %3574 = vmatprep.subr.bf16.mxu0 0
        %3575 = vmatpush1.bf16.msra.mxu0 %v3544
        %3576 = vmatprep.subr.bf16.mxu0 0
        %3577 = vmatpush2.bf16.msra.mxu0 0
        %3578 = vmatprep.subr.bf16.mxu0 0
        %3579 = vmatpush2.bf16.msra.mxu0 0
        %3580 = vmatprep.subr.bf16.mxu0 0
        %3581 = vmatpush2.bf16.msra.mxu0 0
        %3582 = vmatprep.subr.bf16.mxu0 0
        %3583 = vmatpush2.bf16.msra.mxu0 0
        %3584 = vmatprep.subr.bf16.mxu0 0
        %3585 = vmatpush2.bf16.msra.mxu0 0
        %3586 = vmatprep.subr.bf16.mxu0 0
        %3587 = vmatpush2.bf16.msra.mxu0 0
        %3588 = vmatprep.subr.bf16.mxu0 0
        %3589 = vmatpush2.bf16.msra.mxu0 0
        %3590 = vmatprep.subr.bf16.mxu0 0
        %3591 = vmatpush2.bf16.msra.mxu0 0
        %3592 = vmatprep.mubr.bf16.mxu0 0
        %3593 = vmatmul.mubr.bf16.gmra.mxu0 %v3488
        %v3594 = vpop.f32.mrf.mxu0
        %v3595 = vadd.f32 %v3510, %v3594
        %v3596 = vpop.f32.mrf.mxu0
        %v3597 = vpop.f32.mrf.mxu0
        %v3598 = vadd.f32 %v3510, %v3597
        %v3599 = vpop.f32.mrf.mxu0
        %3600 = vdwg.mxu0
        %3601 = vst [vmem:[%s14] sm:$0xff] %v3595
        %3602 = vst [vmem:[%s14 + $0x8] sm:$0xff] %v3598
      $region84: #{vit_forward.1} parent=75 // pred_fallthru
        _
      // Predicated region
      $region85: #{vit_forward.1} parent=75 // pred_check
        %p3603 = pneg %p357
      $region86: #{vit_forward.1} parent=75 // pred_check_branch
        %3605 = sbr.rel (%p3603) target = $region88
      $region87: #{vit_forward.1} parent=75 // pred_region
        _
      $region88: #{vit_forward.1} parent=75 // pred_fallthru
        _
      // Predicated region
      $region89: #{vit_forward.1} parent=75 // pred_check
        %p3606 = pneg %p357
      $region90: #{vit_forward.1} parent=75 // pred_check_branch
        %3608 = sbr.rel (%p3606) target = $region92
      $region91: #{vit_forward.1} parent=75 // pred_region
        _
      $region92: #{vit_forward.1} parent=75 // pred_fallthru
        _
    $region76: #{vit_forward.1} parent=5 // pred_fallthru
      _
    %p3609 = scmp.le.s32.totalorder 2, %s20
    // Predicated region
    $region93: #{vit_forward.1} parent=5 // pred_check
      %p3610 = pneg %p3609
    $region94: #{vit_forward.1} parent=5 // pred_check_branch
      %3612 = sbr.rel (%p3610) target = $region96
    $region95: #{vit_forward.1} parent=5 // pred_region
      %s3613 = ssub.s32 %s20, 2
    $region96: #{vit_forward.1} parent=5 // pred_fallthru
      _
  $region6: #{vit_forward.1} parent=0 // loop_footer
    %s24 = sadd.s32 1, %s20
  $region7: #{vit_forward.1} parent=0 // loop_footer_branch
    %19 = sbr.rel target = $region3
  $region8: #{vit_forward.1} parent=0 // loop_exit
    _

</llo_original>
